<compile_context>
chip_gen: v7x
topology: tpu7x:2x2x1
jax: 0.10.0
libtpu: 0.0.40
codegen_flags: <defaults>
</compile_context>

<pallas_src>
import functools

import jax
import jax.numpy as jnp
from jax.experimental import pallas as pl
from jax.experimental.pallas import tpu as pltpu

# ----------------------------- small ViT config ------------------------------
B = 2              # batch
C = 3              # image channels
IMG = 16           # spatial resolution (stand-in for 224)
PATCH = 8          # patch size (stand-in for 14)
GRID = IMG // PATCH
N_PATCH = GRID * GRID
SEQ = N_PATCH + 1  # +1 CLS token
WIDTH = 256        # transformer width (stand-in for 1280 in ViT-H-14)
HEADS = 4
HEAD_DIM = WIDTH // HEADS
MLP = 4 * WIDTH
LAYERS = 2         # stand-in for 32 layers
OUT_DIM = 128      # stand-in for 1024-dim CLIP embedding
EPS = 1e-5         # nn.LayerNorm default eps

DTYPE = jnp.bfloat16   # storage / MXU operand dtype (fp32 accumulation everywhere)


def _device_defaults():
    """Per-generation tile preferences + scoped-VMEM budget."""
    cap = 128 * 1024 * 1024
    try:
        cap = int(getattr(pltpu.get_tpu_info(), "vmem_capacity_bytes", cap))
    except Exception:
        pass
    if cap <= 64 * 1024 * 1024:
        # v7x-class: 64 MiB VMEM per TensorCore, keep 256-aligned tiles (2x256^2 MXU)
        return 256, 256, 256, 48 * 1024 * 1024
    # v5e / v6e: 128 MiB VMEM -> bigger tiles (v6e is weight-DMA bound at B=2)
    return 256, 512, 512, 64 * 1024 * 1024


TM_PREF, TN_PREF, TK_PREF, VMEM_LIMIT = _device_defaults()


def _tile(dim, pref, align):
    """Largest tile <= pref that divides `dim` and is a multiple of `align`.
    Returns `dim` itself when dim <= pref or when no aligned divisor exists."""
    if dim <= pref:
        return dim
    t = (pref // align) * align
    while t >= align:
        if dim % t == 0:
            return t
        t -= align
    return dim


# ------------------------- fused tiled matmul kernel --------------------------
def _erf_f32(x):
    # Abramowitz & Stegun 7.1.26 rational approximation, |err| <= 1.5e-7 (fp32);
    # error far below bf16 rounding, preserves nn.GELU (exact-erf) semantics.
    a1, a2, a3, a4, a5 = 0.254829592, -0.284496736, 1.421413741, -1.453152027, 1.061405429
    p = 0.3275911
    sgn = jnp.where(x >= 0.0, 1.0, -1.0)
    ax = jnp.abs(x)
    t = 1.0 / (1.0 + p * ax)
    poly = ((((a5 * t + a4) * t + a3) * t + a2) * t + a1) * t
    return sgn * (1.0 - poly * jnp.exp(-ax * ax))


def _gelu_exact_f32(x):
    return 0.5 * x * (1.0 + _erf_f32(x * 0.7071067811865476))


def _fused_matmul_kernel(*args, has_bias, has_ln, has_res, act, single_k, cache_ln):
    # args = (x, w, [bias], [ln_g, ln_b], [residual], out, [scratch])
    # scratch is either the LN row-cache (cache_ln) or the fp32 accumulator (nk>1).
    x_ref, w_ref = args[0], args[1]
    pos = 2
    b_ref = g_ref = beta_ref = r_ref = None
    if has_bias:
        b_ref = args[pos]; pos += 1
    if has_ln:
        g_ref, beta_ref = args[pos], args[pos + 1]; pos += 2
    if has_res:
        r_ref = args[pos]; pos += 1
    o_ref = args[pos]; pos += 1
    scr_ref = args[pos] if len(args) > pos else None

    def _ln_rows():
        # LayerNorm prologue in fp32 (tk == K whenever has_ln).
        xf = x_ref[...].astype(jnp.float32)
        mu = jnp.mean(xf, axis=-1, keepdims=True)
        xc = xf - mu
        var = jnp.mean(xc * xc, axis=-1, keepdims=True)   # biased var, like torch LN
        xn = xc * jax.lax.rsqrt(var + EPS) * g_ref[...] + beta_ref[...]
        return xn.astype(x_ref.dtype)                      # bf16 for the MXU

    if has_ln:
        if cache_ln:
            # Compute LN once per row-block (j == 0), reuse for all column blocks.
            @pl.when(pl.program_id(1) == 0)
            def _():
                scr_ref[...] = _ln_rows()
            x = scr_ref[...]
        else:
            x = _ln_rows()
    else:
        x = x_ref[...]

    def _epilogue(acc):
        if has_bias:
            acc = acc + b_ref[...]
        if act == "gelu":
            acc = _gelu_exact_f32(acc)
        if has_res:
            acc = acc + r_ref[...].astype(jnp.float32)
        return acc.astype(o_ref.dtype)

    if single_k:
        # No k reduction over grid -> skip the fp32 accumulator round trip.
        acc = jnp.dot(x, w_ref[...], preferred_element_type=jnp.float32)
        o_ref[...] = _epilogue(acc)
    else:
        k_id = pl.program_id(2)

        @pl.when(k_id == 0)
        def _():
            scr_ref[...] = jnp.zeros_like(scr_ref)

        scr_ref[...] += jnp.dot(x, w_ref[...], preferred_element_type=jnp.float32)

        @pl.when(k_id == pl.num_programs(2) - 1)
        def _():
            o_ref[...] = _epilogue(scr_ref[...])


def fused_matmul(x, w, *, bias=None, ln_g=None, ln_b=None, residual=None,
                 act=None, out_dtype=DTYPE):
    """o = [LN?(x)] @ w  (+bias) (GELU?) (+residual).
    x: [M, K] bf16, w: [K, N] bf16 ([in, out]); bias/ln params pre-shaped fp32
    [1, N] / [1, K] (prepare_params)."""
    M, K = x.shape
    N = w.shape[1]
    has_bias = bias is not None
    has_ln = ln_g is not None
    has_res = residual is not None

    tm = _tile(M, TM_PREF, 8)
    tn = _tile(N, TN_PREF, 128)
    tk = K if has_ln else _tile(K, TK_PREF, 128)   # LN prologue needs full rows
    nm, nj, nk = M // tm, N // tn, K // tk
    single_k = nk == 1
    cache_ln = has_ln and nj > 1

    if nk >= 3:
        # Weight stream is the dominant DMA; deepen its pipeline (v6e esp.).
        w_spec = pl.BlockSpec((tk, tn), lambda i, j, k: (k, j),
                              pipeline_mode=pl.Buffered(3))
    else:
        w_spec = pl.BlockSpec((tk, tn), lambda i, j, k: (k, j))

    in_specs = [pl.BlockSpec((tm, tk), lambda i, j, k: (i, k)), w_spec]
    inputs = [x, w]
    if has_bias:
        in_specs.append(pl.BlockSpec((1, tn), lambda i, j, k: (0, j)))
        inputs.append(bias)
    if has_ln:
        in_specs.append(pl.BlockSpec((1, tk), lambda i, j, k: (0, k)))
        in_specs.append(pl.BlockSpec((1, tk), lambda i, j, k: (0, k)))
        inputs += [ln_g, ln_b]
    if has_res:
        in_specs.append(pl.BlockSpec((tm, tn), lambda i, j, k: (i, j)))
        inputs.append(residual)

    scratch = []
    if cache_ln:
        scratch.append(pltpu.VMEM((tm, K), x.dtype))        # normalized-row cache
    elif not single_k:
        scratch.append(pltpu.VMEM((tm, tn), jnp.float32))   # fp32 accumulator

    # With the LN cache, j>0 depends on j==0's scratch write -> never let the
    # compiler shard the j axis across cores.
    sem_j = "arbitrary" if cache_ln else "parallel"

    kernel = functools.partial(_fused_matmul_kernel, has_bias=has_bias,
                               has_ln=has_ln, has_res=has_res, act=act,
                               single_k=single_k, cache_ln=cache_ln)
    return pl.pallas_call(
        kernel,
        out_shape=jax.ShapeDtypeStruct((M, N), out_dtype),
        grid=(nm, nj, nk),
        in_specs=in_specs,
        out_specs=pl.BlockSpec((tm, tn), lambda i, j, k: (i, j)),
        scratch_shapes=scratch,
        compiler_params=pltpu.CompilerParams(
            dimension_semantics=("parallel", sem_j, "arbitrary"),
            vmem_limit_bytes=VMEM_LIMIT),
    )(*inputs)


# ------------------- CLS + pos_emb + ln_pre fused kernel ----------------------
def _embed_ln_kernel(patch_ref, cls_ref, pos_ref, g_ref, b_ref, o_ref):
    # patch_ref: [1, N_PATCH, W] bf16; cls/pos/g/b fp32.  Builds the token slab,
    # adds positional embedding and applies ln_pre in one pass (no HBM round trip
    # for the fp32 token buffer).
    x = jnp.concatenate([cls_ref[...], patch_ref[0].astype(jnp.float32)], axis=0)
    x = x + pos_ref[...]
    mu = jnp.mean(x, axis=-1, keepdims=True)
    xc = x - mu
    var = jnp.mean(xc * xc, axis=-1, keepdims=True)
    o_ref[0] = (xc * jax.lax.rsqrt(var + EPS) * g_ref[...] + b_ref[...]).astype(o_ref.dtype)


def embed_ln_pre(patches, class_emb, pos_emb, gamma, beta, out_dtype=DTYPE):
    Bq, NP, W = patches.shape
    S = NP + 1
    return pl.pallas_call(
        _embed_ln_kernel,
        out_shape=jax.ShapeDtypeStruct((Bq, S, W), out_dtype),
        grid=(Bq,),
        in_specs=[pl.BlockSpec((1, NP, W), lambda i: (i, 0, 0)),
                  pl.BlockSpec((1, W), lambda i: (0, 0)),
                  pl.BlockSpec((S, W), lambda i: (0, 0)),
                  pl.BlockSpec((1, W), lambda i: (0, 0)),
                  pl.BlockSpec((1, W), lambda i: (0, 0))],
        out_specs=pl.BlockSpec((1, S, W), lambda i: (i, 0, 0)),
        compiler_params=pltpu.CompilerParams(dimension_semantics=("parallel",)),
    )(patches, class_emb, pos_emb, gamma, beta)


# --------------- attention kernel (out-proj + residual fused) -----------------
def _attention_kernel(qkv_ref, wo_ref, bo_ref, res_ref, o_ref, acc_ref,
                      *, heads, head_dim, width):
    # One batch element per grid step.  Per head: softmax(q k^T / sqrt(d)) v,
    # immediately projected by out_w's head-slice and accumulated into a single
    # fp32 [S, W] VMEM scratch.  One lane-dense store of (acc + out_b + residual).
    scale = 1.0 / (head_dim ** 0.5)
    acc_ref[...] = jnp.zeros_like(acc_ref)
    for h in range(heads):                                     # trace-time unroll
        q = qkv_ref[0, :, h * head_dim:(h + 1) * head_dim]
        k = qkv_ref[0, :, width + h * head_dim: width + (h + 1) * head_dim]
        v = qkv_ref[0, :, 2 * width + h * head_dim: 2 * width + (h + 1) * head_dim]
        s = jax.lax.dot_general(q, k, (((1,), (1,)), ((), ())),
                                preferred_element_type=jnp.float32) * scale
        s = s - jnp.max(s, axis=-1, keepdims=True)             # fp32 softmax stats
        p = jnp.exp(s)
        p = p * pl.reciprocal(jnp.sum(p, axis=-1, keepdims=True), approx=True)
        o_h = jnp.dot(p.astype(v.dtype), v, preferred_element_type=jnp.float32)
        w_h = wo_ref[h * head_dim:(h + 1) * head_dim, :]        # [d, W] bf16 slice
        acc_ref[...] += jnp.dot(o_h.astype(w_h.dtype), w_h,
                                preferred_element_type=jnp.float32)
    o_ref[0] = (acc_ref[...] + bo_ref[...] +
                res_ref[0].astype(jnp.float32)).astype(o_ref.dtype)


def attention(qkv, out_w, out_b, residual, *, heads, head_dim, width, out_dtype=DTYPE):
    """qkv: [B, S, 3W] (torch in_proj layout Q|K|V); out_w: [W, W] ([in, out]);
    out_b: [1, W] fp32; residual: [B, S, W].  Returns residual + out_proj(MHA)."""
    Bq, S, threeW = qkv.shape
    kernel = functools.partial(_attention_kernel, heads=heads,
                               head_dim=head_dim, width=width)
    return pl.pallas_call(
        kernel,
        out_shape=jax.ShapeDtypeStruct((Bq, S, width), out_dtype),
        grid=(Bq,),
        in_specs=[pl.BlockSpec((1, S, threeW), lambda b: (b, 0, 0)),
                  pl.BlockSpec((width, width), lambda b: (0, 0)),
                  pl.BlockSpec((1, width), lambda b: (0, 0)),
                  pl.BlockSpec((1, S, width), lambda b: (b, 0, 0))],
        out_specs=pl.BlockSpec((1, S, width), lambda b: (b, 0, 0)),
        scratch_shapes=[pltpu.VMEM((S, width), jnp.float32)],
        compiler_params=pltpu.CompilerParams(
            dimension_semantics=("parallel",),
            vmem_limit_bytes=VMEM_LIMIT),
    )(qkv, out_w, out_b, residual)


# --------------------------- parameter construction --------------------------
def init_params(key):
    """PyTorch-convention parameters (nn.Linear weight [out, in], etc.)."""
    ks = jax.random.split(key, 8 + LAYERS)
    p = {
        "conv_w": 0.02 * jax.random.normal(ks[0], (WIDTH, C, PATCH, PATCH)),
        "class_emb": 0.02 * jax.random.normal(ks[1], (WIDTH,)),
        "pos_emb": 0.02 * jax.random.normal(ks[2], (SEQ, WIDTH)),
        "ln_pre_g": jnp.ones((WIDTH,)) + 0.01 * jax.random.normal(ks[3], (WIDTH,)),
        "ln_pre_b": 0.01 * jax.random.normal(ks[4], (WIDTH,)),
        "ln_post_g": jnp.ones((WIDTH,)) + 0.01 * jax.random.normal(ks[5], (WIDTH,)),
        "ln_post_b": 0.01 * jax.random.normal(ks[6], (WIDTH,)),
        "proj": 0.02 * jax.random.normal(ks[7], (WIDTH, OUT_DIM)),
        "blocks": [],
    }
    for li in range(LAYERS):
        bk = jax.random.split(ks[8 + li], 10)
        p["blocks"].append({
            "ln1_g": jnp.ones((WIDTH,)) + 0.01 * jax.random.normal(bk[0], (WIDTH,)),
            "ln1_b": 0.01 * jax.random.normal(bk[1], (WIDTH,)),
            "qkv_w": 0.02 * jax.random.normal(bk[2], (3 * WIDTH, WIDTH)),
            "qkv_b": 0.01 * jax.random.normal(bk[3], (3 * WIDTH,)),
            "out_w": 0.02 * jax.random.normal(bk[4], (WIDTH, WIDTH)),
            "out_b": 0.01 * jax.random.normal(bk[5], (WIDTH,)),
            "ln2_g": jnp.ones((WIDTH,)) + 0.01 * jax.random.normal(bk[6], (WIDTH,)),
            "ln2_b": 0.01 * jax.random.normal(bk[7], (WIDTH,)),
            "fc1_w": 0.02 * jax.random.normal(bk[8], (MLP, WIDTH)),
            "fc1_b": 0.01 * jax.random.normal(bk[9], (MLP,)),
            "fc2_w": 0.02 * jax.random.normal(bk[9], (WIDTH, MLP)),
            "fc2_b": jnp.zeros((WIDTH,)),
        })
    return p


def prepare_params(p):
    """One-time prep: transpose weights to [in, out] bf16, pre-shape every bias /
    LN gamma / beta as fp32 [1, N] (no per-forward reshape/convert glue)."""
    f32 = jnp.float32

    def row(v):
        return v.reshape(1, -1).astype(f32)

    q = {
        "conv_w": p["conv_w"].reshape(WIDTH, C * PATCH * PATCH).T.astype(DTYPE),
        "class_emb": row(p["class_emb"]),
        "pos_emb": p["pos_emb"].astype(f32),
        "ln_pre_g": row(p["ln_pre_g"]), "ln_pre_b": row(p["ln_pre_b"]),
        "ln_post_g": row(p["ln_post_g"]), "ln_post_b": row(p["ln_post_b"]),
        "proj": p["proj"].astype(DTYPE),
        "blocks": [],
    }
    for blk in p["blocks"]:
        q["blocks"].append({
            "ln1_g": row(blk["ln1_g"]), "ln1_b": row(blk["ln1_b"]),
            "qkv_w": blk["qkv_w"].T.astype(DTYPE), "qkv_b": row(blk["qkv_b"]),
            "out_w": blk["out_w"].T.astype(DTYPE), "out_b": row(blk["out_b"]),
            "ln2_g": row(blk["ln2_g"]), "ln2_b": row(blk["ln2_b"]),
            "fc1_w": blk["fc1_w"].T.astype(DTYPE), "fc1_b": row(blk["fc1_b"]),
            "fc2_w": blk["fc2_w"].T.astype(DTYPE), "fc2_b": row(blk["fc2_b"]),
        })
    return q


# ------------------------------ forward pass ---------------------------------
def encode_image(image, params):
    """image: [B, C, IMG, IMG] (NCHW, like the PyTorch module) -> [B, OUT_DIM]."""
    # --- patch embedding: Conv2d(stride=PATCH, bias=False) as a no-bias matmul ---
    x = image.reshape(B, C, GRID, PATCH, GRID, PATCH)
    x = x.transpose(0, 2, 4, 1, 3, 5).reshape(B * N_PATCH, C * PATCH * PATCH)
    patches = fused_matmul(x.astype(DTYPE), params["conv_w"])       # [B*N, W] bf16
    patches = patches.reshape(B, N_PATCH, WIDTH)

    # --- CLS token + positional embedding + ln_pre, fused in one kernel ---
    h = embed_ln_pre(patches, params["class_emb"], params["pos_emb"],
                     params["ln_pre_g"], params["ln_pre_b"])        # [B, SEQ, W]
    h = h.reshape(B * SEQ, WIDTH)

    # --- residual attention blocks (no attn_mask for the visual tower) ---
    for blk in params["blocks"]:
        # MHA branch: LN1 fused into the QKV projection; out-proj + bias +
        # residual fused into the attention kernel.
        qkv = fused_matmul(h, blk["qkv_w"], bias=blk["qkv_b"],
                           ln_g=blk["ln1_g"], ln_b=blk["ln1_b"])    # [B*S, 3W]
        h = attention(qkv.reshape(B, SEQ, 3 * WIDTH), blk["out_w"], blk["out_b"],
                      h.reshape(B, SEQ, WIDTH),
                      heads=HEADS, head_dim=HEAD_DIM, width=WIDTH
                      ).reshape(B * SEQ, WIDTH)

        # MLP branch: LN2 + GELU fused into fc1, residual fused into fc2.
        m = fused_matmul(h, blk["fc1_w"], bias=blk["fc1_b"],
                         ln_g=blk["ln2_g"], ln_b=blk["ln2_b"], act="gelu")
        h = fused_matmul(m, blk["fc2_w"], bias=blk["fc2_b"], residual=h)

    # --- pool CLS token, ln_post fused into the final projection (no bias) ---
    pooled = h.reshape(B, SEQ, WIDTH)[:, 0, :]                      # [B, W]
    z = fused_matmul(pooled, params["proj"],
                     ln_g=params["ln_post_g"], ln_b=params["ln_post_b"],
                     out_dtype=jnp.float32)                         # [B, OUT_DIM]
    return z
    # TODO(synk): the torchvision `preprocess` / white_image buffer in __init__ is
    # host-side PIL preprocessing, not part of the tensor forward pass; omitted.


# ----------------------------------- main -------------------------------------
if __name__ == "__main__":
    key = jax.random.PRNGKey(0)
    pkey, ikey = jax.random.split(key)
    params = prepare_params(init_params(pkey))      # weights transposed/bf16 once
    image = jax.random.normal(ikey, (B, C, IMG, IMG), dtype=jnp.float32)

    fwd = jax.jit(encode_image)
    z = jax.block_until_ready(fwd(image, params))

    assert z.shape == (B, OUT_DIM), z.shape
    assert bool(jnp.all(jnp.isfinite(z)))
    print("KERNEL_OK")
</pallas_src>

<mosaic_0001>
module attributes {stable_mosaic.version = 11 : i64} {
  func.func @_fused_matmul_kernel(%arg0: i32, %arg1: i32, %arg2: i32, %arg3: memref<8x192xbf16, #tpu.memory_space<vmem>>, %arg4: memref<192x256xbf16, #tpu.memory_space<vmem>>, %arg5: memref<8x256xbf16, #tpu.memory_space<vmem>>) attributes {dimension_semantics = [#tpu.dimension_semantics<parallel>, #tpu.dimension_semantics<parallel>, #tpu.dimension_semantics<arbitrary>], iteration_bounds = array<i64: 1, 1, 1>, scalar_prefetch = 0 : i64, scratch_operands = 0 : i64, tpu.core_type = #tpu.core_type<tc>, window_params = [{transform_indices = @transform_0, window_bounds = array<i64: 8, 192>}, {transform_indices = @transform_1, window_bounds = array<i64: 192, 256>}, {transform_indices = @transform_2, window_bounds = array<i64: 8, 256>}]} {
    %c0 = arith.constant 0 : index
    %c0_0 = arith.constant 0 : index
    %0 = vector.load %arg3[%c0, %c0_0] : memref<8x192xbf16, #tpu.memory_space<vmem>>, vector<8x192xbf16>
    %c0_1 = arith.constant 0 : index
    %c0_2 = arith.constant 0 : index
    %1 = vector.load %arg4[%c0_1, %c0_2] : memref<192x256xbf16, #tpu.memory_space<vmem>>, vector<192x256xbf16>
    %cst = arith.constant dense<0.000000e+00> : vector<8x256xf32>
    %2 = tpu.matmul %0, %1, %cst {dimension_numbers = #tpu.dot_dimension_numbers<[1], [0], [0], [1], [0, 0, 1, 1], [], []>} : vector<8x192xbf16>, vector<192x256xbf16>, vector<8x256xf32> -> vector<8x256xf32>
    %3 = arith.truncf %2 : vector<8x256xf32> to vector<8x256xbf16>
    %c0_3 = arith.constant 0 : index
    %c0_4 = arith.constant 0 : index
    %4 = vector.load %arg5[%c0_3, %c0_4] : memref<8x256xbf16, #tpu.memory_space<vmem>>, vector<8x256xbf16>
    tpu.vector_store %arg5[%c0_3, %c0_4], %3 {strides = array<i32>} : memref<8x256xbf16, #tpu.memory_space<vmem>>, vector<8x256xbf16>,
    return
  }
  func.func @transform_0(%arg0: i32, %arg1: i32, %arg2: i32) -> (i32, i32) {
    %c0_i32 = arith.constant 0 : i32
    return %arg0, %arg2 : i32, i32
  }
  func.func @transform_1(%arg0: i32, %arg1: i32, %arg2: i32) -> (i32, i32) {
    %c0_i32 = arith.constant 0 : i32
    return %arg2, %arg1 : i32, i32
  }
  func.func @transform_2(%arg0: i32, %arg1: i32, %arg2: i32) -> (i32, i32) {
    %c0_i32 = arith.constant 0 : i32
    return %arg0, %arg1 : i32, i32
  }
}

module attributes {stable_mosaic.version = 11 : i64} {
  func.func @_attention_kernel(%arg0: i32, %arg1: memref<1x5x768xbf16, #tpu.memory_space<vmem>>, %arg2: memref<256x256xbf16, #tpu.memory_space<vmem>>, %arg3: memref<1x256xf32, #tpu.memory_space<vmem>>, %arg4: memref<1x5x256xbf16, #tpu.memory_space<vmem>>, %arg5: memref<1x5x256xbf16, #tpu.memory_space<vmem>>, %arg6: memref<5x256xf32, #tpu.memory_space<vmem>>) attributes {dimension_semantics = [#tpu.dimension_semantics<parallel>], iteration_bounds = array<i64: 2>, scalar_prefetch = 0 : i64, scratch_operands = 1 : i64, tpu.core_type = #tpu.core_type<tc>, window_params = [{transform_indices = @transform_0, window_bounds = array<i64: 1, 5, 768>}, {pipeline_mode = #tpu.pipeline_mode<synchronous>, transform_indices = @transform_1, window_bounds = array<i64: 256, 256>}, {pipeline_mode = #tpu.pipeline_mode<synchronous>, transform_indices = @transform_2, window_bounds = array<i64: 1, 256>}, {transform_indices = @transform_3, window_bounds = array<i64: 1, 5, 256>}, {transform_indices = @transform_4, window_bounds = array<i64: 1, 5, 256>}]} {
    %cst = arith.constant 0.000000e+00 : f32
    %0 = vector.broadcast %cst : f32 to vector<5x256xf32>
    %c0 = arith.constant 0 : index
    %c0_0 = arith.constant 0 : index
    %1 = vector.load %arg6[%c0, %c0_0] : memref<5x256xf32, #tpu.memory_space<vmem>>, vector<5x256xf32>
    tpu.vector_store %arg6[%c0, %c0_0], %0 {strides = array<i32>} : memref<5x256xf32, #tpu.memory_space<vmem>>, vector<5x256xf32>,
    %c0_1 = arith.constant 0 : index
    %c0_2 = arith.constant 0 : index
    %c0_3 = arith.constant 0 : index
    %2 = vector.load %arg1[%c0_1, %c0_2, %c0_3] : memref<1x5x768xbf16, #tpu.memory_space<vmem>>, vector<1x5x64xbf16>
    %3 = vector.shape_cast %2 : vector<1x5x64xbf16> to vector<5x64xbf16>
    %c0_4 = arith.constant 0 : index
    %c0_5 = arith.constant 0 : index
    %c256 = arith.constant 256 : index
    %4 = vector.load %arg1[%c0_4, %c0_5, %c256] : memref<1x5x768xbf16, #tpu.memory_space<vmem>>, vector<1x5x64xbf16>
    %5 = vector.shape_cast %4 : vector<1x5x64xbf16> to vector<5x64xbf16>
    %c0_6 = arith.constant 0 : index
    %c0_7 = arith.constant 0 : index
    %c512 = arith.constant 512 : index
    %6 = vector.load %arg1[%c0_6, %c0_7, %c512] : memref<1x5x768xbf16, #tpu.memory_space<vmem>>, vector<1x5x64xbf16>
    %7 = vector.shape_cast %6 : vector<1x5x64xbf16> to vector<5x64xbf16>
    %cst_8 = arith.constant dense<0.000000e+00> : vector<5x5xf32>
    %8 = tpu.matmul %3, %5, %cst_8 {dimension_numbers = #tpu.dot_dimension_numbers<[1], [1], [0], [0], [0, 0, 1, 0], [], []>} : vector<5x64xbf16>, vector<5x64xbf16>, vector<5x5xf32> -> vector<5x5xf32>
    %cst_9 = arith.constant 1.250000e-01 : f32
    %9 = vector.broadcast %cst_9 : f32 to vector<5x5xf32>
    %10 = arith.mulf %8, %9 : vector<5x5xf32>
    %cst_10 = arith.constant dense<0xFF800000> : vector<5xf32>
    %11 = vector.multi_reduction <maximumf>, %10, %cst_10 [1] : vector<5x5xf32> to vector<5xf32>
    %12 = vector.shape_cast %11 : vector<5xf32> to vector<5x1xf32>
    %13 = vector.broadcast %12 : vector<5x1xf32> to vector<5x5xf32>
    %14 = arith.subf %10, %13 : vector<5x5xf32>
    %15 = math.exp %14 : vector<5x5xf32>
    %cst_11 = arith.constant dense<0.000000e+00> : vector<5xf32>
    %16 = vector.multi_reduction <add>, %15, %cst_11 [1] : vector<5x5xf32> to vector<5xf32>
    %17 = vector.shape_cast %16 : vector<5xf32> to vector<5x1xf32>
    %18 = tpu.reciprocal %17 {approx = true} : vector<5x1xf32> -> vector<5x1xf32>
    %19 = vector.broadcast %18 : vector<5x1xf32> to vector<5x5xf32>
    %20 = arith.mulf %15, %19 : vector<5x5xf32>
    %21 = arith.truncf %20 : vector<5x5xf32> to vector<5x5xbf16>
    %cst_12 = arith.constant dense<0.000000e+00> : vector<5x64xf32>
    %22 = tpu.matmul %21, %7, %cst_12 {dimension_numbers = #tpu.dot_dimension_numbers<[1], [0], [0], [1], [0, 0, 1, 1], [], []>} : vector<5x5xbf16>, vector<5x64xbf16>, vector<5x64xf32> -> vector<5x64xf32>
    %c0_13 = arith.constant 0 : index
    %c0_14 = arith.constant 0 : index
    %23 = vector.load %arg2[%c0_13, %c0_14] : memref<256x256xbf16, #tpu.memory_space<vmem>>, vector<64x256xbf16>
    %c0_15 = arith.constant 0 : index
    %c0_16 = arith.constant 0 : index
    %24 = vector.load %arg6[%c0_15, %c0_16] : memref<5x256xf32, #tpu.memory_space<vmem>>, vector<5x256xf32>
    %25 = arith.truncf %22 : vector<5x64xf32> to vector<5x64xbf16>
    %cst_17 = arith.constant dense<0.000000e+00> : vector<5x256xf32>
    %26 = tpu.matmul %25, %23, %cst_17 {dimension_numbers = #tpu.dot_dimension_numbers<[1], [0], [0], [1], [0, 0, 1, 1], [], []>} : vector<5x64xbf16>, vector<64x256xbf16>, vector<5x256xf32> -> vector<5x256xf32>
    %27 = arith.addf %24, %26 : vector<5x256xf32>
    %c0_18 = arith.constant 0 : index
    %c0_19 = arith.constant 0 : index
    %28 = vector.load %arg6[%c0_18, %c0_19] : memref<5x256xf32, #tpu.memory_space<vmem>>, vector<5x256xf32>
    tpu.vector_store %arg6[%c0_18, %c0_19], %27 {strides = array<i32>} : memref<5x256xf32, #tpu.memory_space<vmem>>, vector<5x256xf32>,
    %c0_20 = arith.constant 0 : index
    %c0_21 = arith.constant 0 : index
    %c64 = arith.constant 64 : index
    %29 = vector.load %arg1[%c0_20, %c0_21, %c64] : memref<1x5x768xbf16, #tpu.memory_space<vmem>>, vector<1x5x64xbf16>
    %30 = vector.shape_cast %29 : vector<1x5x64xbf16> to vector<5x64xbf16>
    %c0_22 = arith.constant 0 : index
    %c0_23 = arith.constant 0 : index
    %c320 = arith.constant 320 : index
    %31 = vector.load %arg1[%c0_22, %c0_23, %c320] : memref<1x5x768xbf16, #tpu.memory_space<vmem>>, vector<1x5x64xbf16>
    %32 = vector.shape_cast %31 : vector<1x5x64xbf16> to vector<5x64xbf16>
    %c0_24 = arith.constant 0 : index
    %c0_25 = arith.constant 0 : index
    %c576 = arith.constant 576 : index
    %33 = vector.load %arg1[%c0_24, %c0_25, %c576] : memref<1x5x768xbf16, #tpu.memory_space<vmem>>, vector<1x5x64xbf16>
    %34 = vector.shape_cast %33 : vector<1x5x64xbf16> to vector<5x64xbf16>
    %cst_26 = arith.constant dense<0.000000e+00> : vector<5x5xf32>
    %35 = tpu.matmul %30, %32, %cst_26 {dimension_numbers = #tpu.dot_dimension_numbers<[1], [1], [0], [0], [0, 0, 1, 0], [], []>} : vector<5x64xbf16>, vector<5x64xbf16>, vector<5x5xf32> -> vector<5x5xf32>
    %cst_27 = arith.constant 1.250000e-01 : f32
    %36 = vector.broadcast %cst_27 : f32 to vector<5x5xf32>
    %37 = arith.mulf %35, %36 : vector<5x5xf32>
    %cst_28 = arith.constant dense<0xFF800000> : vector<5xf32>
    %38 = vector.multi_reduction <maximumf>, %37, %cst_28 [1] : vector<5x5xf32> to vector<5xf32>
    %39 = vector.shape_cast %38 : vector<5xf32> to vector<5x1xf32>
    %40 = vector.broadcast %39 : vector<5x1xf32> to vector<5x5xf32>
    %41 = arith.subf %37, %40 : vector<5x5xf32>
    %42 = math.exp %41 : vector<5x5xf32>
    %cst_29 = arith.constant dense<0.000000e+00> : vector<5xf32>
    %43 = vector.multi_reduction <add>, %42, %cst_29 [1] : vector<5x5xf32> to vector<5xf32>
    %44 = vector.shape_cast %43 : vector<5xf32> to vector<5x1xf32>
    %45 = tpu.reciprocal %44 {approx = true} : vector<5x1xf32> -> vector<5x1xf32>
    %46 = vector.broadcast %45 : vector<5x1xf32> to vector<5x5xf32>
    %47 = arith.mulf %42, %46 : vector<5x5xf32>
    %48 = arith.truncf %47 : vector<5x5xf32> to vector<5x5xbf16>
    %cst_30 = arith.constant dense<0.000000e+00> : vector<5x64xf32>
    %49 = tpu.matmul %48, %34, %cst_30 {dimension_numbers = #tpu.dot_dimension_numbers<[1], [0], [0], [1], [0, 0, 1, 1], [], []>} : vector<5x5xbf16>, vector<5x64xbf16>, vector<5x64xf32> -> vector<5x64xf32>
    %c64_31 = arith.constant 64 : index
    %c0_32 = arith.constant 0 : index
    %50 = vector.load %arg2[%c64_31, %c0_32] : memref<256x256xbf16, #tpu.memory_space<vmem>>, vector<64x256xbf16>
    %c0_33 = arith.constant 0 : index
    %c0_34 = arith.constant 0 : index
    %51 = vector.load %arg6[%c0_33, %c0_34] : memref<5x256xf32, #tpu.memory_space<vmem>>, vector<5x256xf32>
    %52 = arith.truncf %49 : vector<5x64xf32> to vector<5x64xbf16>
    %cst_35 = arith.constant dense<0.000000e+00> : vector<5x256xf32>
    %53 = tpu.matmul %52, %50, %cst_35 {dimension_numbers = #tpu.dot_dimension_numbers<[1], [0], [0], [1], [0, 0, 1, 1], [], []>} : vector<5x64xbf16>, vector<64x256xbf16>, vector<5x256xf32> -> vector<5x256xf32>
    %54 = arith.addf %51, %53 : vector<5x256xf32>
    %c0_36 = arith.constant 0 : index
    %c0_37 = arith.constant 0 : index
    %55 = vector.load %arg6[%c0_36, %c0_37] : memref<5x256xf32, #tpu.memory_space<vmem>>, vector<5x256xf32>
    tpu.vector_store %arg6[%c0_36, %c0_37], %54 {strides = array<i32>} : memref<5x256xf32, #tpu.memory_space<vmem>>, vector<5x256xf32>,
    %c0_38 = arith.constant 0 : index
    %c0_39 = arith.constant 0 : index
    %c128 = arith.constant 128 : index
    %56 = vector.load %arg1[%c0_38, %c0_39, %c128] : memref<1x5x768xbf16, #tpu.memory_space<vmem>>, vector<1x5x64xbf16>
    %57 = vector.shape_cast %56 : vector<1x5x64xbf16> to vector<5x64xbf16>
    %c0_40 = arith.constant 0 : index
    %c0_41 = arith.constant 0 : index
    %c384 = arith.constant 384 : index
    %58 = vector.load %arg1[%c0_40, %c0_41, %c384] : memref<1x5x768xbf16, #tpu.memory_space<vmem>>, vector<1x5x64xbf16>
    %59 = vector.shape_cast %58 : vector<1x5x64xbf16> to vector<5x64xbf16>
    %c0_42 = arith.constant 0 : index
    %c0_43 = arith.constant 0 : index
    %c640 = arith.constant 640 : index
    %60 = vector.load %arg1[%c0_42, %c0_43, %c640] : memref<1x5x768xbf16, #tpu.memory_space<vmem>>, vector<1x5x64xbf16>
    %61 = vector.shape_cast %60 : vector<1x5x64xbf16> to vector<5x64xbf16>
    %cst_44 = arith.constant dense<0.000000e+00> : vector<5x5xf32>
    %62 = tpu.matmul %57, %59, %cst_44 {dimension_numbers = #tpu.dot_dimension_numbers<[1], [1], [0], [0], [0, 0, 1, 0], [], []>} : vector<5x64xbf16>, vector<5x64xbf16>, vector<5x5xf32> -> vector<5x5xf32>
    %cst_45 = arith.constant 1.250000e-01 : f32
    %63 = vector.broadcast %cst_45 : f32 to vector<5x5xf32>
    %64 = arith.mulf %62, %63 : vector<5x5xf32>
    %cst_46 = arith.constant dense<0xFF800000> : vector<5xf32>
    %65 = vector.multi_reduction <maximumf>, %64, %cst_46 [1] : vector<5x5xf32> to vector<5xf32>
    %66 = vector.shape_cast %65 : vector<5xf32> to vector<5x1xf32>
    %67 = vector.broadcast %66 : vector<5x1xf32> to vector<5x5xf32>
    %68 = arith.subf %64, %67 : vector<5x5xf32>
    %69 = math.exp %68 : vector<5x5xf32>
    %cst_47 = arith.constant dense<0.000000e+00> : vector<5xf32>
    %70 = vector.multi_reduction <add>, %69, %cst_47 [1] : vector<5x5xf32> to vector<5xf32>
    %71 = vector.shape_cast %70 : vector<5xf32> to vector<5x1xf32>
    %72 = tpu.reciprocal %71 {approx = true} : vector<5x1xf32> -> vector<5x1xf32>
    %73 = vector.broadcast %72 : vector<5x1xf32> to vector<5x5xf32>
    %74 = arith.mulf %69, %73 : vector<5x5xf32>
    %75 = arith.truncf %74 : vector<5x5xf32> to vector<5x5xbf16>
    %cst_48 = arith.constant dense<0.000000e+00> : vector<5x64xf32>
    %76 = tpu.matmul %75, %61, %cst_48 {dimension_numbers = #tpu.dot_dimension_numbers<[1], [0], [0], [1], [0, 0, 1, 1], [], []>} : vector<5x5xbf16>, vector<5x64xbf16>, vector<5x64xf32> -> vector<5x64xf32>
    %c128_49 = arith.constant 128 : index
    %c0_50 = arith.constant 0 : index
    %77 = vector.load %arg2[%c128_49, %c0_50] : memref<256x256xbf16, #tpu.memory_space<vmem>>, vector<64x256xbf16>
    %c0_51 = arith.constant 0 : index
    %c0_52 = arith.constant 0 : index
    %78 = vector.load %arg6[%c0_51, %c0_52] : memref<5x256xf32, #tpu.memory_space<vmem>>, vector<5x256xf32>
    %79 = arith.truncf %76 : vector<5x64xf32> to vector<5x64xbf16>
    %cst_53 = arith.constant dense<0.000000e+00> : vector<5x256xf32>
    %80 = tpu.matmul %79, %77, %cst_53 {dimension_numbers = #tpu.dot_dimension_numbers<[1], [0], [0], [1], [0, 0, 1, 1], [], []>} : vector<5x64xbf16>, vector<64x256xbf16>, vector<5x256xf32> -> vector<5x256xf32>
    %81 = arith.addf %78, %80 : vector<5x256xf32>
    %c0_54 = arith.constant 0 : index
    %c0_55 = arith.constant 0 : index
    %82 = vector.load %arg6[%c0_54, %c0_55] : memref<5x256xf32, #tpu.memory_space<vmem>>, vector<5x256xf32>
    tpu.vector_store %arg6[%c0_54, %c0_55], %81 {strides = array<i32>} : memref<5x256xf32, #tpu.memory_space<vmem>>, vector<5x256xf32>,
    %c0_56 = arith.constant 0 : index
    %c0_57 = arith.constant 0 : index
    %c192 = arith.constant 192 : index
    %83 = vector.load %arg1[%c0_56, %c0_57, %c192] : memref<1x5x768xbf16, #tpu.memory_space<vmem>>, vector<1x5x64xbf16>
    %84 = vector.shape_cast %83 : vector<1x5x64xbf16> to vector<5x64xbf16>
    %c0_58 = arith.constant 0 : index
    %c0_59 = arith.constant 0 : index
    %c448 = arith.constant 448 : index
    %85 = vector.load %arg1[%c0_58, %c0_59, %c448] : memref<1x5x768xbf16, #tpu.memory_space<vmem>>, vector<1x5x64xbf16>
    %86 = vector.shape_cast %85 : vector<1x5x64xbf16> to vector<5x64xbf16>
    %c0_60 = arith.constant 0 : index
    %c0_61 = arith.constant 0 : index
    %c704 = arith.constant 704 : index
    %87 = vector.load %arg1[%c0_60, %c0_61, %c704] : memref<1x5x768xbf16, #tpu.memory_space<vmem>>, vector<1x5x64xbf16>
    %88 = vector.shape_cast %87 : vector<1x5x64xbf16> to vector<5x64xbf16>
    %cst_62 = arith.constant dense<0.000000e+00> : vector<5x5xf32>
    %89 = tpu.matmul %84, %86, %cst_62 {dimension_numbers = #tpu.dot_dimension_numbers<[1], [1], [0], [0], [0, 0, 1, 0], [], []>} : vector<5x64xbf16>, vector<5x64xbf16>, vector<5x5xf32> -> vector<5x5xf32>
    %cst_63 = arith.constant 1.250000e-01 : f32
    %90 = vector.broadcast %cst_63 : f32 to vector<5x5xf32>
    %91 = arith.mulf %89, %90 : vector<5x5xf32>
    %cst_64 = arith.constant dense<0xFF800000> : vector<5xf32>
    %92 = vector.multi_reduction <maximumf>, %91, %cst_64 [1] : vector<5x5xf32> to vector<5xf32>
    %93 = vector.shape_cast %92 : vector<5xf32> to vector<5x1xf32>
    %94 = vector.broadcast %93 : vector<5x1xf32> to vector<5x5xf32>
    %95 = arith.subf %91, %94 : vector<5x5xf32>
    %96 = math.exp %95 : vector<5x5xf32>
    %cst_65 = arith.constant dense<0.000000e+00> : vector<5xf32>
    %97 = vector.multi_reduction <add>, %96, %cst_65 [1] : vector<5x5xf32> to vector<5xf32>
    %98 = vector.shape_cast %97 : vector<5xf32> to vector<5x1xf32>
    %99 = tpu.reciprocal %98 {approx = true} : vector<5x1xf32> -> vector<5x1xf32>
    %100 = vector.broadcast %99 : vector<5x1xf32> to vector<5x5xf32>
    %101 = arith.mulf %96, %100 : vector<5x5xf32>
    %102 = arith.truncf %101 : vector<5x5xf32> to vector<5x5xbf16>
    %cst_66 = arith.constant dense<0.000000e+00> : vector<5x64xf32>
    %103 = tpu.matmul %102, %88, %cst_66 {dimension_numbers = #tpu.dot_dimension_numbers<[1], [0], [0], [1], [0, 0, 1, 1], [], []>} : vector<5x5xbf16>, vector<5x64xbf16>, vector<5x64xf32> -> vector<5x64xf32>
    %c192_67 = arith.constant 192 : index
    %c0_68 = arith.constant 0 : index
    %104 = vector.load %arg2[%c192_67, %c0_68] : memref<256x256xbf16, #tpu.memory_space<vmem>>, vector<64x256xbf16>
    %c0_69 = arith.constant 0 : index
    %c0_70 = arith.constant 0 : index
    %105 = vector.load %arg6[%c0_69, %c0_70] : memref<5x256xf32, #tpu.memory_space<vmem>>, vector<5x256xf32>
    %106 = arith.truncf %103 : vector<5x64xf32> to vector<5x64xbf16>
    %cst_71 = arith.constant dense<0.000000e+00> : vector<5x256xf32>
    %107 = tpu.matmul %106, %104, %cst_71 {dimension_numbers = #tpu.dot_dimension_numbers<[1], [0], [0], [1], [0, 0, 1, 1], [], []>} : vector<5x64xbf16>, vector<64x256xbf16>, vector<5x256xf32> -> vector<5x256xf32>
    %108 = arith.addf %105, %107 : vector<5x256xf32>
    %c0_72 = arith.constant 0 : index
    %c0_73 = arith.constant 0 : index
    %109 = vector.load %arg6[%c0_72, %c0_73] : memref<5x256xf32, #tpu.memory_space<vmem>>, vector<5x256xf32>
    tpu.vector_store %arg6[%c0_72, %c0_73], %108 {strides = array<i32>} : memref<5x256xf32, #tpu.memory_space<vmem>>, vector<5x256xf32>,
    %c0_74 = arith.constant 0 : index
    %c0_75 = arith.constant 0 : index
    %110 = vector.load %arg6[%c0_74, %c0_75] : memref<5x256xf32, #tpu.memory_space<vmem>>, vector<5x256xf32>
    %c0_76 = arith.constant 0 : index
    %c0_77 = arith.constant 0 : index
    %111 = vector.load %arg3[%c0_76, %c0_77] : memref<1x256xf32, #tpu.memory_space<vmem>>, vector<1x256xf32>
    %112 = vector.broadcast %111 : vector<1x256xf32> to vector<5x256xf32>
    %113 = arith.addf %110, %112 : vector<5x256xf32>
    %c0_78 = arith.constant 0 : index
    %c0_79 = arith.constant 0 : index
    %c0_80 = arith.constant 0 : index
    %114 = vector.load %arg4[%c0_78, %c0_79, %c0_80] : memref<1x5x256xbf16, #tpu.memory_space<vmem>>, vector<1x5x256xbf16>
    %115 = vector.shape_cast %114 : vector<1x5x256xbf16> to vector<5x256xbf16>
    %116 = arith.extf %115 : vector<5x256xbf16> to vector<5x256xf32>
    %117 = arith.addf %113, %116 : vector<5x256xf32>
    %118 = arith.truncf %117 : vector<5x256xf32> to vector<5x256xbf16>
    %c0_81 = arith.constant 0 : index
    %c0_82 = arith.constant 0 : index
    %c0_83 = arith.constant 0 : index
    %119 = vector.load %arg5[%c0_81, %c0_82, %c0_83] : memref<1x5x256xbf16, #tpu.memory_space<vmem>>, vector<1x5x256xbf16>
    %120 = vector.shape_cast %119 : vector<1x5x256xbf16> to vector<5x256xbf16>
    %121 = vector.shape_cast %118 : vector<5x256xbf16> to vector<1x5x256xbf16>
    tpu.vector_store %arg5[%c0_81, %c0_82, %c0_83], %121 {strides = array<i32>} : memref<1x5x256xbf16, #tpu.memory_space<vmem>>, vector<1x5x256xbf16>,
    return
  }
  func.func @transform_0(%arg0: i32) -> (i32, i32, i32) {
    %c0_i32 = arith.constant 0 : i32
    %c0_i32_0 = arith.constant 0 : i32
    %c0_i32_1 = arith.constant 0 : i32
    return %arg0, %c0_i32, %c0_i32_0 : i32, i32, i32
  }
  func.func @transform_1(%arg0: i32) -> (i32, i32) {
    %c0_i32 = arith.constant 0 : i32
    %c0_i32_0 = arith.constant 0 : i32
    %c0_i32_1 = arith.constant 0 : i32
    return %c0_i32, %c0_i32_0 : i32, i32
  }
  func.func @transform_2(%arg0: i32) -> (i32, i32) {
    %c0_i32 = arith.constant 0 : i32
    %c0_i32_0 = arith.constant 0 : i32
    %c0_i32_1 = arith.constant 0 : i32
    return %c0_i32, %c0_i32_0 : i32, i32
  }
  func.func @transform_3(%arg0: i32) -> (i32, i32, i32) {
    %c0_i32 = arith.constant 0 : i32
    %c0_i32_0 = arith.constant 0 : i32
    %c0_i32_1 = arith.constant 0 : i32
    return %arg0, %c0_i32, %c0_i32_0 : i32, i32, i32
  }
  func.func @transform_4(%arg0: i32) -> (i32, i32, i32) {
    %c0_i32 = arith.constant 0 : i32
    %c0_i32_0 = arith.constant 0 : i32
    %c0_i32_1 = arith.constant 0 : i32
    return %arg0, %c0_i32, %c0_i32_0 : i32, i32, i32
  }
}

module attributes {stable_mosaic.version = 11 : i64} {
  func.func @_embed_ln_kernel(%arg0: i32, %arg1: memref<1x4x256xbf16, #tpu.memory_space<vmem>>, %arg2: memref<1x256xf32, #tpu.memory_space<vmem>>, %arg3: memref<5x256xf32, #tpu.memory_space<vmem>>, %arg4: memref<1x256xf32, #tpu.memory_space<vmem>>, %arg5: memref<1x256xf32, #tpu.memory_space<vmem>>, %arg6: memref<1x5x256xbf16, #tpu.memory_space<vmem>>) attributes {dimension_semantics = [#tpu.dimension_semantics<parallel>], iteration_bounds = array<i64: 2>, scalar_prefetch = 0 : i64, scratch_operands = 0 : i64, tpu.core_type = #tpu.core_type<tc>, window_params = [{transform_indices = @transform_0, window_bounds = array<i64: 1, 4, 256>}, {pipeline_mode = #tpu.pipeline_mode<synchronous>, transform_indices = @transform_1, window_bounds = array<i64: 1, 256>}, {pipeline_mode = #tpu.pipeline_mode<synchronous>, transform_indices = @transform_2, window_bounds = array<i64: 5, 256>}, {pipeline_mode = #tpu.pipeline_mode<synchronous>, transform_indices = @transform_3, window_bounds = array<i64: 1, 256>}, {pipeline_mode = #tpu.pipeline_mode<synchronous>, transform_indices = @transform_4, window_bounds = array<i64: 1, 256>}, {transform_indices = @transform_5, window_bounds = array<i64: 1, 5, 256>}]} {
    %c0 = arith.constant 0 : index
    %c0_0 = arith.constant 0 : index
    %0 = vector.load %arg2[%c0, %c0_0] : memref<1x256xf32, #tpu.memory_space<vmem>>, vector<1x256xf32>
    %c0_1 = arith.constant 0 : index
    %c0_2 = arith.constant 0 : index
    %c0_3 = arith.constant 0 : index
    %1 = vector.load %arg1[%c0_1, %c0_2, %c0_3] : memref<1x4x256xbf16, #tpu.memory_space<vmem>>, vector<1x4x256xbf16>
    %2 = vector.shape_cast %1 : vector<1x4x256xbf16> to vector<4x256xbf16>
    %3 = arith.extf %2 : vector<4x256xbf16> to vector<4x256xf32>
    %4 = tpu.concatenate %0, %3 in 0 : vector<1x256xf32>, vector<4x256xf32> -> vector<5x256xf32>
    %c0_4 = arith.constant 0 : index
    %c0_5 = arith.constant 0 : index
    %5 = vector.load %arg3[%c0_4, %c0_5] : memref<5x256xf32, #tpu.memory_space<vmem>>, vector<5x256xf32>
    %6 = arith.addf %4, %5 : vector<5x256xf32>
    %cst = arith.constant dense<0.000000e+00> : vector<5xf32>
    %7 = vector.multi_reduction <add>, %6, %cst [1] : vector<5x256xf32> to vector<5xf32>
    %8 = vector.shape_cast %7 : vector<5xf32> to vector<5x1xf32>
    %cst_6 = arith.constant 2.560000e+02 : f32
    %9 = vector.broadcast %cst_6 : f32 to vector<5x1xf32>
    %10 = arith.divf %8, %9 : vector<5x1xf32>
    %11 = vector.broadcast %10 : vector<5x1xf32> to vector<5x256xf32>
    %12 = arith.subf %6, %11 : vector<5x256xf32>
    %13 = arith.mulf %12, %12 : vector<5x256xf32>
    %cst_7 = arith.constant dense<0.000000e+00> : vector<5xf32>
    %14 = vector.multi_reduction <add>, %13, %cst_7 [1] : vector<5x256xf32> to vector<5xf32>
    %15 = vector.shape_cast %14 : vector<5xf32> to vector<5x1xf32>
    %cst_8 = arith.constant 2.560000e+02 : f32
    %16 = vector.broadcast %cst_8 : f32 to vector<5x1xf32>
    %17 = arith.divf %15, %16 : vector<5x1xf32>
    %cst_9 = arith.constant 9.99999974E-6 : f32
    %18 = vector.broadcast %cst_9 : f32 to vector<5x1xf32>
    %19 = arith.addf %17, %18 : vector<5x1xf32>
    %20 = math.rsqrt %19 : vector<5x1xf32>
    %21 = vector.broadcast %20 : vector<5x1xf32> to vector<5x256xf32>
    %22 = arith.mulf %12, %21 : vector<5x256xf32>
    %c0_10 = arith.constant 0 : index
    %c0_11 = arith.constant 0 : index
    %23 = vector.load %arg4[%c0_10, %c0_11] : memref<1x256xf32, #tpu.memory_space<vmem>>, vector<1x256xf32>
    %24 = vector.broadcast %23 : vector<1x256xf32> to vector<5x256xf32>
    %25 = arith.mulf %22, %24 : vector<5x256xf32>
    %c0_12 = arith.constant 0 : index
    %c0_13 = arith.constant 0 : index
    %26 = vector.load %arg5[%c0_12, %c0_13] : memref<1x256xf32, #tpu.memory_space<vmem>>, vector<1x256xf32>
    %27 = vector.broadcast %26 : vector<1x256xf32> to vector<5x256xf32>
    %28 = arith.addf %25, %27 : vector<5x256xf32>
    %29 = arith.truncf %28 : vector<5x256xf32> to vector<5x256xbf16>
    %c0_14 = arith.constant 0 : index
    %c0_15 = arith.constant 0 : index
    %c0_16 = arith.constant 0 : index
    %30 = vector.load %arg6[%c0_14, %c0_15, %c0_16] : memref<1x5x256xbf16, #tpu.memory_space<vmem>>, vector<1x5x256xbf16>
    %31 = vector.shape_cast %30 : vector<1x5x256xbf16> to vector<5x256xbf16>
    %32 = vector.shape_cast %29 : vector<5x256xbf16> to vector<1x5x256xbf16>
    tpu.vector_store %arg6[%c0_14, %c0_15, %c0_16], %32 {strides = array<i32>} : memref<1x5x256xbf16, #tpu.memory_space<vmem>>, vector<1x5x256xbf16>,
    return
  }
  func.func @transform_0(%arg0: i32) -> (i32, i32, i32) {
    %c0_i32 = arith.constant 0 : i32
    %c0_i32_0 = arith.constant 0 : i32
    %c0_i32_1 = arith.constant 0 : i32
    return %arg0, %c0_i32, %c0_i32_0 : i32, i32, i32
  }
  func.func @transform_1(%arg0: i32) -> (i32, i32) {
    %c0_i32 = arith.constant 0 : i32
    %c0_i32_0 = arith.constant 0 : i32
    %c0_i32_1 = arith.constant 0 : i32
    return %c0_i32, %c0_i32_0 : i32, i32
  }
  func.func @transform_2(%arg0: i32) -> (i32, i32) {
    %c0_i32 = arith.constant 0 : i32
    %c0_i32_0 = arith.constant 0 : i32
    %c0_i32_1 = arith.constant 0 : i32
    return %c0_i32, %c0_i32_0 : i32, i32
  }
  func.func @transform_3(%arg0: i32) -> (i32, i32) {
    %c0_i32 = arith.constant 0 : i32
    %c0_i32_0 = arith.constant 0 : i32
    %c0_i32_1 = arith.constant 0 : i32
    return %c0_i32, %c0_i32_0 : i32, i32
  }
  func.func @transform_4(%arg0: i32) -> (i32, i32) {
    %c0_i32 = arith.constant 0 : i32
    %c0_i32_0 = arith.constant 0 : i32
    %c0_i32_1 = arith.constant 0 : i32
    return %c0_i32, %c0_i32_0 : i32, i32
  }
  func.func @transform_5(%arg0: i32) -> (i32, i32, i32) {
    %c0_i32 = arith.constant 0 : i32
    %c0_i32_0 = arith.constant 0 : i32
    %c0_i32_1 = arith.constant 0 : i32
    return %arg0, %c0_i32, %c0_i32_0 : i32, i32, i32
  }
}

module attributes {stable_mosaic.version = 11 : i64} {
  func.func @_fused_matmul_kernel(%arg0: i32, %arg1: i32, %arg2: i32, %arg3: memref<10x256xbf16, #tpu.memory_space<vmem>>, %arg4: memref<256x384xbf16, #tpu.memory_space<vmem>>, %arg5: memref<1x384xf32, #tpu.memory_space<vmem>>, %arg6: memref<1x256xf32, #tpu.memory_space<vmem>>, %arg7: memref<1x256xf32, #tpu.memory_space<vmem>>, %arg8: memref<10x384xbf16, #tpu.memory_space<vmem>>, %arg9: memref<10x256xbf16, #tpu.memory_space<vmem>>) attributes {dimension_semantics = [#tpu.dimension_semantics<parallel>, #tpu.dimension_semantics<arbitrary>, #tpu.dimension_semantics<arbitrary>], iteration_bounds = array<i64: 1, 2, 1>, scalar_prefetch = 0 : i64, scratch_operands = 1 : i64, tpu.core_type = #tpu.core_type<tc>, window_params = [{transform_indices = @transform_0, window_bounds = array<i64: 10, 256>}, {transform_indices = @transform_1, window_bounds = array<i64: 256, 384>}, {transform_indices = @transform_2, window_bounds = array<i64: 1, 384>}, {transform_indices = @transform_3, window_bounds = array<i64: 1, 256>}, {transform_indices = @transform_4, window_bounds = array<i64: 1, 256>}, {transform_indices = @transform_5, window_bounds = array<i64: 10, 384>}]} {
    %c0_i32 = arith.constant 0 : i32
    %0 = arith.cmpi eq, %arg1, %c0_i32 : i32
    %1 = arith.extui %0 : i1 to i32
    %c0_i32_0 = arith.constant 0 : i32
    %2 = arith.cmpi ne, %1, %c0_i32_0 : i32
    scf.if %2 {
      %c0_8 = arith.constant 0 : index
      %c0_9 = arith.constant 0 : index
      %11 = vector.load %arg3[%c0_8, %c0_9] : memref<10x256xbf16, #tpu.memory_space<vmem>>, vector<10x256xbf16>
      %12 = arith.extf %11 : vector<10x256xbf16> to vector<10x256xf32>
      %cst_10 = arith.constant dense<0.000000e+00> : vector<10xf32>
      %13 = vector.multi_reduction <add>, %12, %cst_10 [1] : vector<10x256xf32> to vector<10xf32>
      %14 = vector.shape_cast %13 : vector<10xf32> to vector<10x1xf32>
      %cst_11 = arith.constant 2.560000e+02 : f32
      %15 = vector.broadcast %cst_11 : f32 to vector<10x1xf32>
      %16 = arith.divf %14, %15 : vector<10x1xf32>
      %17 = vector.broadcast %16 : vector<10x1xf32> to vector<10x256xf32>
      %18 = arith.subf %12, %17 : vector<10x256xf32>
      %19 = arith.mulf %18, %18 : vector<10x256xf32>
      %cst_12 = arith.constant dense<0.000000e+00> : vector<10xf32>
      %20 = vector.multi_reduction <add>, %19, %cst_12 [1] : vector<10x256xf32> to vector<10xf32>
      %21 = vector.shape_cast %20 : vector<10xf32> to vector<10x1xf32>
      %cst_13 = arith.constant 2.560000e+02 : f32
      %22 = vector.broadcast %cst_13 : f32 to vector<10x1xf32>
      %23 = arith.divf %21, %22 : vector<10x1xf32>
      %cst_14 = arith.constant 9.99999974E-6 : f32
      %24 = vector.broadcast %cst_14 : f32 to vector<10x1xf32>
      %25 = arith.addf %23, %24 : vector<10x1xf32>
      %26 = math.rsqrt %25 : vector<10x1xf32>
      %27 = vector.broadcast %26 : vector<10x1xf32> to vector<10x256xf32>
      %28 = arith.mulf %18, %27 : vector<10x256xf32>
      %c0_15 = arith.constant 0 : index
      %c0_16 = arith.constant 0 : index
      %29 = vector.load %arg6[%c0_15, %c0_16] : memref<1x256xf32, #tpu.memory_space<vmem>>, vector<1x256xf32>
      %30 = vector.broadcast %29 : vector<1x256xf32> to vector<10x256xf32>
      %31 = arith.mulf %28, %30 : vector<10x256xf32>
      %c0_17 = arith.constant 0 : index
      %c0_18 = arith.constant 0 : index
      %32 = vector.load %arg7[%c0_17, %c0_18] : memref<1x256xf32, #tpu.memory_space<vmem>>, vector<1x256xf32>
      %33 = vector.broadcast %32 : vector<1x256xf32> to vector<10x256xf32>
      %34 = arith.addf %31, %33 : vector<10x256xf32>
      %35 = arith.truncf %34 : vector<10x256xf32> to vector<10x256xbf16>
      %c0_19 = arith.constant 0 : index
      %c0_20 = arith.constant 0 : index
      %36 = vector.load %arg9[%c0_19, %c0_20] : memref<10x256xbf16, #tpu.memory_space<vmem>>, vector<10x256xbf16>
      tpu.vector_store %arg9[%c0_19, %c0_20], %35 {strides = array<i32>} : memref<10x256xbf16, #tpu.memory_space<vmem>>, vector<10x256xbf16>,
    } else {
    }
    %c0 = arith.constant 0 : index
    %c0_1 = arith.constant 0 : index
    %3 = vector.load %arg9[%c0, %c0_1] : memref<10x256xbf16, #tpu.memory_space<vmem>>, vector<10x256xbf16>
    %c0_2 = arith.constant 0 : index
    %c0_3 = arith.constant 0 : index
    %4 = vector.load %arg4[%c0_2, %c0_3] : memref<256x384xbf16, #tpu.memory_space<vmem>>, vector<256x384xbf16>
    %cst = arith.constant dense<0.000000e+00> : vector<10x384xf32>
    %5 = tpu.matmul %3, %4, %cst {dimension_numbers = #tpu.dot_dimension_numbers<[1], [0], [0], [1], [0, 0, 1, 1], [], []>} : vector<10x256xbf16>, vector<256x384xbf16>, vector<10x384xf32> -> vector<10x384xf32>
    %c0_4 = arith.constant 0 : index
    %c0_5 = arith.constant 0 : index
    %6 = vector.load %arg5[%c0_4, %c0_5] : memref<1x384xf32, #tpu.memory_space<vmem>>, vector<1x384xf32>
    %7 = vector.broadcast %6 : vector<1x384xf32> to vector<10x384xf32>
    %8 = arith.addf %5, %7 : vector<10x384xf32>
    %9 = arith.truncf %8 : vector<10x384xf32> to vector<10x384xbf16>
    %c0_6 = arith.constant 0 : index
    %c0_7 = arith.constant 0 : index
    %10 = vector.load %arg8[%c0_6, %c0_7] : memref<10x384xbf16, #tpu.memory_space<vmem>>, vector<10x384xbf16>
    tpu.vector_store %arg8[%c0_6, %c0_7], %9 {strides = array<i32>} : memref<10x384xbf16, #tpu.memory_space<vmem>>, vector<10x384xbf16>,
    return
  }
  func.func @transform_0(%arg0: i32, %arg1: i32, %arg2: i32) -> (i32, i32) {
    %c0_i32 = arith.constant 0 : i32
    return %arg0, %arg2 : i32, i32
  }
  func.func @transform_1(%arg0: i32, %arg1: i32, %arg2: i32) -> (i32, i32) {
    %c0_i32 = arith.constant 0 : i32
    return %arg2, %arg1 : i32, i32
  }
  func.func @transform_2(%arg0: i32, %arg1: i32, %arg2: i32) -> (i32, i32) {
    %c0_i32 = arith.constant 0 : i32
    %c0_i32_0 = arith.constant 0 : i32
    return %c0_i32, %arg1 : i32, i32
  }
  func.func @transform_3(%arg0: i32, %arg1: i32, %arg2: i32) -> (i32, i32) {
    %c0_i32 = arith.constant 0 : i32
    %c0_i32_0 = arith.constant 0 : i32
    return %c0_i32, %arg2 : i32, i32
  }
  func.func @transform_4(%arg0: i32, %arg1: i32, %arg2: i32) -> (i32, i32) {
    %c0_i32 = arith.constant 0 : i32
    %c0_i32_0 = arith.constant 0 : i32
    return %c0_i32, %arg2 : i32, i32
  }
  func.func @transform_5(%arg0: i32, %arg1: i32, %arg2: i32) -> (i32, i32) {
    %c0_i32 = arith.constant 0 : i32
    return %arg0, %arg1 : i32, i32
  }
}

module attributes {stable_mosaic.version = 11 : i64} {
  func.func @_fused_matmul_kernel(%arg0: i32, %arg1: i32, %arg2: i32, %arg3: memref<10x512xbf16, #tpu.memory_space<vmem>>, %arg4: memref<512x256xbf16, #tpu.memory_space<vmem>>, %arg5: memref<1x256xf32, #tpu.memory_space<vmem>>, %arg6: memref<10x256xbf16, #tpu.memory_space<vmem>>, %arg7: memref<10x256xbf16, #tpu.memory_space<vmem>>, %arg8: memref<10x256xf32, #tpu.memory_space<vmem>>) attributes {dimension_semantics = [#tpu.dimension_semantics<parallel>, #tpu.dimension_semantics<parallel>, #tpu.dimension_semantics<arbitrary>], iteration_bounds = array<i64: 1, 1, 2>, scalar_prefetch = 0 : i64, scratch_operands = 1 : i64, tpu.core_type = #tpu.core_type<tc>, window_params = [{transform_indices = @transform_0, window_bounds = array<i64: 10, 512>}, {transform_indices = @transform_1, window_bounds = array<i64: 512, 256>}, {transform_indices = @transform_2, window_bounds = array<i64: 1, 256>}, {transform_indices = @transform_3, window_bounds = array<i64: 10, 256>}, {transform_indices = @transform_4, window_bounds = array<i64: 10, 256>}]} {
    %c0 = arith.constant 0 : index
    %c0_0 = arith.constant 0 : index
    %0 = vector.load %arg3[%c0, %c0_0] : memref<10x512xbf16, #tpu.memory_space<vmem>>, vector<10x512xbf16>
    %c0_i32 = arith.constant 0 : i32
    %1 = arith.cmpi eq, %arg2, %c0_i32 : i32
    %2 = arith.extui %1 : i1 to i32
    %c0_i32_1 = arith.constant 0 : i32
    %3 = arith.cmpi ne, %2, %c0_i32_1 : i32
    scf.if %3 {
      %cst_9 = arith.constant 0.000000e+00 : f32
      %12 = vector.broadcast %cst_9 : f32 to vector<10x256xf32>
      %c0_10 = arith.constant 0 : index
      %c0_11 = arith.constant 0 : index
      %13 = vector.load %arg8[%c0_10, %c0_11] : memref<10x256xf32, #tpu.memory_space<vmem>>, vector<10x256xf32>
      tpu.vector_store %arg8[%c0_10, %c0_11], %12 {strides = array<i32>} : memref<10x256xf32, #tpu.memory_space<vmem>>, vector<10x256xf32>,
    } else {
    }
    %c0_2 = arith.constant 0 : index
    %c0_3 = arith.constant 0 : index
    %4 = vector.load %arg8[%c0_2, %c0_3] : memref<10x256xf32, #tpu.memory_space<vmem>>, vector<10x256xf32>
    %c0_4 = arith.constant 0 : index
    %c0_5 = arith.constant 0 : index
    %5 = vector.load %arg4[%c0_4, %c0_5] : memref<512x256xbf16, #tpu.memory_space<vmem>>, vector<512x256xbf16>
    %cst = arith.constant dense<0.000000e+00> : vector<10x256xf32>
    %6 = tpu.matmul %0, %5, %cst {dimension_numbers = #tpu.dot_dimension_numbers<[1], [0], [0], [1], [0, 0, 1, 1], [], []>} : vector<10x512xbf16>, vector<512x256xbf16>, vector<10x256xf32> -> vector<10x256xf32>
    %7 = arith.addf %4, %6 : vector<10x256xf32>
    %c0_6 = arith.constant 0 : index
    %c0_7 = arith.constant 0 : index
    %8 = vector.load %arg8[%c0_6, %c0_7] : memref<10x256xf32, #tpu.memory_space<vmem>>, vector<10x256xf32>
    tpu.vector_store %arg8[%c0_6, %c0_7], %7 {strides = array<i32>} : memref<10x256xf32, #tpu.memory_space<vmem>>, vector<10x256xf32>,
    %c1_i32 = arith.constant 1 : i32
    %9 = arith.cmpi eq, %arg2, %c1_i32 : i32
    %10 = arith.extui %9 : i1 to i32
    %c0_i32_8 = arith.constant 0 : i32
    %11 = arith.cmpi ne, %10, %c0_i32_8 : i32
    scf.if %11 {
      %c0_9 = arith.constant 0 : index
      %c0_10 = arith.constant 0 : index
      %12 = vector.load %arg8[%c0_9, %c0_10] : memref<10x256xf32, #tpu.memory_space<vmem>>, vector<10x256xf32>
      %c0_11 = arith.constant 0 : index
      %c0_12 = arith.constant 0 : index
      %13 = vector.load %arg5[%c0_11, %c0_12] : memref<1x256xf32, #tpu.memory_space<vmem>>, vector<1x256xf32>
      %14 = vector.broadcast %13 : vector<1x256xf32> to vector<10x256xf32>
      %15 = arith.addf %12, %14 : vector<10x256xf32>
      %c0_13 = arith.constant 0 : index
      %c0_14 = arith.constant 0 : index
      %16 = vector.load %arg6[%c0_13, %c0_14] : memref<10x256xbf16, #tpu.memory_space<vmem>>, vector<10x256xbf16>
      %17 = arith.extf %16 : vector<10x256xbf16> to vector<10x256xf32>
      %18 = arith.addf %15, %17 : vector<10x256xf32>
      %19 = arith.truncf %18 : vector<10x256xf32> to vector<10x256xbf16>
      %c0_15 = arith.constant 0 : index
      %c0_16 = arith.constant 0 : index
      %20 = vector.load %arg7[%c0_15, %c0_16] : memref<10x256xbf16, #tpu.memory_space<vmem>>, vector<10x256xbf16>
      tpu.vector_store %arg7[%c0_15, %c0_16], %19 {strides = array<i32>} : memref<10x256xbf16, #tpu.memory_space<vmem>>, vector<10x256xbf16>,
    } else {
    }
    return
  }
  func.func @transform_0(%arg0: i32, %arg1: i32, %arg2: i32) -> (i32, i32) {
    %c0_i32 = arith.constant 0 : i32
    return %arg0, %arg2 : i32, i32
  }
  func.func @transform_1(%arg0: i32, %arg1: i32, %arg2: i32) -> (i32, i32) {
    %c0_i32 = arith.constant 0 : i32
    return %arg2, %arg1 : i32, i32
  }
  func.func @transform_2(%arg0: i32, %arg1: i32, %arg2: i32) -> (i32, i32) {
    %c0_i32 = arith.constant 0 : i32
    %c0_i32_0 = arith.constant 0 : i32
    return %c0_i32, %arg1 : i32, i32
  }
  func.func @transform_3(%arg0: i32, %arg1: i32, %arg2: i32) -> (i32, i32) {
    %c0_i32 = arith.constant 0 : i32
    return %arg0, %arg1 : i32, i32
  }
  func.func @transform_4(%arg0: i32, %arg1: i32, %arg2: i32) -> (i32, i32) {
    %c0_i32 = arith.constant 0 : i32
    return %arg0, %arg1 : i32, i32
  }
}

module attributes {stable_mosaic.version = 11 : i64} {
  func.func @_fused_matmul_kernel(%arg0: i32, %arg1: i32, %arg2: i32, %arg3: memref<10x256xbf16, #tpu.memory_space<vmem>>, %arg4: memref<256x512xbf16, #tpu.memory_space<vmem>>, %arg5: memref<1x512xf32, #tpu.memory_space<vmem>>, %arg6: memref<1x256xf32, #tpu.memory_space<vmem>>, %arg7: memref<1x256xf32, #tpu.memory_space<vmem>>, %arg8: memref<10x512xbf16, #tpu.memory_space<vmem>>, %arg9: memref<10x256xbf16, #tpu.memory_space<vmem>>) attributes {dimension_semantics = [#tpu.dimension_semantics<parallel>, #tpu.dimension_semantics<arbitrary>, #tpu.dimension_semantics<arbitrary>], iteration_bounds = array<i64: 1, 2, 1>, scalar_prefetch = 0 : i64, scratch_operands = 1 : i64, tpu.core_type = #tpu.core_type<tc>, window_params = [{transform_indices = @transform_0, window_bounds = array<i64: 10, 256>}, {transform_indices = @transform_1, window_bounds = array<i64: 256, 512>}, {transform_indices = @transform_2, window_bounds = array<i64: 1, 512>}, {transform_indices = @transform_3, window_bounds = array<i64: 1, 256>}, {transform_indices = @transform_4, window_bounds = array<i64: 1, 256>}, {transform_indices = @transform_5, window_bounds = array<i64: 10, 512>}]} {
    %c0_i32 = arith.constant 0 : i32
    %0 = arith.cmpi eq, %arg1, %c0_i32 : i32
    %1 = arith.extui %0 : i1 to i32
    %c0_i32_0 = arith.constant 0 : i32
    %2 = arith.cmpi ne, %1, %c0_i32_0 : i32
    scf.if %2 {
      %c0_24 = arith.constant 0 : index
      %c0_25 = arith.constant 0 : index
      %52 = vector.load %arg3[%c0_24, %c0_25] : memref<10x256xbf16, #tpu.memory_space<vmem>>, vector<10x256xbf16>
      %53 = arith.extf %52 : vector<10x256xbf16> to vector<10x256xf32>
      %cst_26 = arith.constant dense<0.000000e+00> : vector<10xf32>
      %54 = vector.multi_reduction <add>, %53, %cst_26 [1] : vector<10x256xf32> to vector<10xf32>
      %55 = vector.shape_cast %54 : vector<10xf32> to vector<10x1xf32>
      %cst_27 = arith.constant 2.560000e+02 : f32
      %56 = vector.broadcast %cst_27 : f32 to vector<10x1xf32>
      %57 = arith.divf %55, %56 : vector<10x1xf32>
      %58 = vector.broadcast %57 : vector<10x1xf32> to vector<10x256xf32>
      %59 = arith.subf %53, %58 : vector<10x256xf32>
      %60 = arith.mulf %59, %59 : vector<10x256xf32>
      %cst_28 = arith.constant dense<0.000000e+00> : vector<10xf32>
      %61 = vector.multi_reduction <add>, %60, %cst_28 [1] : vector<10x256xf32> to vector<10xf32>
      %62 = vector.shape_cast %61 : vector<10xf32> to vector<10x1xf32>
      %cst_29 = arith.constant 2.560000e+02 : f32
      %63 = vector.broadcast %cst_29 : f32 to vector<10x1xf32>
      %64 = arith.divf %62, %63 : vector<10x1xf32>
      %cst_30 = arith.constant 9.99999974E-6 : f32
      %65 = vector.broadcast %cst_30 : f32 to vector<10x1xf32>
      %66 = arith.addf %64, %65 : vector<10x1xf32>
      %67 = math.rsqrt %66 : vector<10x1xf32>
      %68 = vector.broadcast %67 : vector<10x1xf32> to vector<10x256xf32>
      %69 = arith.mulf %59, %68 : vector<10x256xf32>
      %c0_31 = arith.constant 0 : index
      %c0_32 = arith.constant 0 : index
      %70 = vector.load %arg6[%c0_31, %c0_32] : memref<1x256xf32, #tpu.memory_space<vmem>>, vector<1x256xf32>
      %71 = vector.broadcast %70 : vector<1x256xf32> to vector<10x256xf32>
      %72 = arith.mulf %69, %71 : vector<10x256xf32>
      %c0_33 = arith.constant 0 : index
      %c0_34 = arith.constant 0 : index
      %73 = vector.load %arg7[%c0_33, %c0_34] : memref<1x256xf32, #tpu.memory_space<vmem>>, vector<1x256xf32>
      %74 = vector.broadcast %73 : vector<1x256xf32> to vector<10x256xf32>
      %75 = arith.addf %72, %74 : vector<10x256xf32>
      %76 = arith.truncf %75 : vector<10x256xf32> to vector<10x256xbf16>
      %c0_35 = arith.constant 0 : index
      %c0_36 = arith.constant 0 : index
      %77 = vector.load %arg9[%c0_35, %c0_36] : memref<10x256xbf16, #tpu.memory_space<vmem>>, vector<10x256xbf16>
      tpu.vector_store %arg9[%c0_35, %c0_36], %76 {strides = array<i32>} : memref<10x256xbf16, #tpu.memory_space<vmem>>, vector<10x256xbf16>,
    } else {
    }
    %c0 = arith.constant 0 : index
    %c0_1 = arith.constant 0 : index
    %3 = vector.load %arg9[%c0, %c0_1] : memref<10x256xbf16, #tpu.memory_space<vmem>>, vector<10x256xbf16>
    %c0_2 = arith.constant 0 : index
    %c0_3 = arith.constant 0 : index
    %4 = vector.load %arg4[%c0_2, %c0_3] : memref<256x512xbf16, #tpu.memory_space<vmem>>, vector<256x512xbf16>
    %cst = arith.constant dense<0.000000e+00> : vector<10x512xf32>
    %5 = tpu.matmul %3, %4, %cst {dimension_numbers = #tpu.dot_dimension_numbers<[1], [0], [0], [1], [0, 0, 1, 1], [], []>} : vector<10x256xbf16>, vector<256x512xbf16>, vector<10x512xf32> -> vector<10x512xf32>
    %c0_4 = arith.constant 0 : index
    %c0_5 = arith.constant 0 : index
    %6 = vector.load %arg5[%c0_4, %c0_5] : memref<1x512xf32, #tpu.memory_space<vmem>>, vector<1x512xf32>
    %7 = vector.broadcast %6 : vector<1x512xf32> to vector<10x512xf32>
    %8 = arith.addf %5, %7 : vector<10x512xf32>
    %cst_6 = arith.constant 5.000000e-01 : f32
    %9 = vector.broadcast %cst_6 : f32 to vector<10x512xf32>
    %10 = arith.mulf %9, %8 : vector<10x512xf32>
    %cst_7 = arith.constant 0.707106769 : f32
    %11 = vector.broadcast %cst_7 : f32 to vector<10x512xf32>
    %12 = arith.mulf %8, %11 : vector<10x512xf32>
    %cst_8 = arith.constant 0.000000e+00 : f32
    %13 = vector.broadcast %cst_8 : f32 to vector<10x512xf32>
    %14 = arith.cmpf oge, %12, %13 : vector<10x512xf32>
    %cst_9 = arith.constant 1.000000e+00 : f32
    %cst_10 = arith.constant -1.000000e+00 : f32
    %15 = vector.broadcast %cst_9 : f32 to vector<10x512xf32>
    %16 = vector.broadcast %cst_10 : f32 to vector<10x512xf32>
    %17 = arith.select %14, %15, %16 : vector<10x512xi1>, vector<10x512xf32>
    %18 = math.absf %12 : vector<10x512xf32>
    %cst_11 = arith.constant 0.327591091 : f32
    %19 = vector.broadcast %cst_11 : f32 to vector<10x512xf32>
    %20 = arith.mulf %19, %18 : vector<10x512xf32>
    %cst_12 = arith.constant 1.000000e+00 : f32
    %21 = vector.broadcast %cst_12 : f32 to vector<10x512xf32>
    %22 = arith.addf %21, %20 : vector<10x512xf32>
    %cst_13 = arith.constant 1.000000e+00 : f32
    %23 = vector.broadcast %cst_13 : f32 to vector<10x512xf32>
    %24 = arith.divf %23, %22 : vector<10x512xf32>
    %cst_14 = arith.constant 1.06140542 : f32
    %25 = vector.broadcast %cst_14 : f32 to vector<10x512xf32>
    %26 = arith.mulf %25, %24 : vector<10x512xf32>
    %cst_15 = arith.constant -1.45315206 : f32
    %27 = vector.broadcast %cst_15 : f32 to vector<10x512xf32>
    %28 = arith.addf %26, %27 : vector<10x512xf32>
    %29 = arith.mulf %28, %24 : vector<10x512xf32>
    %cst_16 = arith.constant 1.42141378 : f32
    %30 = vector.broadcast %cst_16 : f32 to vector<10x512xf32>
    %31 = arith.addf %29, %30 : vector<10x512xf32>
    %32 = arith.mulf %31, %24 : vector<10x512xf32>
    %cst_17 = arith.constant -0.284496725 : f32
    %33 = vector.broadcast %cst_17 : f32 to vector<10x512xf32>
    %34 = arith.addf %32, %33 : vector<10x512xf32>
    %35 = arith.mulf %34, %24 : vector<10x512xf32>
    %cst_18 = arith.constant 0.254829586 : f32
    %36 = vector.broadcast %cst_18 : f32 to vector<10x512xf32>
    %37 = arith.addf %35, %36 : vector<10x512xf32>
    %38 = arith.mulf %37, %24 : vector<10x512xf32>
    %cst_19 = arith.constant 0.000000e+00 : f32
    %39 = vector.broadcast %cst_19 : f32 to vector<10x512xf32>
    %40 = arith.subf %39, %18 : vector<10x512xf32>
    %41 = arith.mulf %40, %18 : vector<10x512xf32>
    %42 = math.exp %41 : vector<10x512xf32>
    %43 = arith.mulf %38, %42 : vector<10x512xf32>
    %cst_20 = arith.constant 1.000000e+00 : f32
    %44 = vector.broadcast %cst_20 : f32 to vector<10x512xf32>
    %45 = arith.subf %44, %43 : vector<10x512xf32>
    %46 = arith.mulf %17, %45 : vector<10x512xf32>
    %cst_21 = arith.constant 1.000000e+00 : f32
    %47 = vector.broadcast %cst_21 : f32 to vector<10x512xf32>
    %48 = arith.addf %47, %46 : vector<10x512xf32>
    %49 = arith.mulf %10, %48 : vector<10x512xf32>
    %50 = arith.truncf %49 : vector<10x512xf32> to vector<10x512xbf16>
    %c0_22 = arith.constant 0 : index
    %c0_23 = arith.constant 0 : index
    %51 = vector.load %arg8[%c0_22, %c0_23] : memref<10x512xbf16, #tpu.memory_space<vmem>>, vector<10x512xbf16>
    tpu.vector_store %arg8[%c0_22, %c0_23], %50 {strides = array<i32>} : memref<10x512xbf16, #tpu.memory_space<vmem>>, vector<10x512xbf16>,
    return
  }
  func.func @transform_0(%arg0: i32, %arg1: i32, %arg2: i32) -> (i32, i32) {
    %c0_i32 = arith.constant 0 : i32
    return %arg0, %arg2 : i32, i32
  }
  func.func @transform_1(%arg0: i32, %arg1: i32, %arg2: i32) -> (i32, i32) {
    %c0_i32 = arith.constant 0 : i32
    return %arg2, %arg1 : i32, i32
  }
  func.func @transform_2(%arg0: i32, %arg1: i32, %arg2: i32) -> (i32, i32) {
    %c0_i32 = arith.constant 0 : i32
    %c0_i32_0 = arith.constant 0 : i32
    return %c0_i32, %arg1 : i32, i32
  }
  func.func @transform_3(%arg0: i32, %arg1: i32, %arg2: i32) -> (i32, i32) {
    %c0_i32 = arith.constant 0 : i32
    %c0_i32_0 = arith.constant 0 : i32
    return %c0_i32, %arg2 : i32, i32
  }
  func.func @transform_4(%arg0: i32, %arg1: i32, %arg2: i32) -> (i32, i32) {
    %c0_i32 = arith.constant 0 : i32
    %c0_i32_0 = arith.constant 0 : i32
    return %c0_i32, %arg2 : i32, i32
  }
  func.func @transform_5(%arg0: i32, %arg1: i32, %arg2: i32) -> (i32, i32) {
    %c0_i32 = arith.constant 0 : i32
    return %arg0, %arg1 : i32, i32
  }
}

module attributes {stable_mosaic.version = 11 : i64} {
  func.func @_fused_matmul_kernel(%arg0: i32, %arg1: i32, %arg2: i32, %arg3: memref<2x256xbf16, #tpu.memory_space<vmem>>, %arg4: memref<256x128xbf16, #tpu.memory_space<vmem>>, %arg5: memref<1x256xf32, #tpu.memory_space<vmem>>, %arg6: memref<1x256xf32, #tpu.memory_space<vmem>>, %arg7: memref<2x128xf32, #tpu.memory_space<vmem>>) attributes {dimension_semantics = [#tpu.dimension_semantics<parallel>, #tpu.dimension_semantics<parallel>, #tpu.dimension_semantics<arbitrary>], iteration_bounds = array<i64: 1, 1, 1>, scalar_prefetch = 0 : i64, scratch_operands = 0 : i64, tpu.core_type = #tpu.core_type<tc>, window_params = [{transform_indices = @transform_0, window_bounds = array<i64: 2, 256>}, {transform_indices = @transform_1, window_bounds = array<i64: 256, 128>}, {transform_indices = @transform_2, window_bounds = array<i64: 1, 256>}, {transform_indices = @transform_3, window_bounds = array<i64: 1, 256>}, {transform_indices = @transform_4, window_bounds = array<i64: 2, 128>}]} {
    %c0 = arith.constant 0 : index
    %c0_0 = arith.constant 0 : index
    %0 = vector.load %arg3[%c0, %c0_0] : memref<2x256xbf16, #tpu.memory_space<vmem>>, vector<2x256xbf16>
    %1 = arith.extf %0 : vector<2x256xbf16> to vector<2x256xf32>
    %cst = arith.constant dense<0.000000e+00> : vector<2xf32>
    %2 = vector.multi_reduction <add>, %1, %cst [1] : vector<2x256xf32> to vector<2xf32>
    %3 = vector.shape_cast %2 : vector<2xf32> to vector<2x1xf32>
    %cst_1 = arith.constant 2.560000e+02 : f32
    %4 = vector.broadcast %cst_1 : f32 to vector<2x1xf32>
    %5 = arith.divf %3, %4 : vector<2x1xf32>
    %6 = vector.broadcast %5 : vector<2x1xf32> to vector<2x256xf32>
    %7 = arith.subf %1, %6 : vector<2x256xf32>
    %8 = arith.mulf %7, %7 : vector<2x256xf32>
    %cst_2 = arith.constant dense<0.000000e+00> : vector<2xf32>
    %9 = vector.multi_reduction <add>, %8, %cst_2 [1] : vector<2x256xf32> to vector<2xf32>
    %10 = vector.shape_cast %9 : vector<2xf32> to vector<2x1xf32>
    %cst_3 = arith.constant 2.560000e+02 : f32
    %11 = vector.broadcast %cst_3 : f32 to vector<2x1xf32>
    %12 = arith.divf %10, %11 : vector<2x1xf32>
    %cst_4 = arith.constant 9.99999974E-6 : f32
    %13 = vector.broadcast %cst_4 : f32 to vector<2x1xf32>
    %14 = arith.addf %12, %13 : vector<2x1xf32>
    %15 = math.rsqrt %14 : vector<2x1xf32>
    %16 = vector.broadcast %15 : vector<2x1xf32> to vector<2x256xf32>
    %17 = arith.mulf %7, %16 : vector<2x256xf32>
    %c0_5 = arith.constant 0 : index
    %c0_6 = arith.constant 0 : index
    %18 = vector.load %arg5[%c0_5, %c0_6] : memref<1x256xf32, #tpu.memory_space<vmem>>, vector<1x256xf32>
    %19 = vector.broadcast %18 : vector<1x256xf32> to vector<2x256xf32>
    %20 = arith.mulf %17, %19 : vector<2x256xf32>
    %c0_7 = arith.constant 0 : index
    %c0_8 = arith.constant 0 : index
    %21 = vector.load %arg6[%c0_7, %c0_8] : memref<1x256xf32, #tpu.memory_space<vmem>>, vector<1x256xf32>
    %22 = vector.broadcast %21 : vector<1x256xf32> to vector<2x256xf32>
    %23 = arith.addf %20, %22 : vector<2x256xf32>
    %24 = arith.truncf %23 : vector<2x256xf32> to vector<2x256xbf16>
    %c0_9 = arith.constant 0 : index
    %c0_10 = arith.constant 0 : index
    %25 = vector.load %arg4[%c0_9, %c0_10] : memref<256x128xbf16, #tpu.memory_space<vmem>>, vector<256x128xbf16>
    %cst_11 = arith.constant dense<0.000000e+00> : vector<2x128xf32>
    %26 = tpu.matmul %24, %25, %cst_11 {dimension_numbers = #tpu.dot_dimension_numbers<[1], [0], [0], [1], [0, 0, 1, 1], [], []>} : vector<2x256xbf16>, vector<256x128xbf16>, vector<2x128xf32> -> vector<2x128xf32>
    %c0_12 = arith.constant 0 : index
    %c0_13 = arith.constant 0 : index
    %27 = vector.load %arg7[%c0_12, %c0_13] : memref<2x128xf32, #tpu.memory_space<vmem>>, vector<2x128xf32>
    tpu.vector_store %arg7[%c0_12, %c0_13], %26 {strides = array<i32>} : memref<2x128xf32, #tpu.memory_space<vmem>>, vector<2x128xf32>,
    return
  }
  func.func @transform_0(%arg0: i32, %arg1: i32, %arg2: i32) -> (i32, i32) {
    %c0_i32 = arith.constant 0 : i32
    return %arg0, %arg2 : i32, i32
  }
  func.func @transform_1(%arg0: i32, %arg1: i32, %arg2: i32) -> (i32, i32) {
    %c0_i32 = arith.constant 0 : i32
    return %arg2, %arg1 : i32, i32
  }
  func.func @transform_2(%arg0: i32, %arg1: i32, %arg2: i32) -> (i32, i32) {
    %c0_i32 = arith.constant 0 : i32
    %c0_i32_0 = arith.constant 0 : i32
    return %c0_i32, %arg2 : i32, i32
  }
  func.func @transform_3(%arg0: i32, %arg1: i32, %arg2: i32) -> (i32, i32) {
    %c0_i32 = arith.constant 0 : i32
    %c0_i32_0 = arith.constant 0 : i32
    return %c0_i32, %arg2 : i32, i32
  }
  func.func @transform_4(%arg0: i32, %arg1: i32, %arg2: i32) -> (i32, i32) {
    %c0_i32 = arith.constant 0 : i32
    return %arg0, %arg1 : i32, i32
  }
}

</mosaic_0001>

<llo_original>
// kernel: encode_image.12
$region0: #{encode_image.12}
  #allocation0 [shape = 'u32[]', space=smem, size = 0x4, offset = 0x4, fixed_abs, tag = 'smem constant byte address 0x4 - core index']
  #allocation1 [shape = 'u32[144,128]{1,0:T(1,128)}', space=vmem, size = 0x12000, scoped, tag = 'internal scratch']
  %s0 = inlined_call_operand.vmem [shape: bf16[2,4,256], index: 0, kind: input, shape index: {}]
  %s1 = inlined_call_operand.hbm [shape: f32[1,256], index: 1, kind: input, shape index: {}]
  %s2 = inlined_call_operand.vmem [shape: f32[5,256], index: 2, kind: input, shape index: {}]
  %s3 = inlined_call_operand.hbm [shape: f32[1,256], index: 3, kind: input, shape index: {}]
  %s4 = inlined_call_operand.hbm [shape: f32[1,256], index: 4, kind: input, shape index: {}]
  %s5 = inlined_call_operand.vmem [shape: bf16[2,5,256], index: 5, kind: output, shape index: {}]
  %s6 = sld [smem:[#allocation0]]
  $region65: #{encode_image.12} parent=0
    _
  %s8 = ssub.s32 1, %s6
  %s9 = scalar_select 0, %s8, %s6
  $region1: #{encode_image.12} parent=0
    #allocation2 [shape = 'u8[1024]{0}', space=vmem, size = 0x400, scoped, tag = 'input window, operand 1, single buffered']
    #allocation3 [shape = 's32[2]{0}', space=sflag, size = 0x8, scoped, tag = 'scoped memory for encode_image.12']
    #allocation4 [shape = 'u8[1024]{0}', space=vmem, size = 0x400, scoped, tag = 'input window, operand 3, single buffered']
    #allocation5 [shape = 's32[1]{0}', space=sflag, size = 0x4, scoped, tag = 'scoped memory for encode_image.12']
    #allocation6 [shape = 'u8[1024]{0}', space=vmem, size = 0x400, scoped, tag = 'input window, operand 4, single buffered']
    %10 = vsyncpa [#allocation3], 0
    %11 = vsyncpa [#allocation5], 0
    loop: start=0, step=1, limit=4
    $region2: #{encode_image.12} parent=1 // loop_pre_header
      _
    $region3: #{encode_image.12} parent=1 // loop_header
      %s13 = sphi 0, %s17
      %p14 = scmp.ge.s32.totalorder %s13, 4
      %s23 = sphi 0, %s25
      %s26 = sphi 0, %s23
      %s27 = sphi 0, %s26
      %s43 = sphi 0, %s27
      %s47 = sphi 0, %s47
      %s49 = sphi 0, %s47
      %s50 = sphi 0, %s49
      %s64 = sphi 0, %s50
      %s68 = sphi 0, %s68
      %s70 = sphi 0, %s68
      %s71 = sphi 0, %s70
      %s85 = sphi 0, %s71
      %s89 = sphi 0, %s89
      %s91 = sphi 0, %s89
      %s92 = sphi 0, %s91
      %s106 = sphi 0, %s92
      %s110 = sphi 0, %s110
      %s112 = sphi 0, %s110
      %s113 = sphi 0, %s112
      %s127 = sphi 0, %s113
      %s133 = sphi 0, %s135
      %s136 = sphi 0, %s133
      %s137 = sphi 0, %s136
      %s153 = sphi 0, %s137
    $region4: #{encode_image.12} parent=1 // loop_header_branch
      %16 = sbr.rel (%p14) target = $region8
    $region5: #{encode_image.12} parent=1 // loop_body
      %s18 = ssub.s32 %s13, 1
      %s19 = ssub.s32 %s13, 2
      %s20 = sadd.s32 %s13, 1
      %s21 = ssub.s32 %s13, %s20
      %p22 = scmp.eq.s32.totalorder %s21, 0
      %s24 = sadd.s32 %s23, 1
      %s25 = scalar_select %p22, %s23, %s24
      %p28 = pneg %p22
      %p29 = scmp.eq.s32.totalorder %s13, 1
      %p30 = por %p28, %p29
      %p31 = scmp.ne.s32.totalorder %s23, %s26
      %p32 = scmp.eq.s32.totalorder %s13, 0
      %p33 = por %p31, %p32
      %p34 = scmp.ne.s32.totalorder %s23, %s26
      %p35 = scmp.eq.s32.totalorder %s18, 1
      %p36 = por %p34, %p35
      %p37 = scmp.ne.s32.totalorder %s26, %s27
      %p38 = scmp.eq.s32.totalorder %s18, 0
      %p39 = por %p37, %p38
      %p40 = scmp.ne.s32.totalorder %s26, %s27
      %p41 = scmp.eq.s32.totalorder %s19, 1
      %p42 = por %p40, %p41
      %p44 = scmp.ne.s32.totalorder %s27, %s43
      %p45 = scmp.eq.s32.totalorder %s19, 0
      %p46 = por %p44, %p45
      %s48 = sadd.s32 %s47, 1
      %p51 = scmp.eq.s32.totalorder %s13, 1
      %p52 = scmp.ne.s32.totalorder %s47, %s49
      %p53 = scmp.eq.s32.totalorder %s13, 0
      %p54 = por %p52, %p53
      %p55 = scmp.ne.s32.totalorder %s47, %s49
      %p56 = scmp.eq.s32.totalorder %s18, 1
      %p57 = por %p55, %p56
      %p58 = scmp.ne.s32.totalorder %s49, %s50
      %p59 = scmp.eq.s32.totalorder %s18, 0
      %p60 = por %p58, %p59
      %p61 = scmp.ne.s32.totalorder %s49, %s50
      %p62 = scmp.eq.s32.totalorder %s19, 1
      %p63 = por %p61, %p62
      %p65 = scmp.ne.s32.totalorder %s50, %s64
      %p66 = scmp.eq.s32.totalorder %s19, 0
      %p67 = por %p65, %p66
      %s69 = sadd.s32 %s68, 1
      %p72 = scmp.eq.s32.totalorder %s13, 1
      %p73 = scmp.ne.s32.totalorder %s68, %s70
      %p74 = scmp.eq.s32.totalorder %s13, 0
      %p75 = por %p73, %p74
      %p76 = scmp.ne.s32.totalorder %s68, %s70
      %p77 = scmp.eq.s32.totalorder %s18, 1
      %p78 = por %p76, %p77
      %p79 = scmp.ne.s32.totalorder %s70, %s71
      %p80 = scmp.eq.s32.totalorder %s18, 0
      %p81 = por %p79, %p80
      %p82 = scmp.ne.s32.totalorder %s70, %s71
      %p83 = scmp.eq.s32.totalorder %s19, 1
      %p84 = por %p82, %p83
      %p86 = scmp.ne.s32.totalorder %s71, %s85
      %p87 = scmp.eq.s32.totalorder %s19, 0
      %p88 = por %p86, %p87
      %s90 = sadd.s32 %s89, 1
      %p93 = scmp.eq.s32.totalorder %s13, 1
      %p94 = scmp.ne.s32.totalorder %s89, %s91
      %p95 = scmp.eq.s32.totalorder %s13, 0
      %p96 = por %p94, %p95
      %p97 = scmp.ne.s32.totalorder %s89, %s91
      %p98 = scmp.eq.s32.totalorder %s18, 1
      %p99 = por %p97, %p98
      %p100 = scmp.ne.s32.totalorder %s91, %s92
      %p101 = scmp.eq.s32.totalorder %s18, 0
      %p102 = por %p100, %p101
      %p103 = scmp.ne.s32.totalorder %s91, %s92
      %p104 = scmp.eq.s32.totalorder %s19, 1
      %p105 = por %p103, %p104
      %p107 = scmp.ne.s32.totalorder %s92, %s106
      %p108 = scmp.eq.s32.totalorder %s19, 0
      %p109 = por %p107, %p108
      %s111 = sadd.s32 %s110, 1
      %p114 = scmp.eq.s32.totalorder %s13, 1
      %p115 = scmp.ne.s32.totalorder %s110, %s112
      %p116 = scmp.eq.s32.totalorder %s13, 0
      %p117 = por %p115, %p116
      %p118 = scmp.ne.s32.totalorder %s110, %s112
      %p119 = scmp.eq.s32.totalorder %s18, 1
      %p120 = por %p118, %p119
      %p121 = scmp.ne.s32.totalorder %s112, %s113
      %p122 = scmp.eq.s32.totalorder %s18, 0
      %p123 = por %p121, %p122
      %p124 = scmp.ne.s32.totalorder %s112, %s113
      %p125 = scmp.eq.s32.totalorder %s19, 1
      %p126 = por %p124, %p125
      %p128 = scmp.ne.s32.totalorder %s113, %s127
      %p129 = scmp.eq.s32.totalorder %s19, 0
      %p130 = por %p128, %p129
      %s131 = ssub.s32 %s13, %s20
      %p132 = scmp.eq.s32.totalorder %s131, 0
      %s134 = sadd.s32 %s133, 1
      %s135 = scalar_select %p132, %s133, %s134
      %p138 = pneg %p132
      %p139 = scmp.eq.s32.totalorder %s13, 1
      %p140 = por %p138, %p139
      %p141 = scmp.ne.s32.totalorder %s133, %s136
      %p142 = scmp.eq.s32.totalorder %s13, 0
      %p143 = por %p141, %p142
      %p144 = scmp.ne.s32.totalorder %s133, %s136
      %p145 = scmp.eq.s32.totalorder %s18, 1
      %p146 = por %p144, %p145
      %p147 = scmp.ne.s32.totalorder %s136, %s137
      %p148 = scmp.eq.s32.totalorder %s18, 0
      %p149 = por %p147, %p148
      %p150 = scmp.ne.s32.totalorder %s136, %s137
      %p151 = scmp.eq.s32.totalorder %s19, 1
      %p152 = por %p150, %p151
      %p154 = scmp.ne.s32.totalorder %s137, %s153
      %p155 = scmp.eq.s32.totalorder %s19, 0
      %p156 = por %p154, %p155
      %p157 = scmp.le.s32.totalorder 1, %s13
      %p158 = scmp.lt.s32.totalorder %s13, 3
      %p159 = pnand %p157, %p158
      %p160 = pneg %p159
      // Predicated region
      $region9: #{encode_image.12} parent=5 // pred_check
        _
      $region10: #{encode_image.12} parent=5 // pred_check_branch
        %162 = sbr.rel (%p159) target = $region12
      $region11: #{encode_image.12} parent=5 // pred_region
        %s163 = ssub.s32 %s13, 1
        // Predicated region
        $region13: #{encode_image.12} parent=11 // pred_check
          %p164 = pneg %p60
        $region14: #{encode_image.12} parent=11 // pred_check_branch
          %166 = sbr.rel (%p164) target = $region16
        $region15: #{encode_image.12} parent=11 // pred_region
          %s168 = ssub.s32 32, 32
          %169 = vsyncadd [#allocation3], %s168
          %s171 = sshll.u32 [#allocation2], 4
          %s172 = int_to_ptr.vmem [resolvable:$true] %s171
          %174 = dma.hbm_to_vmem [thread:$0]  %s1, 32, %s172, [#allocation3]
        $region16: #{encode_image.12} parent=11 // pred_fallthru
          _
        // Predicated region
        $region17: #{encode_image.12} parent=11 // pred_check
          %p175 = pneg %p81
        $region18: #{encode_image.12} parent=11 // pred_check_branch
          %177 = sbr.rel (%p175) target = $region20
        $region19: #{encode_image.12} parent=11 // pred_region
          _
        $region20: #{encode_image.12} parent=11 // pred_fallthru
          _
        // Predicated region
        $region21: #{encode_image.12} parent=11 // pred_check
          %p178 = pneg %p102
        $region22: #{encode_image.12} parent=11 // pred_check_branch
          %180 = sbr.rel (%p178) target = $region24
        $region23: #{encode_image.12} parent=11 // pred_region
          %s182 = ssub.s32 32, 32
          %183 = vsyncadd [#allocation5], %s182
          %s185 = sshll.u32 [#allocation4], 4
          %s186 = int_to_ptr.vmem [resolvable:$true] %s185
          %188 = dma.hbm_to_vmem [thread:$0]  %s3, 32, %s186, [#allocation5]
        $region24: #{encode_image.12} parent=11 // pred_fallthru
          _
        // Predicated region
        $region25: #{encode_image.12} parent=11 // pred_check
          %p189 = pneg %p123
        $region26: #{encode_image.12} parent=11 // pred_check_branch
          %191 = sbr.rel (%p189) target = $region28
        $region27: #{encode_image.12} parent=11 // pred_region
          %s193 = ssub.s32 32, 32
          %194 = vsyncadd [#allocation5], %s193
          %s196 = sshll.u32 [#allocation6], 4
          %s197 = int_to_ptr.vmem [resolvable:$true] %s196
          %199 = dma.hbm_to_vmem [thread:$0]  %s4, 32, %s197, [#allocation5]
        $region28: #{encode_image.12} parent=11 // pred_fallthru
          _
      $region12: #{encode_image.12} parent=5 // pred_fallthru
        _
      %p200 = scmp.lt.s32.totalorder %s13, 2
      // Predicated region
      $region29: #{encode_image.12} parent=5 // pred_check
        %p201 = pneg %p200
      $region30: #{encode_image.12} parent=5 // pred_check_branch
        %203 = sbr.rel (%p201) target = $region32
      $region31: #{encode_image.12} parent=5 // pred_region
        // Predicated region
        $region33: #{encode_image.12} parent=31 // pred_check
          %p204 = pneg %p33
        $region34: #{encode_image.12} parent=31 // pred_check_branch
          %206 = sbr.rel (%p204) target = $region36
        $region35: #{encode_image.12} parent=31 // pred_region
          %p207 = scmp.lt.s32.totalorder %s13, 1
          %s208 = scalar_select %p207, %s13, 1
          %s209 = smul.addr %s208, 2
          %s210 = smul.addr %s209, 2
          %s211 = scalar_lea.vmem %s0, %s210
        $region36: #{encode_image.12} parent=31 // pred_fallthru
          _
      $region32: #{encode_image.12} parent=5 // pred_fallthru
        _
      %p212 = scmp.le.s32.totalorder 1, %s13
      %p213 = scmp.lt.s32.totalorder %s13, 3
      %p214 = pnand %p212, %p213
      %p215 = pneg %p214
      // Predicated region
      $region37: #{encode_image.12} parent=5 // pred_check
        _
      $region38: #{encode_image.12} parent=5 // pred_check_branch
        %217 = sbr.rel (%p214) target = $region40
      $region39: #{encode_image.12} parent=5 // pred_region
        %s218 = ssub.s32 %s13, 1
        // Predicated region
        $region41: #{encode_image.12} parent=39 // pred_check
          %p219 = pneg %p60
        $region42: #{encode_image.12} parent=39 // pred_check_branch
          %221 = sbr.rel (%p219) target = $region44
        $region43: #{encode_image.12} parent=39 // pred_region
          %222 = dma.done [#allocation3], 32
        $region44: #{encode_image.12} parent=39 // pred_fallthru
          _
        // Predicated region
        $region45: #{encode_image.12} parent=39 // pred_check
          %p223 = pneg %p102
        $region46: #{encode_image.12} parent=39 // pred_check_branch
          %225 = sbr.rel (%p223) target = $region48
        $region47: #{encode_image.12} parent=39 // pred_region
          %226 = dma.done [#allocation5], 32
        $region48: #{encode_image.12} parent=39 // pred_fallthru
          _
        // Predicated region
        $region49: #{encode_image.12} parent=39 // pred_check
          %p227 = pneg %p123
        $region50: #{encode_image.12} parent=39 // pred_check_branch
          %229 = sbr.rel (%p227) target = $region52
        $region51: #{encode_image.12} parent=39 // pred_region
          %230 = dma.done [#allocation5], 32
        $region52: #{encode_image.12} parent=39 // pred_fallthru
          _
        %p231 = scmp.lt.s32.totalorder %s18, 1
        %s232 = scalar_select %p231, %s18, 1
        %s233 = smul.addr %s232, 2
        %s234 = smul.addr %s233, 2
        %s235 = scalar_lea.vmem %s0, %s234
        %p236 = pneg %p39
        %p237 = pneg %p36
        %p238 = pneg %p60
        %p239 = pneg %p57
        %p240 = pneg %p81
        %p241 = pneg %p78
        %p242 = pneg %p102
        %p243 = pneg %p99
        %p244 = pneg %p123
        %p245 = pneg %p120
        %p246 = pneg %p149
        %p247 = pneg %p146
        %p248 = scmp.lt.s32.totalorder %s18, 1
        %s249 = scalar_select %p248, %s18, 1
        %s250 = smul.addr %s249, 2
        %s251 = smul.addr %s250, 4
        %s252 = scalar_lea.vmem %s5, %s251
        %p253 = scmp.lt.s32.totalorder %s18, 1
        %s254 = scalar_select %p253, %s18, 1
        %s255 = smul.addr %s254, 2
        %s256 = smul.addr %s255, 2
        %s257 = scalar_lea.vmem %s0, %s256
        %p258 = scmp.lt.s32.totalorder %s18, 1
        %s259 = scalar_select %p258, %s18, 1
        %s260 = smul.addr %s259, 2
        %s261 = smul.addr %s260, 4
        %s262 = scalar_lea.vmem %s5, %s261
        %v263 = vld [vmem:[#allocation2] sm:$0x3]
        %v264 = vld [vmem:[%s257] sm:$0xf]
        %v265 = vunpack.c.l.bf16 %v264
        %v267 = vlaneseq
        %v268 = vshrl.u32 %v267, 7
        %v269 = vsub.s32 0, %v268
        %v270 = vrot.slane %v263, %v269
        %v271 = vlaneseq
        %v272 = vshrl.u32 %v271, 7
        %v273 = vsub.s32 1, %v272
        %v274 = vrot.slane %v263, %v273
        %v278 = vcombine.high %v265, %v265
        %v279 = vrot.slane %v265, 7
        %v280 = vrot.slane %v278, 7
        %vm283 = vcmask 1040384
        %v284 = vsel %vm283, %v270, %v279
        %v285 = vsel %vm283, %v274, %v280
        %v286 = vld [vmem:[%s2] sm:$0x1f]
        %v287 = vld [vmem:[%s2 + $0x8] sm:$0x1f]
        %v288 = vadd.f32 %v284, %v286
        %v289 = vadd.f32 %v285, %v287
        %vm290 = vcmask 1044480
        %v291 = vsel %vm290, %v288, 0.0
        %v292 = vsel %vm290, %v289, 0.0
        %v293 = vadd.f32 %v291, %v292
        %294 = vadd.xlane.f32.xlu0 %v293
        %v295 = vpop.xlane.xlu0 %294
        %v296 = vrcp.pop 256.0
        %v297 = vmul.f32 %v295, %v296
        %v298 = vsub.f32 %v288, %v297
        %v299 = vsub.f32 %v289, %v297
        %v300 = vmul.f32 %v298, %v298
        %v301 = vmul.f32 %v299, %v299
        %v302 = vsel %vm290, %v300, 0.0
        %v303 = vsel %vm290, %v301, 0.0
        %v304 = vadd.f32 %v302, %v303
        %305 = vadd.xlane.f32.xlu0 %v304
        %v306 = vpop.xlane.xlu0 %305
        %v307 = vmul.f32 %v306, %v296
        %v308 = vadd.f32 %v307, 1e-05
        %v309 = vrsqrt.pop %v308
        %v310 = vmul.f32 %v298, %v309
        %v311 = vmul.f32 %v299, %v309
        %v312 = vld [vmem:[#allocation4] sm:$0x3]
        %v314 = vlaneseq
        %v315 = vshrl.u32 %v314, 7
        %v316 = vsub.s32 0, %v315
        %v317 = vrot.slane %v312, %v316
        %v318 = vlaneseq
        %v319 = vshrl.u32 %v318, 7
        %v320 = vsub.s32 1, %v319
        %v321 = vrot.slane %v312, %v320
        %v324 = vmul.f32 %v310, %v317
        %v325 = vmul.f32 %v311, %v321
        %v326 = vld [vmem:[#allocation6] sm:$0x3]
        %v328 = vlaneseq
        %v329 = vshrl.u32 %v328, 7
        %v330 = vsub.s32 0, %v329
        %v331 = vrot.slane %v326, %v330
        %v332 = vlaneseq
        %v333 = vshrl.u32 %v332, 7
        %v334 = vsub.s32 1, %v333
        %v335 = vrot.slane %v326, %v334
        %v338 = vadd.f32 %v324, %v331
        %v339 = vadd.f32 %v325, %v335
        %v340 = vpack.c.bf16 %v338, %v338
        %v341 = vpack.c.bf16 %v339, %v339
        %v344 = vunpack.c.l.b16 %v340
        %v345 = vunpack.c.l.b16 %v341
        %v346 = vpack.c.b16 %v345, %v344
        %vm348 = vcmask 1042432
        %vm349 = vsmask.f32 2304
        %vm350 = vmand %vm348, %vm349
        %vm351 = vcmask 1046532
        %vm352 = vsmask.f32 6400
        %vm353 = vmand %vm351, %vm352
        %vm354 = vmor %vm353, %vm350
        %v355 = vld [vmem:[%s262] sm:$0x77]
        %v356 = vsel %vm354, %v346, %v355
        %357 = vst [vmem:[%s262] sm:$0x77] %v356
        %p358 = scmp.lt.s32.totalorder %s18, 1
        %s359 = scalar_select %p358, %s18, 1
        %s360 = smul.addr %s359, 2
        %s361 = smul.addr %s360, 4
        %s362 = scalar_lea.vmem %s5, %s361
        // Predicated region
        $region53: #{encode_image.12} parent=39 // pred_check
          %p363 = pneg %p146
        $region54: #{encode_image.12} parent=39 // pred_check_branch
          %365 = sbr.rel (%p363) target = $region56
        $region55: #{encode_image.12} parent=39 // pred_region
          _
        $region56: #{encode_image.12} parent=39 // pred_fallthru
          _
      $region40: #{encode_image.12} parent=5 // pred_fallthru
        _
      %p366 = scmp.le.s32.totalorder 2, %s13
      // Predicated region
      $region57: #{encode_image.12} parent=5 // pred_check
        %p367 = pneg %p366
      $region58: #{encode_image.12} parent=5 // pred_check_branch
        %369 = sbr.rel (%p367) target = $region60
      $region59: #{encode_image.12} parent=5 // pred_region
        %s370 = ssub.s32 %s13, 2
        // Predicated region
        $region61: #{encode_image.12} parent=59 // pred_check
          %p371 = pneg %p152
        $region62: #{encode_image.12} parent=59 // pred_check_branch
          %373 = sbr.rel (%p371) target = $region64
        $region63: #{encode_image.12} parent=59 // pred_region
          %p374 = scmp.lt.s32.totalorder %s19, 1
          %s375 = scalar_select %p374, %s19, 1
          %s376 = smul.addr %s375, 2
          %s377 = smul.addr %s376, 4
          %s378 = scalar_lea.vmem %s5, %s377
        $region64: #{encode_image.12} parent=59 // pred_fallthru
          _
      $region60: #{encode_image.12} parent=5 // pred_fallthru
        _
    $region6: #{encode_image.12} parent=1 // loop_footer
      %s17 = sadd.s32 1, %s13
    $region7: #{encode_image.12} parent=1 // loop_footer_branch
      %12 = sbr.rel target = $region3
    $region8: #{encode_image.12} parent=1 // loop_exit
      _
    %379 = vsyncpa [#allocation3], 1
    %s380 = scalar_lea.sflag [#allocation3], 1
    %381 = vsyncpa %s380, 1
    %382 = vsyncpa [#allocation5], 1

// kernel: encode_image.11
$region0: #{encode_image.11}
  #allocation0 [shape = 'u32[]', space=smem, size = 0x4, offset = 0x4, fixed_abs, tag = 'smem constant byte address 0x4 - core index']
  #allocation1 [shape = 'u32[144,128]{1,0:T(1,128)}', space=vmem, size = 0x12000, scoped, tag = 'internal scratch']
  %s0 = inlined_call_operand.hbm [shape: bf16[8,192], index: 0, kind: input, shape index: {}]
  %s1 = inlined_call_operand.hbm [shape: bf16[192,256], index: 1, kind: input, shape index: {}]
  %s2 = inlined_call_operand.hbm [shape: bf16[8,256], index: 2, kind: output, shape index: {}]
  %s3 = sld [smem:[#allocation0]]
  $region26: #{encode_image.11} parent=0
    _
  %s5 = ssub.s32 1, %s3
  %s6 = scalar_select 0, %s5, %s3
  $region1: #{encode_image.11} parent=0
    #allocation2 [shape = 'u8[4096]{0}', space=vmem, size = 0x1000, scoped, tag = 'input window, operand 0, single buffered']
    #allocation3 [shape = 's32[1]{0}', space=sflag, size = 0x4, scoped, tag = 'scoped memory for encode_image.11']
    #allocation4 [shape = 's32[1]{0}', space=sflag, size = 0x4, scoped, tag = 'scoped memory for encode_image.11']
    #allocation5 [shape = 'u8[98304]{0}', space=vmem, size = 0x18000, scoped, tag = 'input window, operand 1, single buffered']
    #allocation6 [shape = 's32[1]{0}', space=sflag, size = 0x4, scoped, tag = 'scoped memory for encode_image.11']
    #allocation7 [shape = 'u8[4096]{0}', space=vmem, size = 0x1000, scoped, tag = 'output window, operand 0, single buffered']
    %7 = vsyncpa [#allocation3], 0
    %8 = vsyncpa [#allocation6], 0
    %9 = vsyncpa [#allocation4], 0
    // Predicated region
    $region2: #{encode_image.11} parent=1 // pred_check
      _
    $region3: #{encode_image.11} parent=1 // pred_check_branch
      %11 = sbr.rel (0) target = $region5
    $region4: #{encode_image.11} parent=1 // pred_region
      %s13 = ssub.s32 128, 128
      %14 = vsyncadd [#allocation3], %s13
      %s16 = sshll.u32 [#allocation2], 4
      %s17 = int_to_ptr.vmem [resolvable:$true] %s16
      %19 = dma.hbm_to_vmem [thread:$0]  %s0, 128, %s17, [#allocation3]
    $region5: #{encode_image.11} parent=1 // pred_fallthru
      _
    // Predicated region
    $region6: #{encode_image.11} parent=1 // pred_check
      _
    $region7: #{encode_image.11} parent=1 // pred_check_branch
      %21 = sbr.rel (0) target = $region9
    $region8: #{encode_image.11} parent=1 // pred_region
      %s23 = ssub.s32 3072, 3072
      %24 = vsyncadd [#allocation6], %s23
      %s25 = sshll.u32 [#allocation5], 4
      %s26 = int_to_ptr.vmem [resolvable:$true] %s25
      %31 = dma.hbm_to_vmem [thread:$0]  %s1, 3072, %s26, [#allocation6], 128, 128, 8
    $region9: #{encode_image.11} parent=1 // pred_fallthru
      _
    // Predicated region
    $region10: #{encode_image.11} parent=1 // pred_check
      _
    $region11: #{encode_image.11} parent=1 // pred_check_branch
      %33 = sbr.rel (0) target = $region13
    $region12: #{encode_image.11} parent=1 // pred_region
      %34 = dma.done [#allocation3], 128
    $region13: #{encode_image.11} parent=1 // pred_fallthru
      _
    // Predicated region
    $region14: #{encode_image.11} parent=1 // pred_check
      _
    $region15: #{encode_image.11} parent=1 // pred_check_branch
      %36 = sbr.rel (0) target = $region17
    $region16: #{encode_image.11} parent=1 // pred_region
      %37 = dma.done [#allocation6], 3072
    $region17: #{encode_image.11} parent=1 // pred_fallthru
      _
    %v39 = vld [vmem:[#allocation2] sm:$0xff]
    %v40 = vld [vmem:[#allocation5] sm:$0xff]
    %v41 = vld [vmem:[#allocation5 + $0x8] sm:$0xff]
    %v42 = vld [vmem:[#allocation5 + $0x10] sm:$0xff]
    %v43 = vld [vmem:[#allocation5 + $0x18] sm:$0xff]
    %v44 = vld [vmem:[#allocation5 + $0x20] sm:$0xff]
    %v45 = vld [vmem:[#allocation5 + $0x28] sm:$0xff]
    %v46 = vld [vmem:[#allocation5 + $0x30] sm:$0xff]
    %v47 = vld [vmem:[#allocation5 + $0x38] sm:$0xff]
    %v48 = vld [vmem:[#allocation5 + $0x40] sm:$0xff]
    %v49 = vld [vmem:[#allocation5 + $0x48] sm:$0xff]
    %v50 = vld [vmem:[#allocation5 + $0x50] sm:$0xff]
    %v51 = vld [vmem:[#allocation5 + $0x58] sm:$0xff]
    %v52 = vld [vmem:[#allocation5 + $0x60] sm:$0xff]
    %v53 = vld [vmem:[#allocation5 + $0x68] sm:$0xff]
    %v54 = vld [vmem:[#allocation5 + $0x70] sm:$0xff]
    %v55 = vld [vmem:[#allocation5 + $0x78] sm:$0xff]
    %v56 = vld [vmem:[#allocation5 + $0x80] sm:$0xff]
    %v57 = vld [vmem:[#allocation5 + $0x88] sm:$0xff]
    %v58 = vld [vmem:[#allocation5 + $0x90] sm:$0xff]
    %v59 = vld [vmem:[#allocation5 + $0x98] sm:$0xff]
    %v60 = vld [vmem:[#allocation5 + $0xa0] sm:$0xff]
    %v61 = vld [vmem:[#allocation5 + $0xa8] sm:$0xff]
    %v62 = vld [vmem:[#allocation5 + $0xb0] sm:$0xff]
    %v63 = vld [vmem:[#allocation5 + $0xb8] sm:$0xff]
    %v65 = vunpack.c.l.b16 %v39
    %v66 = vunpack.c.h.b16 %v39
    %v67 = vpack.c.b16 %v65, %v65
    %v68 = vpack.c.b16 %v66, %v66
    %v94 = vunpack.c.l.b16 %v40
    %v95 = vunpack.c.h.b16 %v40
    %v96 = vunpack.c.l.b16 %v41
    %v97 = vunpack.c.h.b16 %v41
    %v98 = vunpack.c.l.b16 %v42
    %v99 = vunpack.c.h.b16 %v42
    %v100 = vunpack.c.l.b16 %v43
    %v101 = vunpack.c.h.b16 %v43
    %v102 = vunpack.c.l.b16 %v44
    %v103 = vunpack.c.h.b16 %v44
    %v104 = vunpack.c.l.b16 %v45
    %v105 = vunpack.c.h.b16 %v45
    %v106 = vunpack.c.l.b16 %v46
    %v107 = vunpack.c.h.b16 %v46
    %v108 = vunpack.c.l.b16 %v47
    %v109 = vunpack.c.h.b16 %v47
    %v110 = vunpack.c.l.b16 %v48
    %v111 = vunpack.c.h.b16 %v48
    %v112 = vunpack.c.l.b16 %v49
    %v113 = vunpack.c.h.b16 %v49
    %v114 = vunpack.c.l.b16 %v50
    %v115 = vunpack.c.h.b16 %v50
    %v116 = vunpack.c.l.b16 %v51
    %v117 = vunpack.c.h.b16 %v51
    %v118 = vunpack.c.l.b16 %v52
    %v119 = vunpack.c.h.b16 %v52
    %v120 = vunpack.c.l.b16 %v53
    %v121 = vunpack.c.h.b16 %v53
    %v122 = vunpack.c.l.b16 %v54
    %v123 = vunpack.c.h.b16 %v54
    %v124 = vunpack.c.l.b16 %v55
    %v125 = vunpack.c.h.b16 %v55
    %v126 = vunpack.c.l.b16 %v56
    %v127 = vunpack.c.h.b16 %v56
    %v128 = vunpack.c.l.b16 %v57
    %v129 = vunpack.c.h.b16 %v57
    %v130 = vunpack.c.l.b16 %v58
    %v131 = vunpack.c.h.b16 %v58
    %v132 = vunpack.c.l.b16 %v59
    %v133 = vunpack.c.h.b16 %v59
    %v134 = vunpack.c.l.b16 %v60
    %v135 = vunpack.c.h.b16 %v60
    %v136 = vunpack.c.l.b16 %v61
    %v137 = vunpack.c.h.b16 %v61
    %v138 = vunpack.c.l.b16 %v62
    %v139 = vunpack.c.h.b16 %v62
    %v140 = vunpack.c.l.b16 %v63
    %v141 = vunpack.c.h.b16 %v63
    %v142 = vpack.c.b16 %v96, %v94
    %v143 = vpack.c.b16 %v97, %v95
    %v144 = vpack.c.b16 %v100, %v98
    %v145 = vpack.c.b16 %v101, %v99
    %v146 = vpack.c.b16 %v104, %v102
    %v147 = vpack.c.b16 %v105, %v103
    %v148 = vpack.c.b16 %v108, %v106
    %v149 = vpack.c.b16 %v109, %v107
    %v150 = vpack.c.b16 %v112, %v110
    %v151 = vpack.c.b16 %v113, %v111
    %v152 = vpack.c.b16 %v116, %v114
    %v153 = vpack.c.b16 %v117, %v115
    %v154 = vpack.c.b16 %v120, %v118
    %v155 = vpack.c.b16 %v121, %v119
    %v156 = vpack.c.b16 %v124, %v122
    %v157 = vpack.c.b16 %v125, %v123
    %v158 = vpack.c.b16 %v128, %v126
    %v159 = vpack.c.b16 %v129, %v127
    %v160 = vpack.c.b16 %v132, %v130
    %v161 = vpack.c.b16 %v133, %v131
    %v162 = vpack.c.b16 %v136, %v134
    %v163 = vpack.c.b16 %v137, %v135
    %v164 = vpack.c.b16 %v140, %v138
    %v165 = vpack.c.b16 %v141, %v139
    %vm190 = vcmask 523264
    %v192 = vsel %vm190, %v68, 0
    %194 = vmatprep.subr.bf16.mxu0 %v143
    %195 = vmatpush1.bf16.msra.mxu0 %v142
    %196 = vmatprep.subr.bf16.mxu0 %v145
    %197 = vmatpush1.bf16.msra.mxu0 %v144
    %198 = vmatprep.subr.bf16.mxu0 %v147
    %199 = vmatpush1.bf16.msra.mxu0 %v146
    %200 = vmatprep.subr.bf16.mxu0 %v149
    %201 = vmatpush1.bf16.msra.mxu0 %v148
    %202 = vmatprep.subr.bf16.mxu0 %v151
    %203 = vmatpush1.bf16.msra.mxu0 %v150
    %204 = vmatprep.subr.bf16.mxu0 %v153
    %205 = vmatpush1.bf16.msra.mxu0 %v152
    %206 = vmatprep.subr.bf16.mxu0 %v155
    %207 = vmatpush1.bf16.msra.mxu0 %v154
    %208 = vmatprep.subr.bf16.mxu0 %v157
    %209 = vmatpush1.bf16.msra.mxu0 %v156
    %210 = vmatprep.subr.bf16.mxu0 %v159
    %211 = vmatpush1.bf16.msra.mxu0 %v158
    %212 = vmatprep.subr.bf16.mxu0 %v161
    %213 = vmatpush1.bf16.msra.mxu0 %v160
    %214 = vmatprep.subr.bf16.mxu0 %v163
    %215 = vmatpush1.bf16.msra.mxu0 %v162
    %216 = vmatprep.subr.bf16.mxu0 %v165
    %217 = vmatpush1.bf16.msra.mxu0 %v164
    %218 = vmatprep.subr.bf16.mxu0 0
    %219 = vmatpush1.bf16.msra.mxu0 0
    %220 = vmatprep.subr.bf16.mxu0 0
    %221 = vmatpush1.bf16.msra.mxu0 0
    %222 = vmatprep.subr.bf16.mxu0 0
    %223 = vmatpush1.bf16.msra.mxu0 0
    %224 = vmatprep.subr.bf16.mxu0 0
    %225 = vmatpush1.bf16.msra.mxu0 0
    %226 = vmatprep.mubr.bf16.mxu0 %v192
    %227 = vmatmul.mubr.bf16.gmra.mrb[0].mxu0 %v67
    %v228 = vpop.f32.mrb[0].mxu0
    %v229 = vadd.f32 0.0, %v228
    %v230 = vpop.f32.mrb[0].mxu0
    %v231 = vadd.f32 0.0, %v230
    %v232 = vpop.f32.mrb[0].mxu0
    %v233 = vpop.f32.mrb[0].mxu0
    %234 = vdwg.mxu0
    %v235 = vpack.c.bf16 %v229, %v229
    %v236 = vpack.c.bf16 %v231, %v231
    %v239 = vunpack.c.l.b16 %v235
    %v240 = vunpack.c.l.b16 %v236
    %v241 = vpack.c.b16 %v240, %v239
    %243 = vst [vmem:[#allocation7] sm:$0xff] %v241
    // Predicated region
    $region18: #{encode_image.11} parent=1 // pred_check
      _
    $region19: #{encode_image.11} parent=1 // pred_check_branch
      %245 = sbr.rel (0) target = $region21
    $region20: #{encode_image.11} parent=1 // pred_region
      %s247 = ssub.s32 128, 128
      %248 = vsyncadd [#allocation4], %s247
      %s250 = sshll.u32 [#allocation7], 4
      %s251 = int_to_ptr.vmem [resolvable:$true] %s250
      %253 = dma.vmem_to_hbm [thread:$0]  %s251, 128, %s2, [#allocation4]
    $region21: #{encode_image.11} parent=1 // pred_fallthru
      _
    // Predicated region
    $region22: #{encode_image.11} parent=1 // pred_check
      _
    $region23: #{encode_image.11} parent=1 // pred_check_branch
      %255 = sbr.rel (0) target = $region25
    $region24: #{encode_image.11} parent=1 // pred_region
      %256 = dma.done [#allocation4], 128
    $region25: #{encode_image.11} parent=1 // pred_fallthru
      _
    %257 = vsyncpa [#allocation3], 1
    %258 = vsyncpa [#allocation6], 1
    %259 = vsyncpa [#allocation4], 1

// kernel: encode_image.14
$region0: #{encode_image.14}
  #allocation0 [shape = 'u32[]', space=smem, size = 0x4, offset = 0x4, fixed_abs, tag = 'smem constant byte address 0x4 - core index']
  #allocation1 [shape = 'u32[144,128]{1,0:T(1,128)}', space=vmem, size = 0x12000, scoped, tag = 'internal scratch']
  #allocation2 [shape = 'f32[5,256]{1,0:T(8,128)}', space=vmem, size = 0x2000, scoped, tag = 'scratch operand']
  %s0 = inlined_call_operand.hbm [shape: bf16[2,5,768], index: 0, kind: input, shape index: {}]
  %s1 = inlined_call_operand.hbm [shape: bf16[256,256], index: 1, kind: input, shape index: {}]
  %s2 = inlined_call_operand.hbm [shape: f32[1,256], index: 2, kind: input, shape index: {}]
  %s3 = inlined_call_operand.hbm [shape: bf16[2,5,256], index: 3, kind: input, shape index: {}]
  %s4 = inlined_call_operand.hbm [shape: bf16[2,5,256], index: 4, kind: output, shape index: {}]
  %s5 = sld [smem:[#allocation0]]
  $region65: #{encode_image.14} parent=0
    _
  %s7 = ssub.s32 1, %s5
  %s8 = scalar_select 0, %s7, %s5
  $region1: #{encode_image.14} parent=0
    #allocation3 [shape = 'u8[24576]{0}', space=vmem, size = 0x6000, scoped, tag = 'input window, operand 0']
    #allocation4 [shape = 's32[2]{0}', space=sflag, size = 0x8, scoped, tag = 'scoped memory for encode_image.14']
    #allocation5 [shape = 's32[2]{0}', space=sflag, size = 0x8, scoped, tag = 'scoped memory for encode_image.14']
    #allocation6 [shape = 'u8[131072]{0}', space=vmem, size = 0x20000, scoped, tag = 'input window, operand 1, single buffered']
    #allocation7 [shape = 's32[1]{0}', space=sflag, size = 0x4, scoped, tag = 'scoped memory for encode_image.14']
    #allocation8 [shape = 'u8[1024]{0}', space=vmem, size = 0x400, scoped, tag = 'input window, operand 2, single buffered']
    #allocation9 [shape = 'u8[8192]{0}', space=vmem, size = 0x2000, scoped, tag = 'input window, operand 3']
    #allocation10 [shape = 's32[2]{0}', space=sflag, size = 0x8, scoped, tag = 'scoped memory for encode_image.14']
    #allocation11 [shape = 'u8[8192]{0}', space=vmem, size = 0x2000, scoped, tag = 'output window, operand 0']
    %9 = vsyncpa [#allocation4], 0
    %s10 = scalar_lea.sflag [#allocation4], 1
    %11 = vsyncpa %s10, 0
    %12 = vsyncpa [#allocation7], 0
    %13 = vsyncpa [#allocation10], 0
    %s14 = scalar_lea.sflag [#allocation10], 1
    %15 = vsyncpa %s14, 0
    %16 = vsyncpa [#allocation5], 0
    %s17 = scalar_lea.sflag [#allocation5], 1
    %18 = vsyncpa %s17, 0
    loop: start=0, step=1, limit=4
    $region2: #{encode_image.14} parent=1 // loop_pre_header
      _
    $region3: #{encode_image.14} parent=1 // loop_header
      %s20 = sphi 0, %s24
      %p21 = scmp.ge.s32.totalorder %s20, 4
      %s30 = sphi 0, %s32
      %s33 = sphi 0, %s30
      %s34 = sphi 0, %s33
      %s50 = sphi 0, %s34
      %s54 = sphi 0, %s54
      %s56 = sphi 0, %s54
      %s57 = sphi 0, %s56
      %s71 = sphi 0, %s57
      %s75 = sphi 0, %s75
      %s77 = sphi 0, %s75
      %s78 = sphi 0, %s77
      %s92 = sphi 0, %s78
      %s98 = sphi 0, %s100
      %s101 = sphi 0, %s98
      %s102 = sphi 0, %s101
      %s118 = sphi 0, %s102
      %s124 = sphi 0, %s126
      %s127 = sphi 0, %s124
      %s128 = sphi 0, %s127
      %s144 = sphi 0, %s128
    $region4: #{encode_image.14} parent=1 // loop_header_branch
      %23 = sbr.rel (%p21) target = $region8
    $region5: #{encode_image.14} parent=1 // loop_body
      %s25 = ssub.s32 %s20, 1
      %s26 = ssub.s32 %s20, 2
      %s27 = sadd.s32 %s20, 1
      %s28 = ssub.s32 %s20, %s27
      %p29 = scmp.eq.s32.totalorder %s28, 0
      %s31 = sadd.s32 %s30, 1
      %s32 = scalar_select %p29, %s30, %s31
      %p35 = pneg %p29
      %p36 = scmp.eq.s32.totalorder %s20, 1
      %p37 = por %p35, %p36
      %p38 = scmp.ne.s32.totalorder %s30, %s33
      %p39 = scmp.eq.s32.totalorder %s20, 0
      %p40 = por %p38, %p39
      %p41 = scmp.ne.s32.totalorder %s30, %s33
      %p42 = scmp.eq.s32.totalorder %s25, 1
      %p43 = por %p41, %p42
      %p44 = scmp.ne.s32.totalorder %s33, %s34
      %p45 = scmp.eq.s32.totalorder %s25, 0
      %p46 = por %p44, %p45
      %p47 = scmp.ne.s32.totalorder %s33, %s34
      %p48 = scmp.eq.s32.totalorder %s26, 1
      %p49 = por %p47, %p48
      %p51 = scmp.ne.s32.totalorder %s34, %s50
      %p52 = scmp.eq.s32.totalorder %s26, 0
      %p53 = por %p51, %p52
      %s55 = sadd.s32 %s54, 1
      %p58 = scmp.eq.s32.totalorder %s20, 1
      %p59 = scmp.ne.s32.totalorder %s54, %s56
      %p60 = scmp.eq.s32.totalorder %s20, 0
      %p61 = por %p59, %p60
      %p62 = scmp.ne.s32.totalorder %s54, %s56
      %p63 = scmp.eq.s32.totalorder %s25, 1
      %p64 = por %p62, %p63
      %p65 = scmp.ne.s32.totalorder %s56, %s57
      %p66 = scmp.eq.s32.totalorder %s25, 0
      %p67 = por %p65, %p66
      %p68 = scmp.ne.s32.totalorder %s56, %s57
      %p69 = scmp.eq.s32.totalorder %s26, 1
      %p70 = por %p68, %p69
      %p72 = scmp.ne.s32.totalorder %s57, %s71
      %p73 = scmp.eq.s32.totalorder %s26, 0
      %p74 = por %p72, %p73
      %s76 = sadd.s32 %s75, 1
      %p79 = scmp.eq.s32.totalorder %s20, 1
      %p80 = scmp.ne.s32.totalorder %s75, %s77
      %p81 = scmp.eq.s32.totalorder %s20, 0
      %p82 = por %p80, %p81
      %p83 = scmp.ne.s32.totalorder %s75, %s77
      %p84 = scmp.eq.s32.totalorder %s25, 1
      %p85 = por %p83, %p84
      %p86 = scmp.ne.s32.totalorder %s77, %s78
      %p87 = scmp.eq.s32.totalorder %s25, 0
      %p88 = por %p86, %p87
      %p89 = scmp.ne.s32.totalorder %s77, %s78
      %p90 = scmp.eq.s32.totalorder %s26, 1
      %p91 = por %p89, %p90
      %p93 = scmp.ne.s32.totalorder %s78, %s92
      %p94 = scmp.eq.s32.totalorder %s26, 0
      %p95 = por %p93, %p94
      %s96 = ssub.s32 %s20, %s27
      %p97 = scmp.eq.s32.totalorder %s96, 0
      %s99 = sadd.s32 %s98, 1
      %s100 = scalar_select %p97, %s98, %s99
      %p103 = pneg %p97
      %p104 = scmp.eq.s32.totalorder %s20, 1
      %p105 = por %p103, %p104
      %p106 = scmp.ne.s32.totalorder %s98, %s101
      %p107 = scmp.eq.s32.totalorder %s20, 0
      %p108 = por %p106, %p107
      %p109 = scmp.ne.s32.totalorder %s98, %s101
      %p110 = scmp.eq.s32.totalorder %s25, 1
      %p111 = por %p109, %p110
      %p112 = scmp.ne.s32.totalorder %s101, %s102
      %p113 = scmp.eq.s32.totalorder %s25, 0
      %p114 = por %p112, %p113
      %p115 = scmp.ne.s32.totalorder %s101, %s102
      %p116 = scmp.eq.s32.totalorder %s26, 1
      %p117 = por %p115, %p116
      %p119 = scmp.ne.s32.totalorder %s102, %s118
      %p120 = scmp.eq.s32.totalorder %s26, 0
      %p121 = por %p119, %p120
      %s122 = ssub.s32 %s20, %s27
      %p123 = scmp.eq.s32.totalorder %s122, 0
      %s125 = sadd.s32 %s124, 1
      %s126 = scalar_select %p123, %s124, %s125
      %p129 = pneg %p123
      %p130 = scmp.eq.s32.totalorder %s20, 1
      %p131 = por %p129, %p130
      %p132 = scmp.ne.s32.totalorder %s124, %s127
      %p133 = scmp.eq.s32.totalorder %s20, 0
      %p134 = por %p132, %p133
      %p135 = scmp.ne.s32.totalorder %s124, %s127
      %p136 = scmp.eq.s32.totalorder %s25, 1
      %p137 = por %p135, %p136
      %p138 = scmp.ne.s32.totalorder %s127, %s128
      %p139 = scmp.eq.s32.totalorder %s25, 0
      %p140 = por %p138, %p139
      %p141 = scmp.ne.s32.totalorder %s127, %s128
      %p142 = scmp.eq.s32.totalorder %s26, 1
      %p143 = por %p141, %p142
      %p145 = scmp.ne.s32.totalorder %s128, %s144
      %p146 = scmp.eq.s32.totalorder %s26, 0
      %p147 = por %p145, %p146
      %p148 = scmp.le.s32.totalorder 1, %s20
      %p149 = scmp.lt.s32.totalorder %s20, 3
      %p150 = pnand %p148, %p149
      %p151 = pneg %p150
      // Predicated region
      $region9: #{encode_image.14} parent=5 // pred_check
        _
      $region10: #{encode_image.14} parent=5 // pred_check_branch
        %153 = sbr.rel (%p150) target = $region12
      $region11: #{encode_image.14} parent=5 // pred_region
        %s154 = ssub.s32 %s20, 1
        // Predicated region
        $region13: #{encode_image.14} parent=11 // pred_check
          %p155 = pneg %p67
        $region14: #{encode_image.14} parent=11 // pred_check_branch
          %157 = sbr.rel (%p155) target = $region16
        $region15: #{encode_image.14} parent=11 // pred_region
          %s159 = ssub.s32 4096, 4096
          %160 = vsyncadd [#allocation7], %s159
          %s161 = sshll.u32 [#allocation6], 4
          %s162 = int_to_ptr.vmem [resolvable:$true] %s161
          %167 = dma.hbm_to_vmem [thread:$0]  %s1, 4096, %s162, [#allocation7], 128, 128, 8
        $region16: #{encode_image.14} parent=11 // pred_fallthru
          _
        // Predicated region
        $region17: #{encode_image.14} parent=11 // pred_check
          %p168 = pneg %p88
        $region18: #{encode_image.14} parent=11 // pred_check_branch
          %170 = sbr.rel (%p168) target = $region20
        $region19: #{encode_image.14} parent=11 // pred_region
          %s172 = ssub.s32 32, 32
          %173 = vsyncadd [#allocation7], %s172
          %s175 = sshll.u32 [#allocation8], 4
          %s176 = int_to_ptr.vmem [resolvable:$true] %s175
          %178 = dma.hbm_to_vmem [thread:$0]  %s2, 32, %s176, [#allocation7]
        $region20: #{encode_image.14} parent=11 // pred_fallthru
          _
      $region12: #{encode_image.14} parent=5 // pred_fallthru
        _
      %p179 = scmp.lt.s32.totalorder %s20, 2
      // Predicated region
      $region21: #{encode_image.14} parent=5 // pred_check
        %p180 = pneg %p179
      $region22: #{encode_image.14} parent=5 // pred_check_branch
        %182 = sbr.rel (%p180) target = $region24
      $region23: #{encode_image.14} parent=5 // pred_region
        // Predicated region
        $region25: #{encode_image.14} parent=23 // pred_check
          %p183 = pneg %p40
        $region26: #{encode_image.14} parent=23 // pred_check_branch
          %185 = sbr.rel (%p183) target = $region28
        $region27: #{encode_image.14} parent=23 // pred_region
          %s186 = sand.u32 %s30, 1
          %s187 = scalar_lea.sflag [#allocation4], %s186
          %s188 = sand.u32 %s30, 1
          %s189 = smul.addr %s188, 24
          %s190 = scalar_lea.vmem [#allocation3], %s189
          %s192 = ssub.s32 384, 384
          %193 = vsyncadd %s187, %s192
          %s194 = smul.addr %s20, 6
          %s195 = smul.addr %s194, 64
          %s196 = scalar_lea.hbm %s0, %s195
          %s198 = sshll.u32 %s190, 4
          %s199 = int_to_ptr.vmem [resolvable:$true] %s198
          %201 = dma.hbm_to_vmem [thread:$0]  %s196, 384, %s199, %s187
        $region28: #{encode_image.14} parent=23 // pred_fallthru
          _
        // Predicated region
        $region29: #{encode_image.14} parent=23 // pred_check
          %p202 = pneg %p108
        $region30: #{encode_image.14} parent=23 // pred_check_branch
          %204 = sbr.rel (%p202) target = $region32
        $region31: #{encode_image.14} parent=23 // pred_region
          %s205 = sand.u32 %s98, 1
          %s206 = scalar_lea.sflag [#allocation10], %s205
          %s207 = sand.u32 %s98, 1
          %s208 = smul.addr %s207, 8
          %s209 = scalar_lea.vmem [#allocation9], %s208
          %s211 = ssub.s32 128, 128
          %212 = vsyncadd %s206, %s211
          %s213 = smul.addr %s20, 2
          %s214 = smul.addr %s213, 64
          %s215 = scalar_lea.hbm %s3, %s214
          %s217 = sshll.u32 %s209, 4
          %s218 = int_to_ptr.vmem [resolvable:$true] %s217
          %220 = dma.hbm_to_vmem [thread:$0]  %s215, 128, %s218, %s206
        $region32: #{encode_image.14} parent=23 // pred_fallthru
          _
      $region24: #{encode_image.14} parent=5 // pred_fallthru
        _
      %p221 = scmp.le.s32.totalorder 1, %s20
      %p222 = scmp.lt.s32.totalorder %s20, 3
      %p223 = pnand %p221, %p222
      %p224 = pneg %p223
      // Predicated region
      $region33: #{encode_image.14} parent=5 // pred_check
        _
      $region34: #{encode_image.14} parent=5 // pred_check_branch
        %226 = sbr.rel (%p223) target = $region36
      $region35: #{encode_image.14} parent=5 // pred_region
        %s227 = ssub.s32 %s20, 1
        %s228 = sand.u32 %s33, 1
        %s229 = scalar_lea.sflag [#allocation4], %s228
        %s230 = sand.u32 %s33, 1
        %s231 = smul.addr %s230, 24
        %s232 = scalar_lea.vmem [#allocation3], %s231
        // Predicated region
        $region37: #{encode_image.14} parent=35 // pred_check
          %p233 = pneg %p46
        $region38: #{encode_image.14} parent=35 // pred_check_branch
          %235 = sbr.rel (%p233) target = $region40
        $region39: #{encode_image.14} parent=35 // pred_region
          %236 = dma.done %s229, 384
        $region40: #{encode_image.14} parent=35 // pred_fallthru
          _
        // Predicated region
        $region41: #{encode_image.14} parent=35 // pred_check
          %p237 = pneg %p67
        $region42: #{encode_image.14} parent=35 // pred_check_branch
          %239 = sbr.rel (%p237) target = $region44
        $region43: #{encode_image.14} parent=35 // pred_region
          %240 = dma.done [#allocation7], 4096
        $region44: #{encode_image.14} parent=35 // pred_fallthru
          _
        // Predicated region
        $region45: #{encode_image.14} parent=35 // pred_check
          %p241 = pneg %p88
        $region46: #{encode_image.14} parent=35 // pred_check_branch
          %243 = sbr.rel (%p241) target = $region48
        $region47: #{encode_image.14} parent=35 // pred_region
          %244 = dma.done [#allocation7], 32
        $region48: #{encode_image.14} parent=35 // pred_fallthru
          _
        %s245 = sand.u32 %s101, 1
        %s246 = scalar_lea.sflag [#allocation10], %s245
        %s247 = sand.u32 %s101, 1
        %s248 = smul.addr %s247, 8
        %s249 = scalar_lea.vmem [#allocation9], %s248
        // Predicated region
        $region49: #{encode_image.14} parent=35 // pred_check
          %p250 = pneg %p114
        $region50: #{encode_image.14} parent=35 // pred_check_branch
          %252 = sbr.rel (%p250) target = $region52
        $region51: #{encode_image.14} parent=35 // pred_region
          %253 = dma.done %s246, 128
        $region52: #{encode_image.14} parent=35 // pred_fallthru
          _
        %s254 = sand.u32 %s33, 1
        %s255 = scalar_lea.sflag [#allocation4], %s254
        %s256 = sand.u32 %s33, 1
        %s257 = smul.addr %s256, 24
        %s258 = scalar_lea.vmem [#allocation3], %s257
        %p259 = pneg %p46
        %p260 = pneg %p43
        %p261 = pneg %p67
        %p262 = pneg %p64
        %p263 = pneg %p88
        %p264 = pneg %p85
        %s265 = sand.u32 %s101, 1
        %s266 = scalar_lea.sflag [#allocation10], %s265
        %s267 = sand.u32 %s101, 1
        %s268 = smul.addr %s267, 8
        %s269 = scalar_lea.vmem [#allocation9], %s268
        %p270 = pneg %p114
        %p271 = pneg %p111
        %p272 = pneg %p140
        %p273 = pneg %p137
        %s274 = sand.u32 %s127, 1
        %s275 = scalar_lea.sflag [#allocation5], %s274
        %s276 = sand.u32 %s127, 1
        %s277 = smul.addr %s276, 8
        %s278 = scalar_lea.vmem [#allocation11], %s277
        %280 = vst [vmem:[#allocation2] sm:$0x1f] 0.0
        %281 = vst [vmem:[#allocation2 + $0x8] sm:$0x1f] 0.0
        %v282 = vld [vmem:[%s232] sm:$0x7]
        %v283 = vld [vmem:[%s232 + $0x8] sm:$0x7]
        %v284 = vld [vmem:[%s232 + $0x10] sm:$0x7]
        %vm285 = vcmask 523264
        %v287 = vsel %vm285, %v282, 0
        %v290 = vsel %vm285, %v283, 0
        %292 = vmatprep.subr.bf16.mxu0 0
        %293 = vmatpush1.bf16.xpose.msra.mxu0 %v290
        %294 = vmatprep.subr.bf16.mxu0 0
        %295 = vmatpush1.bf16.xpose.msra.mxu0 0
        %296 = vmatprep.subr.bf16.mxu0 0
        %297 = vmatpush1.bf16.xpose.msra.mxu0 0
        %298 = vmatprep.subr.bf16.mxu0 0
        %299 = vmatpush1.bf16.xpose.msra.mxu0 0
        %300 = vmatprep.subr.bf16.mxu0 0
        %301 = vmatpush1.bf16.xpose.msra.mxu0 0
        %302 = vmatprep.subr.bf16.mxu0 0
        %303 = vmatpush1.bf16.xpose.msra.mxu0 0
        %304 = vmatprep.subr.bf16.mxu0 0
        %305 = vmatpush1.bf16.xpose.msra.mxu0 0
        %306 = vmatprep.subr.bf16.mxu0 0
        %307 = vmatpush1.bf16.xpose.msra.mxu0 0
        %308 = vmatprep.subr.bf16.mxu0 0
        %309 = vmatpush1.bf16.xpose.msra.mxu0 0
        %310 = vmatprep.subr.bf16.mxu0 0
        %311 = vmatpush1.bf16.xpose.msra.mxu0 0
        %312 = vmatprep.subr.bf16.mxu0 0
        %313 = vmatpush1.bf16.xpose.msra.mxu0 0
        %314 = vmatprep.subr.bf16.mxu0 0
        %315 = vmatpush1.bf16.xpose.msra.mxu0 0
        %316 = vmatprep.subr.bf16.mxu0 0
        %317 = vmatpush1.bf16.xpose.msra.mxu0 0
        %318 = vmatprep.subr.bf16.mxu0 0
        %319 = vmatpush1.bf16.xpose.msra.mxu0 0
        %320 = vmatprep.subr.bf16.mxu0 0
        %321 = vmatpush1.bf16.xpose.msra.mxu0 0
        %322 = vmatprep.subr.bf16.mxu0 0
        %323 = vmatpush1.bf16.xpose.msra.mxu0 0
        %324 = vmatprep.mubr.bf16.mxu0 0
        %325 = vmatmul.mubr.bf16.gmra.mrb[0].mxu0 %v287
        %v326 = vpop.f32.mrb[0].mxu0
        %v327 = vadd.f32 0.0, %v326
        %v328 = vpop.f32.mrb[0].mxu0
        %v329 = vpop.f32.mrb[0].mxu0
        %v330 = vpop.f32.mrb[0].mxu0
        %331 = vdwg.mxu0
        %v332 = vmul.f32 %v327, 0.125
        %vm333 = vcmask 36864
        %v334 = vsel %vm333, %v332, -inf
        %335 = vmax.xlane.f32.xlu0 %v334
        %v336 = vpop.xlane.xlu0 %335
        %v337 = vsub.f32 %v332, %v336
        %v338 = vmul.f32 %v337, 1.442695
        %v339 = vpow.pop %v338
        %v340 = vsel %vm333, %v339, 0.0
        %341 = vadd.xlane.f32.xlu0 %v340
        %v342 = vpop.xlane.xlu0 %341
        %v343 = vrcp.pop %v342
        %v344 = vmul.f32 %v339, %v343
        %v345 = vpack.c.bf16 %v344, %v344
        %vm346 = vcmask 39936
        %v348 = vsel %vm346, %v345, 0
        %vm350 = vcmask 1041408
        %vm351 = vcmask 1042432
        %v352 = vsel %vm350, 4294967295, 65535
        %v353 = vsel %vm351, %v352, 0
        %v355 = vand.u32 %v284, %v353
        %357 = vmatprep.subr.bf16.mxu0 0
        %358 = vmatpush1.bf16.msra.mxu0 %v355
        %359 = vmatprep.subr.bf16.mxu0 0
        %360 = vmatpush1.bf16.msra.mxu0 0
        %361 = vmatprep.subr.bf16.mxu0 0
        %362 = vmatpush1.bf16.msra.mxu0 0
        %363 = vmatprep.subr.bf16.mxu0 0
        %364 = vmatpush1.bf16.msra.mxu0 0
        %365 = vmatprep.subr.bf16.mxu0 0
        %366 = vmatpush1.bf16.msra.mxu0 0
        %367 = vmatprep.subr.bf16.mxu0 0
        %368 = vmatpush1.bf16.msra.mxu0 0
        %369 = vmatprep.subr.bf16.mxu0 0
        %370 = vmatpush1.bf16.msra.mxu0 0
        %371 = vmatprep.subr.bf16.mxu0 0
        %372 = vmatpush1.bf16.msra.mxu0 0
        %373 = vmatprep.subr.bf16.mxu0 0
        %374 = vmatpush1.bf16.msra.mxu0 0
        %375 = vmatprep.subr.bf16.mxu0 0
        %376 = vmatpush1.bf16.msra.mxu0 0
        %377 = vmatprep.subr.bf16.mxu0 0
        %378 = vmatpush1.bf16.msra.mxu0 0
        %379 = vmatprep.subr.bf16.mxu0 0
        %380 = vmatpush1.bf16.msra.mxu0 0
        %381 = vmatprep.subr.bf16.mxu0 0
        %382 = vmatpush1.bf16.msra.mxu0 0
        %383 = vmatprep.subr.bf16.mxu0 0
        %384 = vmatpush1.bf16.msra.mxu0 0
        %385 = vmatprep.subr.bf16.mxu0 0
        %386 = vmatpush1.bf16.msra.mxu0 0
        %387 = vmatprep.subr.bf16.mxu0 0
        %388 = vmatpush1.bf16.msra.mxu0 0
        %389 = vmatprep.mubr.bf16.mxu0 0
        %390 = vmatmul.mubr.bf16.gmra.mrb[0].mxu0 %v348
        %v391 = vpop.f32.mrb[0].mxu0
        %v392 = vadd.f32 0.0, %v391
        %v393 = vpop.f32.mrb[0].mxu0
        %v394 = vpop.f32.mrb[0].mxu0
        %v395 = vpop.f32.mrb[0].mxu0
        %396 = vdwg.mxu0
        %v397 = vld [vmem:[#allocation6] sm:$0xff]
        %v398 = vld [vmem:[#allocation6 + $0x8] sm:$0xff]
        %v399 = vld [vmem:[#allocation6 + $0x10] sm:$0xff]
        %v400 = vld [vmem:[#allocation6 + $0x18] sm:$0xff]
        %v401 = vld [vmem:[#allocation6 + $0x20] sm:$0xff]
        %v402 = vld [vmem:[#allocation6 + $0x28] sm:$0xff]
        %v403 = vld [vmem:[#allocation6 + $0x30] sm:$0xff]
        %v404 = vld [vmem:[#allocation6 + $0x38] sm:$0xff]
        %v405 = vld [vmem:[#allocation2] sm:$0x1f]
        %v406 = vld [vmem:[#allocation2 + $0x8] sm:$0x1f]
        %v407 = vpack.c.bf16 %v392, %v392
        %v416 = vunpack.c.l.b16 %v397
        %v417 = vunpack.c.h.b16 %v397
        %v418 = vunpack.c.l.b16 %v398
        %v419 = vunpack.c.h.b16 %v398
        %v420 = vunpack.c.l.b16 %v399
        %v421 = vunpack.c.h.b16 %v399
        %v422 = vunpack.c.l.b16 %v400
        %v423 = vunpack.c.h.b16 %v400
        %v424 = vunpack.c.l.b16 %v401
        %v425 = vunpack.c.h.b16 %v401
        %v426 = vunpack.c.l.b16 %v402
        %v427 = vunpack.c.h.b16 %v402
        %v428 = vunpack.c.l.b16 %v403
        %v429 = vunpack.c.h.b16 %v403
        %v430 = vunpack.c.l.b16 %v404
        %v431 = vunpack.c.h.b16 %v404
        %v432 = vpack.c.b16 %v418, %v416
        %v433 = vpack.c.b16 %v419, %v417
        %v434 = vpack.c.b16 %v422, %v420
        %v435 = vpack.c.b16 %v423, %v421
        %v436 = vpack.c.b16 %v426, %v424
        %v437 = vpack.c.b16 %v427, %v425
        %v438 = vpack.c.b16 %v430, %v428
        %v439 = vpack.c.b16 %v431, %v429
        %v449 = vsel %vm285, %v407, 0
        %451 = vmatprep.subr.bf16.mxu0 %v433
        %452 = vmatpush1.bf16.msra.mxu0 %v432
        %453 = vmatprep.subr.bf16.mxu0 %v435
        %454 = vmatpush1.bf16.msra.mxu0 %v434
        %455 = vmatprep.subr.bf16.mxu0 %v437
        %456 = vmatpush1.bf16.msra.mxu0 %v436
        %457 = vmatprep.subr.bf16.mxu0 %v439
        %458 = vmatpush1.bf16.msra.mxu0 %v438
        %459 = vmatprep.subr.bf16.mxu0 0
        %460 = vmatpush1.bf16.msra.mxu0 0
        %461 = vmatprep.subr.bf16.mxu0 0
        %462 = vmatpush1.bf16.msra.mxu0 0
        %463 = vmatprep.subr.bf16.mxu0 0
        %464 = vmatpush1.bf16.msra.mxu0 0
        %465 = vmatprep.subr.bf16.mxu0 0
        %466 = vmatpush1.bf16.msra.mxu0 0
        %467 = vmatprep.subr.bf16.mxu0 0
        %468 = vmatpush1.bf16.msra.mxu0 0
        %469 = vmatprep.subr.bf16.mxu0 0
        %470 = vmatpush1.bf16.msra.mxu0 0
        %471 = vmatprep.subr.bf16.mxu0 0
        %472 = vmatpush1.bf16.msra.mxu0 0
        %473 = vmatprep.subr.bf16.mxu0 0
        %474 = vmatpush1.bf16.msra.mxu0 0
        %475 = vmatprep.subr.bf16.mxu0 0
        %476 = vmatpush1.bf16.msra.mxu0 0
        %477 = vmatprep.subr.bf16.mxu0 0
        %478 = vmatpush1.bf16.msra.mxu0 0
        %479 = vmatprep.subr.bf16.mxu0 0
        %480 = vmatpush1.bf16.msra.mxu0 0
        %481 = vmatprep.subr.bf16.mxu0 0
        %482 = vmatpush1.bf16.msra.mxu0 0
        %483 = vmatprep.mubr.bf16.mxu0 0
        %484 = vmatmul.mubr.bf16.gmra.mrb[0].mxu0 %v449
        %v485 = vpop.f32.mrb[0].mxu0
        %v486 = vadd.f32 0.0, %v485
        %v487 = vpop.f32.mrb[0].mxu0
        %v488 = vadd.f32 0.0, %v487
        %v489 = vpop.f32.mrb[0].mxu0
        %v490 = vpop.f32.mrb[0].mxu0
        %491 = vdwg.mxu0
        %v492 = vadd.f32 %v405, %v486
        %v493 = vadd.f32 %v406, %v488
        %494 = vst [vmem:[#allocation2] sm:$0x1f] %v492
        %495 = vst [vmem:[#allocation2 + $0x8] sm:$0x1f] %v493
        %v496 = vld [vmem:[%s232] sm:$0x7]
        %v497 = vld [vmem:[%s232 + $0x8] sm:$0x7]
        %v498 = vld [vmem:[%s232 + $0x10] sm:$0x7]
        %v500 = vunpack.c.l.b16 %v496
        %v501 = vpack.c.b16 %v500, %v500
        %502 = vrot.lane.b32.xlu0 %v501, 64
        %v503 = vpop.permute.xlu0 %502
        %v505 = vunpack.c.l.b16 %v497
        %v506 = vpack.c.b16 %v505, %v505
        %507 = vrot.lane.b32.xlu0 %v506, 64
        %v508 = vpop.permute.xlu0 %507
        %v510 = vsel %vm285, %v503, 0
        %v513 = vsel %vm285, %v508, 0
        %515 = vmatprep.subr.bf16.mxu0 0
        %516 = vmatpush1.bf16.xpose.msra.mxu0 %v513
        %517 = vmatprep.subr.bf16.mxu0 0
        %518 = vmatpush1.bf16.xpose.msra.mxu0 0
        %519 = vmatprep.subr.bf16.mxu0 0
        %520 = vmatpush1.bf16.xpose.msra.mxu0 0
        %521 = vmatprep.subr.bf16.mxu0 0
        %522 = vmatpush1.bf16.xpose.msra.mxu0 0
        %523 = vmatprep.subr.bf16.mxu0 0
        %524 = vmatpush1.bf16.xpose.msra.mxu0 0
        %525 = vmatprep.subr.bf16.mxu0 0
        %526 = vmatpush1.bf16.xpose.msra.mxu0 0
        %527 = vmatprep.subr.bf16.mxu0 0
        %528 = vmatpush1.bf16.xpose.msra.mxu0 0
        %529 = vmatprep.subr.bf16.mxu0 0
        %530 = vmatpush1.bf16.xpose.msra.mxu0 0
        %531 = vmatprep.subr.bf16.mxu0 0
        %532 = vmatpush1.bf16.xpose.msra.mxu0 0
        %533 = vmatprep.subr.bf16.mxu0 0
        %534 = vmatpush1.bf16.xpose.msra.mxu0 0
        %535 = vmatprep.subr.bf16.mxu0 0
        %536 = vmatpush1.bf16.xpose.msra.mxu0 0
        %537 = vmatprep.subr.bf16.mxu0 0
        %538 = vmatpush1.bf16.xpose.msra.mxu0 0
        %539 = vmatprep.subr.bf16.mxu0 0
        %540 = vmatpush1.bf16.xpose.msra.mxu0 0
        %541 = vmatprep.subr.bf16.mxu0 0
        %542 = vmatpush1.bf16.xpose.msra.mxu0 0
        %543 = vmatprep.subr.bf16.mxu0 0
        %544 = vmatpush1.bf16.xpose.msra.mxu0 0
        %545 = vmatprep.subr.bf16.mxu0 0
        %546 = vmatpush1.bf16.xpose.msra.mxu0 0
        %547 = vmatprep.mubr.bf16.mxu0 0
        %548 = vmatmul.mubr.bf16.gmra.mrb[0].mxu0 %v510
        %v549 = vpop.f32.mrb[0].mxu0
        %v550 = vadd.f32 0.0, %v549
        %v551 = vpop.f32.mrb[0].mxu0
        %v552 = vpop.f32.mrb[0].mxu0
        %v553 = vpop.f32.mrb[0].mxu0
        %554 = vdwg.mxu0
        %v555 = vmul.f32 %v550, 0.125
        %v556 = vsel %vm333, %v555, -inf
        %557 = vmax.xlane.f32.xlu0 %v556
        %v558 = vpop.xlane.xlu0 %557
        %v559 = vsub.f32 %v555, %v558
        %v560 = vmul.f32 %v559, 1.442695
        %v561 = vpow.pop %v560
        %v562 = vsel %vm333, %v561, 0.0
        %563 = vadd.xlane.f32.xlu0 %v562
        %v564 = vpop.xlane.xlu0 %563
        %v565 = vrcp.pop %v564
        %v566 = vmul.f32 %v561, %v565
        %v567 = vpack.c.bf16 %v566, %v566
        %v569 = vunpack.c.l.b16 %v498
        %v570 = vpack.c.b16 %v569, %v569
        %571 = vrot.lane.b32.xlu0 %v570, 64
        %v572 = vpop.permute.xlu0 %571
        %v574 = vsel %vm346, %v567, 0
        %v577 = vand.u32 %v572, %v353
        %579 = vmatprep.subr.bf16.mxu0 0
        %580 = vmatpush1.bf16.msra.mxu0 %v577
        %581 = vmatprep.subr.bf16.mxu0 0
        %582 = vmatpush1.bf16.msra.mxu0 0
        %583 = vmatprep.subr.bf16.mxu0 0
        %584 = vmatpush1.bf16.msra.mxu0 0
        %585 = vmatprep.subr.bf16.mxu0 0
        %586 = vmatpush1.bf16.msra.mxu0 0
        %587 = vmatprep.subr.bf16.mxu0 0
        %588 = vmatpush1.bf16.msra.mxu0 0
        %589 = vmatprep.subr.bf16.mxu0 0
        %590 = vmatpush1.bf16.msra.mxu0 0
        %591 = vmatprep.subr.bf16.mxu0 0
        %592 = vmatpush1.bf16.msra.mxu0 0
        %593 = vmatprep.subr.bf16.mxu0 0
        %594 = vmatpush1.bf16.msra.mxu0 0
        %595 = vmatprep.subr.bf16.mxu0 0
        %596 = vmatpush1.bf16.msra.mxu0 0
        %597 = vmatprep.subr.bf16.mxu0 0
        %598 = vmatpush1.bf16.msra.mxu0 0
        %599 = vmatprep.subr.bf16.mxu0 0
        %600 = vmatpush1.bf16.msra.mxu0 0
        %601 = vmatprep.subr.bf16.mxu0 0
        %602 = vmatpush1.bf16.msra.mxu0 0
        %603 = vmatprep.subr.bf16.mxu0 0
        %604 = vmatpush1.bf16.msra.mxu0 0
        %605 = vmatprep.subr.bf16.mxu0 0
        %606 = vmatpush1.bf16.msra.mxu0 0
        %607 = vmatprep.subr.bf16.mxu0 0
        %608 = vmatpush1.bf16.msra.mxu0 0
        %609 = vmatprep.subr.bf16.mxu0 0
        %610 = vmatpush1.bf16.msra.mxu0 0
        %611 = vmatprep.mubr.bf16.mxu0 0
        %612 = vmatmul.mubr.bf16.gmra.mrb[0].mxu0 %v574
        %v613 = vpop.f32.mrb[0].mxu0
        %v614 = vadd.f32 0.0, %v613
        %v615 = vpop.f32.mrb[0].mxu0
        %v616 = vpop.f32.mrb[0].mxu0
        %v617 = vpop.f32.mrb[0].mxu0
        %618 = vdwg.mxu0
        %v619 = vld [vmem:[#allocation6 + $0x40] sm:$0xff]
        %v620 = vld [vmem:[#allocation6 + $0x48] sm:$0xff]
        %v621 = vld [vmem:[#allocation6 + $0x50] sm:$0xff]
        %v622 = vld [vmem:[#allocation6 + $0x58] sm:$0xff]
        %v623 = vld [vmem:[#allocation6 + $0x60] sm:$0xff]
        %v624 = vld [vmem:[#allocation6 + $0x68] sm:$0xff]
        %v625 = vld [vmem:[#allocation6 + $0x70] sm:$0xff]
        %v626 = vld [vmem:[#allocation6 + $0x78] sm:$0xff]
        %v627 = vld [vmem:[#allocation2] sm:$0x1f]
        %v628 = vld [vmem:[#allocation2 + $0x8] sm:$0x1f]
        %v629 = vpack.c.bf16 %v614, %v614
        %v638 = vunpack.c.l.b16 %v619
        %v639 = vunpack.c.h.b16 %v619
        %v640 = vunpack.c.l.b16 %v620
        %v641 = vunpack.c.h.b16 %v620
        %v642 = vunpack.c.l.b16 %v621
        %v643 = vunpack.c.h.b16 %v621
        %v644 = vunpack.c.l.b16 %v622
        %v645 = vunpack.c.h.b16 %v622
        %v646 = vunpack.c.l.b16 %v623
        %v647 = vunpack.c.h.b16 %v623
        %v648 = vunpack.c.l.b16 %v624
        %v649 = vunpack.c.h.b16 %v624
        %v650 = vunpack.c.l.b16 %v625
        %v651 = vunpack.c.h.b16 %v625
        %v652 = vunpack.c.l.b16 %v626
        %v653 = vunpack.c.h.b16 %v626
        %v654 = vpack.c.b16 %v640, %v638
        %v655 = vpack.c.b16 %v641, %v639
        %v656 = vpack.c.b16 %v644, %v642
        %v657 = vpack.c.b16 %v645, %v643
        %v658 = vpack.c.b16 %v648, %v646
        %v659 = vpack.c.b16 %v649, %v647
        %v660 = vpack.c.b16 %v652, %v650
        %v661 = vpack.c.b16 %v653, %v651
        %v671 = vsel %vm285, %v629, 0
        %673 = vmatprep.subr.bf16.mxu0 %v655
        %674 = vmatpush1.bf16.msra.mxu0 %v654
        %675 = vmatprep.subr.bf16.mxu0 %v657
        %676 = vmatpush1.bf16.msra.mxu0 %v656
        %677 = vmatprep.subr.bf16.mxu0 %v659
        %678 = vmatpush1.bf16.msra.mxu0 %v658
        %679 = vmatprep.subr.bf16.mxu0 %v661
        %680 = vmatpush1.bf16.msra.mxu0 %v660
        %681 = vmatprep.subr.bf16.mxu0 0
        %682 = vmatpush1.bf16.msra.mxu0 0
        %683 = vmatprep.subr.bf16.mxu0 0
        %684 = vmatpush1.bf16.msra.mxu0 0
        %685 = vmatprep.subr.bf16.mxu0 0
        %686 = vmatpush1.bf16.msra.mxu0 0
        %687 = vmatprep.subr.bf16.mxu0 0
        %688 = vmatpush1.bf16.msra.mxu0 0
        %689 = vmatprep.subr.bf16.mxu0 0
        %690 = vmatpush1.bf16.msra.mxu0 0
        %691 = vmatprep.subr.bf16.mxu0 0
        %692 = vmatpush1.bf16.msra.mxu0 0
        %693 = vmatprep.subr.bf16.mxu0 0
        %694 = vmatpush1.bf16.msra.mxu0 0
        %695 = vmatprep.subr.bf16.mxu0 0
        %696 = vmatpush1.bf16.msra.mxu0 0
        %697 = vmatprep.subr.bf16.mxu0 0
        %698 = vmatpush1.bf16.msra.mxu0 0
        %699 = vmatprep.subr.bf16.mxu0 0
        %700 = vmatpush1.bf16.msra.mxu0 0
        %701 = vmatprep.subr.bf16.mxu0 0
        %702 = vmatpush1.bf16.msra.mxu0 0
        %703 = vmatprep.subr.bf16.mxu0 0
        %704 = vmatpush1.bf16.msra.mxu0 0
        %705 = vmatprep.mubr.bf16.mxu0 0
        %706 = vmatmul.mubr.bf16.gmra.mrb[0].mxu0 %v671
        %v707 = vpop.f32.mrb[0].mxu0
        %v708 = vadd.f32 0.0, %v707
        %v709 = vpop.f32.mrb[0].mxu0
        %v710 = vadd.f32 0.0, %v709
        %v711 = vpop.f32.mrb[0].mxu0
        %v712 = vpop.f32.mrb[0].mxu0
        %713 = vdwg.mxu0
        %v714 = vadd.f32 %v627, %v708
        %v715 = vadd.f32 %v628, %v710
        %716 = vst [vmem:[#allocation2] sm:$0x1f] %v714
        %717 = vst [vmem:[#allocation2 + $0x8] sm:$0x1f] %v715
        %v718 = vld [vmem:[%s232 + $0x4] sm:$0x7]
        %v719 = vld [vmem:[%s232 + $0xc] sm:$0x7]
        %v720 = vld [vmem:[%s232 + $0x14] sm:$0x7]
        %v722 = vsel %vm285, %v718, 0
        %v725 = vsel %vm285, %v719, 0
        %727 = vmatprep.subr.bf16.mxu0 0
        %728 = vmatpush1.bf16.xpose.msra.mxu0 %v725
        %729 = vmatprep.subr.bf16.mxu0 0
        %730 = vmatpush1.bf16.xpose.msra.mxu0 0
        %731 = vmatprep.subr.bf16.mxu0 0
        %732 = vmatpush1.bf16.xpose.msra.mxu0 0
        %733 = vmatprep.subr.bf16.mxu0 0
        %734 = vmatpush1.bf16.xpose.msra.mxu0 0
        %735 = vmatprep.subr.bf16.mxu0 0
        %736 = vmatpush1.bf16.xpose.msra.mxu0 0
        %737 = vmatprep.subr.bf16.mxu0 0
        %738 = vmatpush1.bf16.xpose.msra.mxu0 0
        %739 = vmatprep.subr.bf16.mxu0 0
        %740 = vmatpush1.bf16.xpose.msra.mxu0 0
        %741 = vmatprep.subr.bf16.mxu0 0
        %742 = vmatpush1.bf16.xpose.msra.mxu0 0
        %743 = vmatprep.subr.bf16.mxu0 0
        %744 = vmatpush1.bf16.xpose.msra.mxu0 0
        %745 = vmatprep.subr.bf16.mxu0 0
        %746 = vmatpush1.bf16.xpose.msra.mxu0 0
        %747 = vmatprep.subr.bf16.mxu0 0
        %748 = vmatpush1.bf16.xpose.msra.mxu0 0
        %749 = vmatprep.subr.bf16.mxu0 0
        %750 = vmatpush1.bf16.xpose.msra.mxu0 0
        %751 = vmatprep.subr.bf16.mxu0 0
        %752 = vmatpush1.bf16.xpose.msra.mxu0 0
        %753 = vmatprep.subr.bf16.mxu0 0
        %754 = vmatpush1.bf16.xpose.msra.mxu0 0
        %755 = vmatprep.subr.bf16.mxu0 0
        %756 = vmatpush1.bf16.xpose.msra.mxu0 0
        %757 = vmatprep.subr.bf16.mxu0 0
        %758 = vmatpush1.bf16.xpose.msra.mxu0 0
        %759 = vmatprep.mubr.bf16.mxu0 0
        %760 = vmatmul.mubr.bf16.gmra.mrb[0].mxu0 %v722
        %v761 = vpop.f32.mrb[0].mxu0
        %v762 = vadd.f32 0.0, %v761
        %v763 = vpop.f32.mrb[0].mxu0
        %v764 = vpop.f32.mrb[0].mxu0
        %v765 = vpop.f32.mrb[0].mxu0
        %766 = vdwg.mxu0
        %v767 = vmul.f32 %v762, 0.125
        %v768 = vsel %vm333, %v767, -inf
        %769 = vmax.xlane.f32.xlu0 %v768
        %v770 = vpop.xlane.xlu0 %769
        %v771 = vsub.f32 %v767, %v770
        %v772 = vmul.f32 %v771, 1.442695
        %v773 = vpow.pop %v772
        %v774 = vsel %vm333, %v773, 0.0
        %775 = vadd.xlane.f32.xlu0 %v774
        %v776 = vpop.xlane.xlu0 %775
        %v777 = vrcp.pop %v776
        %v778 = vmul.f32 %v773, %v777
        %v779 = vpack.c.bf16 %v778, %v778
        %v781 = vsel %vm346, %v779, 0
        %v784 = vand.u32 %v720, %v353
        %786 = vmatprep.subr.bf16.mxu0 0
        %787 = vmatpush1.bf16.msra.mxu0 %v784
        %788 = vmatprep.subr.bf16.mxu0 0
        %789 = vmatpush1.bf16.msra.mxu0 0
        %790 = vmatprep.subr.bf16.mxu0 0
        %791 = vmatpush1.bf16.msra.mxu0 0
        %792 = vmatprep.subr.bf16.mxu0 0
        %793 = vmatpush1.bf16.msra.mxu0 0
        %794 = vmatprep.subr.bf16.mxu0 0
        %795 = vmatpush1.bf16.msra.mxu0 0
        %796 = vmatprep.subr.bf16.mxu0 0
        %797 = vmatpush1.bf16.msra.mxu0 0
        %798 = vmatprep.subr.bf16.mxu0 0
        %799 = vmatpush1.bf16.msra.mxu0 0
        %800 = vmatprep.subr.bf16.mxu0 0
        %801 = vmatpush1.bf16.msra.mxu0 0
        %802 = vmatprep.subr.bf16.mxu0 0
        %803 = vmatpush1.bf16.msra.mxu0 0
        %804 = vmatprep.subr.bf16.mxu0 0
        %805 = vmatpush1.bf16.msra.mxu0 0
        %806 = vmatprep.subr.bf16.mxu0 0
        %807 = vmatpush1.bf16.msra.mxu0 0
        %808 = vmatprep.subr.bf16.mxu0 0
        %809 = vmatpush1.bf16.msra.mxu0 0
        %810 = vmatprep.subr.bf16.mxu0 0
        %811 = vmatpush1.bf16.msra.mxu0 0
        %812 = vmatprep.subr.bf16.mxu0 0
        %813 = vmatpush1.bf16.msra.mxu0 0
        %814 = vmatprep.subr.bf16.mxu0 0
        %815 = vmatpush1.bf16.msra.mxu0 0
        %816 = vmatprep.subr.bf16.mxu0 0
        %817 = vmatpush1.bf16.msra.mxu0 0
        %818 = vmatprep.mubr.bf16.mxu0 0
        %819 = vmatmul.mubr.bf16.gmra.mrb[0].mxu0 %v781
        %v820 = vpop.f32.mrb[0].mxu0
        %v821 = vadd.f32 0.0, %v820
        %v822 = vpop.f32.mrb[0].mxu0
        %v823 = vpop.f32.mrb[0].mxu0
        %v824 = vpop.f32.mrb[0].mxu0
        %825 = vdwg.mxu0
        %v826 = vld [vmem:[#allocation6 + $0x80] sm:$0xff]
        %v827 = vld [vmem:[#allocation6 + $0x88] sm:$0xff]
        %v828 = vld [vmem:[#allocation6 + $0x90] sm:$0xff]
        %v829 = vld [vmem:[#allocation6 + $0x98] sm:$0xff]
        %v830 = vld [vmem:[#allocation6 + $0xa0] sm:$0xff]
        %v831 = vld [vmem:[#allocation6 + $0xa8] sm:$0xff]
        %v832 = vld [vmem:[#allocation6 + $0xb0] sm:$0xff]
        %v833 = vld [vmem:[#allocation6 + $0xb8] sm:$0xff]
        %v834 = vld [vmem:[#allocation2] sm:$0x1f]
        %v835 = vld [vmem:[#allocation2 + $0x8] sm:$0x1f]
        %v836 = vpack.c.bf16 %v821, %v821
        %v845 = vunpack.c.l.b16 %v826
        %v846 = vunpack.c.h.b16 %v826
        %v847 = vunpack.c.l.b16 %v827
        %v848 = vunpack.c.h.b16 %v827
        %v849 = vunpack.c.l.b16 %v828
        %v850 = vunpack.c.h.b16 %v828
        %v851 = vunpack.c.l.b16 %v829
        %v852 = vunpack.c.h.b16 %v829
        %v853 = vunpack.c.l.b16 %v830
        %v854 = vunpack.c.h.b16 %v830
        %v855 = vunpack.c.l.b16 %v831
        %v856 = vunpack.c.h.b16 %v831
        %v857 = vunpack.c.l.b16 %v832
        %v858 = vunpack.c.h.b16 %v832
        %v859 = vunpack.c.l.b16 %v833
        %v860 = vunpack.c.h.b16 %v833
        %v861 = vpack.c.b16 %v847, %v845
        %v862 = vpack.c.b16 %v848, %v846
        %v863 = vpack.c.b16 %v851, %v849
        %v864 = vpack.c.b16 %v852, %v850
        %v865 = vpack.c.b16 %v855, %v853
        %v866 = vpack.c.b16 %v856, %v854
        %v867 = vpack.c.b16 %v859, %v857
        %v868 = vpack.c.b16 %v860, %v858
        %v878 = vsel %vm285, %v836, 0
        %880 = vmatprep.subr.bf16.mxu0 %v862
        %881 = vmatpush1.bf16.msra.mxu0 %v861
        %882 = vmatprep.subr.bf16.mxu0 %v864
        %883 = vmatpush1.bf16.msra.mxu0 %v863
        %884 = vmatprep.subr.bf16.mxu0 %v866
        %885 = vmatpush1.bf16.msra.mxu0 %v865
        %886 = vmatprep.subr.bf16.mxu0 %v868
        %887 = vmatpush1.bf16.msra.mxu0 %v867
        %888 = vmatprep.subr.bf16.mxu0 0
        %889 = vmatpush1.bf16.msra.mxu0 0
        %890 = vmatprep.subr.bf16.mxu0 0
        %891 = vmatpush1.bf16.msra.mxu0 0
        %892 = vmatprep.subr.bf16.mxu0 0
        %893 = vmatpush1.bf16.msra.mxu0 0
        %894 = vmatprep.subr.bf16.mxu0 0
        %895 = vmatpush1.bf16.msra.mxu0 0
        %896 = vmatprep.subr.bf16.mxu0 0
        %897 = vmatpush1.bf16.msra.mxu0 0
        %898 = vmatprep.subr.bf16.mxu0 0
        %899 = vmatpush1.bf16.msra.mxu0 0
        %900 = vmatprep.subr.bf16.mxu0 0
        %901 = vmatpush1.bf16.msra.mxu0 0
        %902 = vmatprep.subr.bf16.mxu0 0
        %903 = vmatpush1.bf16.msra.mxu0 0
        %904 = vmatprep.subr.bf16.mxu0 0
        %905 = vmatpush1.bf16.msra.mxu0 0
        %906 = vmatprep.subr.bf16.mxu0 0
        %907 = vmatpush1.bf16.msra.mxu0 0
        %908 = vmatprep.subr.bf16.mxu0 0
        %909 = vmatpush1.bf16.msra.mxu0 0
        %910 = vmatprep.subr.bf16.mxu0 0
        %911 = vmatpush1.bf16.msra.mxu0 0
        %912 = vmatprep.mubr.bf16.mxu0 0
        %913 = vmatmul.mubr.bf16.gmra.mrb[0].mxu0 %v878
        %v914 = vpop.f32.mrb[0].mxu0
        %v915 = vadd.f32 0.0, %v914
        %v916 = vpop.f32.mrb[0].mxu0
        %v917 = vadd.f32 0.0, %v916
        %v918 = vpop.f32.mrb[0].mxu0
        %v919 = vpop.f32.mrb[0].mxu0
        %920 = vdwg.mxu0
        %v921 = vadd.f32 %v834, %v915
        %v922 = vadd.f32 %v835, %v917
        %923 = vst [vmem:[#allocation2] sm:$0x1f] %v921
        %924 = vst [vmem:[#allocation2 + $0x8] sm:$0x1f] %v922
        %v925 = vld [vmem:[%s232 + $0x4] sm:$0x7]
        %v926 = vld [vmem:[%s232 + $0xc] sm:$0x7]
        %v927 = vld [vmem:[%s232 + $0x14] sm:$0x7]
        %v929 = vunpack.c.l.b16 %v925
        %v930 = vpack.c.b16 %v929, %v929
        %931 = vrot.lane.b32.xlu0 %v930, 64
        %v932 = vpop.permute.xlu0 %931
        %v934 = vunpack.c.l.b16 %v926
        %v935 = vpack.c.b16 %v934, %v934
        %936 = vrot.lane.b32.xlu0 %v935, 64
        %v937 = vpop.permute.xlu0 %936
        %v939 = vsel %vm285, %v932, 0
        %v942 = vsel %vm285, %v937, 0
        %944 = vmatprep.subr.bf16.mxu0 0
        %945 = vmatpush1.bf16.xpose.msra.mxu0 %v942
        %946 = vmatprep.subr.bf16.mxu0 0
        %947 = vmatpush1.bf16.xpose.msra.mxu0 0
        %948 = vmatprep.subr.bf16.mxu0 0
        %949 = vmatpush1.bf16.xpose.msra.mxu0 0
        %950 = vmatprep.subr.bf16.mxu0 0
        %951 = vmatpush1.bf16.xpose.msra.mxu0 0
        %952 = vmatprep.subr.bf16.mxu0 0
        %953 = vmatpush1.bf16.xpose.msra.mxu0 0
        %954 = vmatprep.subr.bf16.mxu0 0
        %955 = vmatpush1.bf16.xpose.msra.mxu0 0
        %956 = vmatprep.subr.bf16.mxu0 0
        %957 = vmatpush1.bf16.xpose.msra.mxu0 0
        %958 = vmatprep.subr.bf16.mxu0 0
        %959 = vmatpush1.bf16.xpose.msra.mxu0 0
        %960 = vmatprep.subr.bf16.mxu0 0
        %961 = vmatpush1.bf16.xpose.msra.mxu0 0
        %962 = vmatprep.subr.bf16.mxu0 0
        %963 = vmatpush1.bf16.xpose.msra.mxu0 0
        %964 = vmatprep.subr.bf16.mxu0 0
        %965 = vmatpush1.bf16.xpose.msra.mxu0 0
        %966 = vmatprep.subr.bf16.mxu0 0
        %967 = vmatpush1.bf16.xpose.msra.mxu0 0
        %968 = vmatprep.subr.bf16.mxu0 0
        %969 = vmatpush1.bf16.xpose.msra.mxu0 0
        %970 = vmatprep.subr.bf16.mxu0 0
        %971 = vmatpush1.bf16.xpose.msra.mxu0 0
        %972 = vmatprep.subr.bf16.mxu0 0
        %973 = vmatpush1.bf16.xpose.msra.mxu0 0
        %974 = vmatprep.subr.bf16.mxu0 0
        %975 = vmatpush1.bf16.xpose.msra.mxu0 0
        %976 = vmatprep.mubr.bf16.mxu0 0
        %977 = vmatmul.mubr.bf16.gmra.mrb[0].mxu0 %v939
        %v978 = vpop.f32.mrb[0].mxu0
        %v979 = vadd.f32 0.0, %v978
        %v980 = vpop.f32.mrb[0].mxu0
        %v981 = vpop.f32.mrb[0].mxu0
        %v982 = vpop.f32.mrb[0].mxu0
        %983 = vdwg.mxu0
        %v984 = vmul.f32 %v979, 0.125
        %v985 = vsel %vm333, %v984, -inf
        %986 = vmax.xlane.f32.xlu0 %v985
        %v987 = vpop.xlane.xlu0 %986
        %v988 = vsub.f32 %v984, %v987
        %v989 = vmul.f32 %v988, 1.442695
        %v990 = vpow.pop %v989
        %v991 = vsel %vm333, %v990, 0.0
        %992 = vadd.xlane.f32.xlu0 %v991
        %v993 = vpop.xlane.xlu0 %992
        %v994 = vrcp.pop %v993
        %v995 = vmul.f32 %v990, %v994
        %v996 = vpack.c.bf16 %v995, %v995
        %v998 = vunpack.c.l.b16 %v927
        %v999 = vpack.c.b16 %v998, %v998
        %1000 = vrot.lane.b32.xlu0 %v999, 64
        %v1001 = vpop.permute.xlu0 %1000
        %v1003 = vsel %vm346, %v996, 0
        %v1006 = vand.u32 %v1001, %v353
        %1008 = vmatprep.subr.bf16.mxu0 0
        %1009 = vmatpush1.bf16.msra.mxu0 %v1006
        %1010 = vmatprep.subr.bf16.mxu0 0
        %1011 = vmatpush1.bf16.msra.mxu0 0
        %1012 = vmatprep.subr.bf16.mxu0 0
        %1013 = vmatpush1.bf16.msra.mxu0 0
        %1014 = vmatprep.subr.bf16.mxu0 0
        %1015 = vmatpush1.bf16.msra.mxu0 0
        %1016 = vmatprep.subr.bf16.mxu0 0
        %1017 = vmatpush1.bf16.msra.mxu0 0
        %1018 = vmatprep.subr.bf16.mxu0 0
        %1019 = vmatpush1.bf16.msra.mxu0 0
        %1020 = vmatprep.subr.bf16.mxu0 0
        %1021 = vmatpush1.bf16.msra.mxu0 0
        %1022 = vmatprep.subr.bf16.mxu0 0
        %1023 = vmatpush1.bf16.msra.mxu0 0
        %1024 = vmatprep.subr.bf16.mxu0 0
        %1025 = vmatpush1.bf16.msra.mxu0 0
        %1026 = vmatprep.subr.bf16.mxu0 0
        %1027 = vmatpush1.bf16.msra.mxu0 0
        %1028 = vmatprep.subr.bf16.mxu0 0
        %1029 = vmatpush1.bf16.msra.mxu0 0
        %1030 = vmatprep.subr.bf16.mxu0 0
        %1031 = vmatpush1.bf16.msra.mxu0 0
        %1032 = vmatprep.subr.bf16.mxu0 0
        %1033 = vmatpush1.bf16.msra.mxu0 0
        %1034 = vmatprep.subr.bf16.mxu0 0
        %1035 = vmatpush1.bf16.msra.mxu0 0
        %1036 = vmatprep.subr.bf16.mxu0 0
        %1037 = vmatpush1.bf16.msra.mxu0 0
        %1038 = vmatprep.subr.bf16.mxu0 0
        %1039 = vmatpush1.bf16.msra.mxu0 0
        %1040 = vmatprep.mubr.bf16.mxu0 0
        %1041 = vmatmul.mubr.bf16.gmra.mrb[0].mxu0 %v1003
        %v1042 = vpop.f32.mrb[0].mxu0
        %v1043 = vadd.f32 0.0, %v1042
        %v1044 = vpop.f32.mrb[0].mxu0
        %v1045 = vpop.f32.mrb[0].mxu0
        %v1046 = vpop.f32.mrb[0].mxu0
        %1047 = vdwg.mxu0
        %v1048 = vld [vmem:[#allocation6 + $0xc0] sm:$0xff]
        %v1049 = vld [vmem:[#allocation6 + $0xc8] sm:$0xff]
        %v1050 = vld [vmem:[#allocation6 + $0xd0] sm:$0xff]
        %v1051 = vld [vmem:[#allocation6 + $0xd8] sm:$0xff]
        %v1052 = vld [vmem:[#allocation6 + $0xe0] sm:$0xff]
        %v1053 = vld [vmem:[#allocation6 + $0xe8] sm:$0xff]
        %v1054 = vld [vmem:[#allocation6 + $0xf0] sm:$0xff]
        %v1055 = vld [vmem:[#allocation6 + $0xf8] sm:$0xff]
        %v1056 = vld [vmem:[#allocation2] sm:$0x1f]
        %v1057 = vld [vmem:[#allocation2 + $0x8] sm:$0x1f]
        %v1058 = vpack.c.bf16 %v1043, %v1043
        %v1067 = vunpack.c.l.b16 %v1048
        %v1068 = vunpack.c.h.b16 %v1048
        %v1069 = vunpack.c.l.b16 %v1049
        %v1070 = vunpack.c.h.b16 %v1049
        %v1071 = vunpack.c.l.b16 %v1050
        %v1072 = vunpack.c.h.b16 %v1050
        %v1073 = vunpack.c.l.b16 %v1051
        %v1074 = vunpack.c.h.b16 %v1051
        %v1075 = vunpack.c.l.b16 %v1052
        %v1076 = vunpack.c.h.b16 %v1052
        %v1077 = vunpack.c.l.b16 %v1053
        %v1078 = vunpack.c.h.b16 %v1053
        %v1079 = vunpack.c.l.b16 %v1054
        %v1080 = vunpack.c.h.b16 %v1054
        %v1081 = vunpack.c.l.b16 %v1055
        %v1082 = vunpack.c.h.b16 %v1055
        %v1083 = vpack.c.b16 %v1069, %v1067
        %v1084 = vpack.c.b16 %v1070, %v1068
        %v1085 = vpack.c.b16 %v1073, %v1071
        %v1086 = vpack.c.b16 %v1074, %v1072
        %v1087 = vpack.c.b16 %v1077, %v1075
        %v1088 = vpack.c.b16 %v1078, %v1076
        %v1089 = vpack.c.b16 %v1081, %v1079
        %v1090 = vpack.c.b16 %v1082, %v1080
        %v1100 = vsel %vm285, %v1058, 0
        %1102 = vmatprep.subr.bf16.mxu0 %v1084
        %1103 = vmatpush1.bf16.msra.mxu0 %v1083
        %1104 = vmatprep.subr.bf16.mxu0 %v1086
        %1105 = vmatpush1.bf16.msra.mxu0 %v1085
        %1106 = vmatprep.subr.bf16.mxu0 %v1088
        %1107 = vmatpush1.bf16.msra.mxu0 %v1087
        %1108 = vmatprep.subr.bf16.mxu0 %v1090
        %1109 = vmatpush1.bf16.msra.mxu0 %v1089
        %1110 = vmatprep.subr.bf16.mxu0 0
        %1111 = vmatpush1.bf16.msra.mxu0 0
        %1112 = vmatprep.subr.bf16.mxu0 0
        %1113 = vmatpush1.bf16.msra.mxu0 0
        %1114 = vmatprep.subr.bf16.mxu0 0
        %1115 = vmatpush1.bf16.msra.mxu0 0
        %1116 = vmatprep.subr.bf16.mxu0 0
        %1117 = vmatpush1.bf16.msra.mxu0 0
        %1118 = vmatprep.subr.bf16.mxu0 0
        %1119 = vmatpush1.bf16.msra.mxu0 0
        %1120 = vmatprep.subr.bf16.mxu0 0
        %1121 = vmatpush1.bf16.msra.mxu0 0
        %1122 = vmatprep.subr.bf16.mxu0 0
        %1123 = vmatpush1.bf16.msra.mxu0 0
        %1124 = vmatprep.subr.bf16.mxu0 0
        %1125 = vmatpush1.bf16.msra.mxu0 0
        %1126 = vmatprep.subr.bf16.mxu0 0
        %1127 = vmatpush1.bf16.msra.mxu0 0
        %1128 = vmatprep.subr.bf16.mxu0 0
        %1129 = vmatpush1.bf16.msra.mxu0 0
        %1130 = vmatprep.subr.bf16.mxu0 0
        %1131 = vmatpush1.bf16.msra.mxu0 0
        %1132 = vmatprep.subr.bf16.mxu0 0
        %1133 = vmatpush1.bf16.msra.mxu0 0
        %1134 = vmatprep.mubr.bf16.mxu0 0
        %1135 = vmatmul.mubr.bf16.gmra.mrb[0].mxu0 %v1100
        %v1136 = vpop.f32.mrb[0].mxu0
        %v1137 = vadd.f32 0.0, %v1136
        %v1138 = vpop.f32.mrb[0].mxu0
        %v1139 = vadd.f32 0.0, %v1138
        %v1140 = vpop.f32.mrb[0].mxu0
        %v1141 = vpop.f32.mrb[0].mxu0
        %1142 = vdwg.mxu0
        %v1143 = vadd.f32 %v1056, %v1137
        %v1144 = vadd.f32 %v1057, %v1139
        %1145 = vst [vmem:[#allocation2] sm:$0x1f] %v1143
        %1146 = vst [vmem:[#allocation2 + $0x8] sm:$0x1f] %v1144
        %v1147 = vld [vmem:[#allocation2] sm:$0x1f]
        %v1148 = vld [vmem:[#allocation2 + $0x8] sm:$0x1f]
        %v1149 = vld [vmem:[#allocation8] sm:$0x3]
        %v1151 = vlaneseq
        %v1152 = vshrl.u32 %v1151, 7
        %v1153 = vsub.s32 0, %v1152
        %v1154 = vrot.slane %v1149, %v1153
        %v1155 = vlaneseq
        %v1156 = vshrl.u32 %v1155, 7
        %v1157 = vsub.s32 1, %v1156
        %v1158 = vrot.slane %v1149, %v1157
        %v1161 = vadd.f32 %v1147, %v1154
        %v1162 = vadd.f32 %v1148, %v1158
        %v1163 = vld [vmem:[%s249] sm:$0x77]
        %v1164 = vunpack.c.l.bf16 %v1163
        %v1165 = vunpack.c.h.bf16 %v1163
        %v1166 = vadd.f32 %v1161, %v1164
        %v1167 = vadd.f32 %v1162, %v1165
        %v1168 = vpack.c.bf16 %v1166, %v1166
        %v1169 = vpack.c.bf16 %v1167, %v1167
        %v1172 = vunpack.c.l.b16 %v1168
        %v1173 = vunpack.c.l.b16 %v1169
        %v1174 = vpack.c.b16 %v1173, %v1172
        %vm1176 = vcmask 1042432
        %vm1177 = vsmask.f32 2304
        %vm1178 = vmand %vm1176, %vm1177
        %vm1179 = vcmask 1046532
        %vm1180 = vsmask.f32 6400
        %vm1181 = vmand %vm1179, %vm1180
        %vm1182 = vmor %vm1181, %vm1178
        %v1183 = vld [vmem:[%s278] sm:$0x77]
        %v1184 = vsel %vm1182, %v1174, %v1183
        %1185 = vst [vmem:[%s278] sm:$0x77] %v1184
        %s1186 = sand.u32 %s127, 1
        %s1187 = scalar_lea.sflag [#allocation5], %s1186
        %s1188 = sand.u32 %s127, 1
        %s1189 = smul.addr %s1188, 8
        %s1190 = scalar_lea.vmem [#allocation11], %s1189
        // Predicated region
        $region53: #{encode_image.14} parent=35 // pred_check
          %p1191 = pneg %p137
        $region54: #{encode_image.14} parent=35 // pred_check_branch
          %1193 = sbr.rel (%p1191) target = $region56
        $region55: #{encode_image.14} parent=35 // pred_region
          %s1195 = ssub.s32 128, 128
          %1196 = vsyncadd %s1187, %s1195
          %s1197 = smul.addr %s25, 2
          %s1198 = smul.addr %s1197, 64
          %s1199 = scalar_lea.hbm %s4, %s1198
          %s1201 = sshll.u32 %s1190, 4
          %s1202 = int_to_ptr.vmem [resolvable:$true] %s1201
          %1204 = dma.vmem_to_hbm [thread:$0]  %s1202, 128, %s1199, %s1187
        $region56: #{encode_image.14} parent=35 // pred_fallthru
          _
      $region36: #{encode_image.14} parent=5 // pred_fallthru
        _
      %p1205 = scmp.le.s32.totalorder 2, %s20
      // Predicated region
      $region57: #{encode_image.14} parent=5 // pred_check
        %p1206 = pneg %p1205
      $region58: #{encode_image.14} parent=5 // pred_check_branch
        %1208 = sbr.rel (%p1206) target = $region60
      $region59: #{encode_image.14} parent=5 // pred_region
        %s1209 = ssub.s32 %s20, 2
        // Predicated region
        $region61: #{encode_image.14} parent=59 // pred_check
          %p1210 = pneg %p143
        $region62: #{encode_image.14} parent=59 // pred_check_branch
          %1212 = sbr.rel (%p1210) target = $region64
        $region63: #{encode_image.14} parent=59 // pred_region
          %s1213 = sand.u32 %s128, 1
          %s1214 = scalar_lea.sflag [#allocation5], %s1213
          %s1215 = sand.u32 %s128, 1
          %s1216 = smul.addr %s1215, 8
          %s1217 = scalar_lea.vmem [#allocation11], %s1216
          %1218 = dma.done %s1214, 128
        $region64: #{encode_image.14} parent=59 // pred_fallthru
          _
      $region60: #{encode_image.14} parent=5 // pred_fallthru
        _
    $region6: #{encode_image.14} parent=1 // loop_footer
      %s24 = sadd.s32 1, %s20
    $region7: #{encode_image.14} parent=1 // loop_footer_branch
      %19 = sbr.rel target = $region3
    $region8: #{encode_image.14} parent=1 // loop_exit
      _
    %1219 = vsyncpa [#allocation4], 1
    %s1220 = scalar_lea.sflag [#allocation4], 1
    %1221 = vsyncpa %s1220, 1
    %1222 = vsyncpa [#allocation7], 1
    %1223 = vsyncpa [#allocation10], 1
    %s1224 = scalar_lea.sflag [#allocation10], 1
    %1225 = vsyncpa %s1224, 1
    %1226 = vsyncpa [#allocation5], 1
    %s1227 = scalar_lea.sflag [#allocation5], 1
    %1228 = vsyncpa %s1227, 1

// kernel: encode_image.13
$region0: #{encode_image.13}
  #allocation0 [shape = 'u32[]', space=smem, size = 0x4, offset = 0x4, fixed_abs, tag = 'smem constant byte address 0x4 - core index']
  #allocation1 [shape = 'u32[144,128]{1,0:T(1,128)}', space=vmem, size = 0x12000, scoped, tag = 'internal scratch']
  #allocation2 [shape = 'bf16[10,256]{1,0:T(8,128)(2,1)}', space=vmem, size = 0x2000, scoped, tag = 'scratch operand']
  %s0 = inlined_call_operand.hbm [shape: bf16[10,256], index: 0, kind: input, shape index: {}]
  %s1 = inlined_call_operand.hbm [shape: bf16[256,768], index: 1, kind: input, shape index: {}]
  %s2 = inlined_call_operand.hbm [shape: f32[1,768], index: 2, kind: input, shape index: {}]
  %s3 = inlined_call_operand.hbm [shape: f32[1,256], index: 3, kind: input, shape index: {}]
  %s4 = inlined_call_operand.hbm [shape: f32[1,256], index: 4, kind: input, shape index: {}]
  %s5 = inlined_call_operand.hbm [shape: bf16[10,768], index: 5, kind: output, shape index: {}]
  %s6 = sld [smem:[#allocation0]]
  $region77: #{encode_image.13} parent=0
    _
  %s8 = ssub.s32 1, %s6
  %s9 = scalar_select 0, %s8, %s6
  $region1: #{encode_image.13} parent=0
    #allocation3 [shape = 'u8[8192]{0}', space=vmem, size = 0x2000, scoped, tag = 'input window, operand 0, single buffered']
    #allocation4 [shape = 's32[2]{0}', space=sflag, size = 0x8, scoped, tag = 'scoped memory for encode_image.13']
    #allocation5 [shape = 's32[2]{0}', space=sflag, size = 0x8, scoped, tag = 'scoped memory for encode_image.13']
    #allocation6 [shape = 'u8[393216]{0}', space=vmem, size = 0x60000, scoped, tag = 'input window, operand 1']
    #allocation7 [shape = 's32[2]{0}', space=sflag, size = 0x8, scoped, tag = 'scoped memory for encode_image.13']
    #allocation8 [shape = 'u8[3072]{0}', space=vmem, size = 0xc00, scoped, tag = 'input window, operand 2']
    #allocation9 [shape = 'u8[1024]{0}', space=vmem, size = 0x400, scoped, tag = 'input window, operand 3, single buffered']
    #allocation10 [shape = 's32[1]{0}', space=sflag, size = 0x4, scoped, tag = 'scoped memory for encode_image.13']
    #allocation11 [shape = 'u8[1024]{0}', space=vmem, size = 0x400, scoped, tag = 'input window, operand 4, single buffered']
    #allocation12 [shape = 'u8[24576]{0}', space=vmem, size = 0x6000, scoped, tag = 'output window, operand 0']
    %10 = vsyncpa [#allocation4], 0
    %11 = vsyncpa [#allocation7], 0
    %s12 = scalar_lea.sflag [#allocation7], 1
    %13 = vsyncpa %s12, 0
    %14 = vsyncpa [#allocation10], 0
    %15 = vsyncpa [#allocation5], 0
    %s16 = scalar_lea.sflag [#allocation5], 1
    %17 = vsyncpa %s16, 0
    loop: start=0, step=1, limit=4
    $region2: #{encode_image.13} parent=1 // loop_pre_header
      _
    $region3: #{encode_image.13} parent=1 // loop_header
      %s19 = sphi 0, %s23
      %p20 = scmp.ge.s32.totalorder %s19, 4
      %s26 = sphi 0, %s45
      %s27 = sphi 0, %s41
      %s28 = sphi 0, %s37
      %s29 = sphi 0, %s26
      %s30 = sphi 0, %s27
      %s31 = sphi 0, %s28
      %s32 = sphi 0, %s29
      %s33 = sphi 0, %s30
      %s34 = sphi 0, %s31
      %s50 = sphi 0, %s52
      %s53 = sphi 0, %s50
      %s54 = sphi 0, %s53
      %s70 = sphi 0, %s54
      %s78 = sphi 0, %s80
      %s81 = sphi 0, %s78
      %s82 = sphi 0, %s81
      %s98 = sphi 0, %s82
      %s104 = sphi 0, %s106
      %s107 = sphi 0, %s104
      %s108 = sphi 0, %s107
      %s124 = sphi 0, %s108
      %s130 = sphi 0, %s132
      %s133 = sphi 0, %s130
      %s134 = sphi 0, %s133
      %s150 = sphi 0, %s134
      %s156 = sphi 0, %s158
      %s159 = sphi 0, %s156
      %s160 = sphi 0, %s159
      %s176 = sphi 0, %s160
      %s184 = sphi 0, %s186
      %s187 = sphi 0, %s184
      %s188 = sphi 0, %s187
      %s204 = sphi 0, %s188
    $region4: #{encode_image.13} parent=1 // loop_header_branch
      %22 = sbr.rel (%p20) target = $region8
    $region5: #{encode_image.13} parent=1 // loop_body
      %s24 = ssub.s32 %s19, 1
      %s25 = ssub.s32 %s19, 2
      %s35 = sadd.s32 1, %s28
      %p36 = scmp.ge.s32.totalorder %s35, 1
      %s37 = scalar_select %p36, 0, %s35
      %s38 = sadd.s32 1, %s27
      %s39 = scalar_select %p36, %s38, %s27
      %p40 = scmp.ge.s32.totalorder %s39, 2
      %s41 = scalar_select %p40, 0, %s39
      %s42 = sadd.s32 1, %s26
      %s43 = scalar_select %p40, %s42, %s26
      %p44 = scmp.ge.s32.totalorder %s43, 1
      %s45 = scalar_select %p44, 0, %s43
      %s46 = ssub.s32 %s26, %s45
      %s47 = ssub.s32 %s28, %s37
      %s48 = sor.u32 %s46, %s47
      %p49 = scmp.eq.s32.totalorder %s48, 0
      %s51 = sadd.s32 %s50, 1
      %s52 = scalar_select %p49, %s50, %s51
      %p55 = pneg %p49
      %p56 = scmp.eq.s32.totalorder %s19, 1
      %p57 = por %p55, %p56
      %p58 = scmp.ne.s32.totalorder %s50, %s53
      %p59 = scmp.eq.s32.totalorder %s19, 0
      %p60 = por %p58, %p59
      %p61 = scmp.ne.s32.totalorder %s50, %s53
      %p62 = scmp.eq.s32.totalorder %s24, 1
      %p63 = por %p61, %p62
      %p64 = scmp.ne.s32.totalorder %s53, %s54
      %p65 = scmp.eq.s32.totalorder %s24, 0
      %p66 = por %p64, %p65
      %p67 = scmp.ne.s32.totalorder %s53, %s54
      %p68 = scmp.eq.s32.totalorder %s25, 1
      %p69 = por %p67, %p68
      %p71 = scmp.ne.s32.totalorder %s54, %s70
      %p72 = scmp.eq.s32.totalorder %s25, 0
      %p73 = por %p71, %p72
      %s74 = ssub.s32 %s28, %s37
      %s75 = ssub.s32 %s27, %s41
      %s76 = sor.u32 %s74, %s75
      %p77 = scmp.eq.s32.totalorder %s76, 0
      %s79 = sadd.s32 %s78, 1
      %s80 = scalar_select %p77, %s78, %s79
      %p83 = pneg %p77
      %p84 = scmp.eq.s32.totalorder %s19, 1
      %p85 = por %p83, %p84
      %p86 = scmp.ne.s32.totalorder %s78, %s81
      %p87 = scmp.eq.s32.totalorder %s19, 0
      %p88 = por %p86, %p87
      %p89 = scmp.ne.s32.totalorder %s78, %s81
      %p90 = scmp.eq.s32.totalorder %s24, 1
      %p91 = por %p89, %p90
      %p92 = scmp.ne.s32.totalorder %s81, %s82
      %p93 = scmp.eq.s32.totalorder %s24, 0
      %p94 = por %p92, %p93
      %p95 = scmp.ne.s32.totalorder %s81, %s82
      %p96 = scmp.eq.s32.totalorder %s25, 1
      %p97 = por %p95, %p96
      %p99 = scmp.ne.s32.totalorder %s82, %s98
      %p100 = scmp.eq.s32.totalorder %s25, 0
      %p101 = por %p99, %p100
      %s102 = ssub.s32 %s27, %s41
      %p103 = scmp.eq.s32.totalorder %s102, 0
      %s105 = sadd.s32 %s104, 1
      %s106 = scalar_select %p103, %s104, %s105
      %p109 = pneg %p103
      %p110 = scmp.eq.s32.totalorder %s19, 1
      %p111 = por %p109, %p110
      %p112 = scmp.ne.s32.totalorder %s104, %s107
      %p113 = scmp.eq.s32.totalorder %s19, 0
      %p114 = por %p112, %p113
      %p115 = scmp.ne.s32.totalorder %s104, %s107
      %p116 = scmp.eq.s32.totalorder %s24, 1
      %p117 = por %p115, %p116
      %p118 = scmp.ne.s32.totalorder %s107, %s108
      %p119 = scmp.eq.s32.totalorder %s24, 0
      %p120 = por %p118, %p119
      %p121 = scmp.ne.s32.totalorder %s107, %s108
      %p122 = scmp.eq.s32.totalorder %s25, 1
      %p123 = por %p121, %p122
      %p125 = scmp.ne.s32.totalorder %s108, %s124
      %p126 = scmp.eq.s32.totalorder %s25, 0
      %p127 = por %p125, %p126
      %s128 = ssub.s32 %s28, %s37
      %p129 = scmp.eq.s32.totalorder %s128, 0
      %s131 = sadd.s32 %s130, 1
      %s132 = scalar_select %p129, %s130, %s131
      %p135 = pneg %p129
      %p136 = scmp.eq.s32.totalorder %s19, 1
      %p137 = por %p135, %p136
      %p138 = scmp.ne.s32.totalorder %s130, %s133
      %p139 = scmp.eq.s32.totalorder %s19, 0
      %p140 = por %p138, %p139
      %p141 = scmp.ne.s32.totalorder %s130, %s133
      %p142 = scmp.eq.s32.totalorder %s24, 1
      %p143 = por %p141, %p142
      %p144 = scmp.ne.s32.totalorder %s133, %s134
      %p145 = scmp.eq.s32.totalorder %s24, 0
      %p146 = por %p144, %p145
      %p147 = scmp.ne.s32.totalorder %s133, %s134
      %p148 = scmp.eq.s32.totalorder %s25, 1
      %p149 = por %p147, %p148
      %p151 = scmp.ne.s32.totalorder %s134, %s150
      %p152 = scmp.eq.s32.totalorder %s25, 0
      %p153 = por %p151, %p152
      %s154 = ssub.s32 %s28, %s37
      %p155 = scmp.eq.s32.totalorder %s154, 0
      %s157 = sadd.s32 %s156, 1
      %s158 = scalar_select %p155, %s156, %s157
      %p161 = pneg %p155
      %p162 = scmp.eq.s32.totalorder %s19, 1
      %p163 = por %p161, %p162
      %p164 = scmp.ne.s32.totalorder %s156, %s159
      %p165 = scmp.eq.s32.totalorder %s19, 0
      %p166 = por %p164, %p165
      %p167 = scmp.ne.s32.totalorder %s156, %s159
      %p168 = scmp.eq.s32.totalorder %s24, 1
      %p169 = por %p167, %p168
      %p170 = scmp.ne.s32.totalorder %s159, %s160
      %p171 = scmp.eq.s32.totalorder %s24, 0
      %p172 = por %p170, %p171
      %p173 = scmp.ne.s32.totalorder %s159, %s160
      %p174 = scmp.eq.s32.totalorder %s25, 1
      %p175 = por %p173, %p174
      %p177 = scmp.ne.s32.totalorder %s160, %s176
      %p178 = scmp.eq.s32.totalorder %s25, 0
      %p179 = por %p177, %p178
      %s180 = ssub.s32 %s26, %s45
      %s181 = ssub.s32 %s27, %s41
      %s182 = sor.u32 %s180, %s181
      %p183 = scmp.eq.s32.totalorder %s182, 0
      %s185 = sadd.s32 %s184, 1
      %s186 = scalar_select %p183, %s184, %s185
      %p189 = pneg %p183
      %p190 = scmp.eq.s32.totalorder %s19, 1
      %p191 = por %p189, %p190
      %p192 = scmp.ne.s32.totalorder %s184, %s187
      %p193 = scmp.eq.s32.totalorder %s19, 0
      %p194 = por %p192, %p193
      %p195 = scmp.ne.s32.totalorder %s184, %s187
      %p196 = scmp.eq.s32.totalorder %s24, 1
      %p197 = por %p195, %p196
      %p198 = scmp.ne.s32.totalorder %s187, %s188
      %p199 = scmp.eq.s32.totalorder %s24, 0
      %p200 = por %p198, %p199
      %p201 = scmp.ne.s32.totalorder %s187, %s188
      %p202 = scmp.eq.s32.totalorder %s25, 1
      %p203 = por %p201, %p202
      %p205 = scmp.ne.s32.totalorder %s188, %s204
      %p206 = scmp.eq.s32.totalorder %s25, 0
      %p207 = por %p205, %p206
      %p208 = scmp.le.s32.totalorder 1, %s19
      %p209 = scmp.lt.s32.totalorder %s19, 3
      %p210 = pnand %p208, %p209
      %p211 = pneg %p210
      // Predicated region
      $region9: #{encode_image.13} parent=5 // pred_check
        _
      $region10: #{encode_image.13} parent=5 // pred_check_branch
        %213 = sbr.rel (%p210) target = $region12
      $region11: #{encode_image.13} parent=5 // pred_region
        %s214 = ssub.s32 %s19, 1
        // Predicated region
        $region13: #{encode_image.13} parent=11 // pred_check
          %p215 = pneg %p66
        $region14: #{encode_image.13} parent=11 // pred_check_branch
          %217 = sbr.rel (%p215) target = $region16
        $region15: #{encode_image.13} parent=11 // pred_region
          %s218 = smul.u32 2, %s29
          %s219 = smul.u32 2, %s31
          %s221 = ssub.s32 256, 256
          %222 = vsyncadd [#allocation4], %s221
          %s223 = smul.addr %s218, 2
          %s224 = sadd.s32 %s219, %s223
          %s225 = smul.addr %s224, 64
          %s226 = scalar_lea.hbm %s0, %s225
          %s227 = sshll.u32 [#allocation3], 4
          %s228 = int_to_ptr.vmem [resolvable:$true] %s227
          %233 = dma.hbm_to_vmem [thread:$0]  %s226, 256, %s228, [#allocation4], 128, 128, 8
        $region16: #{encode_image.13} parent=11 // pred_fallthru
          _
        // Predicated region
        $region17: #{encode_image.13} parent=11 // pred_check
          %p234 = pneg %p146
        $region18: #{encode_image.13} parent=11 // pred_check_branch
          %236 = sbr.rel (%p234) target = $region20
        $region19: #{encode_image.13} parent=11 // pred_region
          %s237 = smul.u32 2, %s31
          %s239 = ssub.s32 32, 32
          %240 = vsyncadd [#allocation10], %s239
          %s241 = smul.addr %s237, 16
          %s242 = scalar_lea.hbm %s3, %s241
          %s244 = sshll.u32 [#allocation9], 4
          %s245 = int_to_ptr.vmem [resolvable:$true] %s244
          %247 = dma.hbm_to_vmem [thread:$0]  %s242, 32, %s245, [#allocation10]
        $region20: #{encode_image.13} parent=11 // pred_fallthru
          _
        // Predicated region
        $region21: #{encode_image.13} parent=11 // pred_check
          %p248 = pneg %p172
        $region22: #{encode_image.13} parent=11 // pred_check_branch
          %250 = sbr.rel (%p248) target = $region24
        $region23: #{encode_image.13} parent=11 // pred_region
          %s251 = smul.u32 2, %s31
          %s253 = ssub.s32 32, 32
          %254 = vsyncadd [#allocation10], %s253
          %s255 = smul.addr %s251, 16
          %s256 = scalar_lea.hbm %s4, %s255
          %s258 = sshll.u32 [#allocation11], 4
          %s259 = int_to_ptr.vmem [resolvable:$true] %s258
          %261 = dma.hbm_to_vmem [thread:$0]  %s256, 32, %s259, [#allocation10]
        $region24: #{encode_image.13} parent=11 // pred_fallthru
          _
      $region12: #{encode_image.13} parent=5 // pred_fallthru
        _
      %p262 = scmp.lt.s32.totalorder %s19, 2
      // Predicated region
      $region25: #{encode_image.13} parent=5 // pred_check
        %p263 = pneg %p262
      $region26: #{encode_image.13} parent=5 // pred_check_branch
        %265 = sbr.rel (%p263) target = $region28
      $region27: #{encode_image.13} parent=5 // pred_region
        // Predicated region
        $region29: #{encode_image.13} parent=27 // pred_check
          %p266 = pneg %p88
        $region30: #{encode_image.13} parent=27 // pred_check_branch
          %268 = sbr.rel (%p266) target = $region32
        $region31: #{encode_image.13} parent=27 // pred_region
          %s269 = sand.u32 %s19, 1
          %s270 = scalar_lea.sflag [#allocation7], %s269
          %s271 = sand.u32 %s78, 1
          %s272 = smul.addr %s271, 384
          %s273 = scalar_lea.vmem [#allocation6], %s272
          %s274 = smul.u32 32, %s28
          %s275 = smul.u32 3, %s27
          %s277 = ssub.s32 6144, 6144
          %278 = vsyncadd %s270, %s277
          %s279 = smul.addr %s274, 6
          %s280 = sadd.s32 %s275, %s279
          %s281 = smul.addr %s280, 64
          %s282 = scalar_lea.hbm %s1, %s281
          %s283 = sshll.u32 %s273, 4
          %s284 = int_to_ptr.vmem [resolvable:$true] %s283
          %289 = dma.hbm_to_vmem [thread:$0]  %s282, 6144, %s284, %s270, 384, 192, 12
        $region32: #{encode_image.13} parent=27 // pred_fallthru
          _
        // Predicated region
        $region33: #{encode_image.13} parent=27 // pred_check
          %p290 = pneg %p114
        $region34: #{encode_image.13} parent=27 // pred_check_branch
          %292 = sbr.rel (%p290) target = $region36
        $region35: #{encode_image.13} parent=27 // pred_region
          %s293 = sand.u32 %s19, 1
          %s294 = scalar_lea.sflag [#allocation7], %s293
          %s295 = sand.u32 %s104, 1
          %s296 = smul.addr %s295, 3
          %s297 = scalar_lea.vmem [#allocation8], %s296
          %s298 = smul.u32 3, %s27
          %s300 = ssub.s32 48, 48
          %301 = vsyncadd %s294, %s300
          %s302 = smul.addr %s298, 16
          %s303 = scalar_lea.hbm %s2, %s302
          %s305 = sshll.u32 %s297, 4
          %s306 = int_to_ptr.vmem [resolvable:$true] %s305
          %308 = dma.hbm_to_vmem [thread:$0]  %s303, 48, %s306, %s294
        $region36: #{encode_image.13} parent=27 // pred_fallthru
          _
      $region28: #{encode_image.13} parent=5 // pred_fallthru
        _
      %p309 = scmp.le.s32.totalorder 1, %s19
      %p310 = scmp.lt.s32.totalorder %s19, 3
      %p311 = pnand %p309, %p310
      %p312 = pneg %p311
      // Predicated region
      $region37: #{encode_image.13} parent=5 // pred_check
        _
      $region38: #{encode_image.13} parent=5 // pred_check_branch
        %314 = sbr.rel (%p311) target = $region40
      $region39: #{encode_image.13} parent=5 // pred_region
        %s315 = ssub.s32 %s19, 1
        // Predicated region
        $region41: #{encode_image.13} parent=39 // pred_check
          %p316 = pneg %p66
        $region42: #{encode_image.13} parent=39 // pred_check_branch
          %318 = sbr.rel (%p316) target = $region44
        $region43: #{encode_image.13} parent=39 // pred_region
          %319 = dma.done [#allocation4], 256
        $region44: #{encode_image.13} parent=39 // pred_fallthru
          _
        %s320 = sand.u32 %s24, 1
        %s321 = scalar_lea.sflag [#allocation7], %s320
        %s322 = sand.u32 %s81, 1
        %s323 = smul.addr %s322, 384
        %s324 = scalar_lea.vmem [#allocation6], %s323
        // Predicated region
        $region45: #{encode_image.13} parent=39 // pred_check
          %p325 = pneg %p94
        $region46: #{encode_image.13} parent=39 // pred_check_branch
          %327 = sbr.rel (%p325) target = $region48
        $region47: #{encode_image.13} parent=39 // pred_region
          %328 = dma.done %s321, 6144
        $region48: #{encode_image.13} parent=39 // pred_fallthru
          _
        %s329 = sand.u32 %s24, 1
        %s330 = scalar_lea.sflag [#allocation7], %s329
        %s331 = sand.u32 %s107, 1
        %s332 = smul.addr %s331, 3
        %s333 = scalar_lea.vmem [#allocation8], %s332
        // Predicated region
        $region49: #{encode_image.13} parent=39 // pred_check
          %p334 = pneg %p120
        $region50: #{encode_image.13} parent=39 // pred_check_branch
          %336 = sbr.rel (%p334) target = $region52
        $region51: #{encode_image.13} parent=39 // pred_region
          %337 = dma.done %s330, 48
        $region52: #{encode_image.13} parent=39 // pred_fallthru
          _
        // Predicated region
        $region53: #{encode_image.13} parent=39 // pred_check
          %p338 = pneg %p146
        $region54: #{encode_image.13} parent=39 // pred_check_branch
          %340 = sbr.rel (%p338) target = $region56
        $region55: #{encode_image.13} parent=39 // pred_region
          %341 = dma.done [#allocation10], 32
        $region56: #{encode_image.13} parent=39 // pred_fallthru
          _
        // Predicated region
        $region57: #{encode_image.13} parent=39 // pred_check
          %p342 = pneg %p172
        $region58: #{encode_image.13} parent=39 // pred_check_branch
          %344 = sbr.rel (%p342) target = $region60
        $region59: #{encode_image.13} parent=39 // pred_region
          %345 = dma.done [#allocation10], 32
        $region60: #{encode_image.13} parent=39 // pred_fallthru
          _
        %p346 = pneg %p66
        %p347 = pneg %p63
        %s348 = sand.u32 %s24, 1
        %s349 = scalar_lea.sflag [#allocation7], %s348
        %s350 = sand.u32 %s81, 1
        %s351 = smul.addr %s350, 384
        %s352 = scalar_lea.vmem [#allocation6], %s351
        %p353 = pneg %p94
        %p354 = pneg %p91
        %s355 = sand.u32 %s24, 1
        %s356 = scalar_lea.sflag [#allocation7], %s355
        %s357 = sand.u32 %s107, 1
        %s358 = smul.addr %s357, 3
        %s359 = scalar_lea.vmem [#allocation8], %s358
        %p360 = pneg %p120
        %p361 = pneg %p117
        %p362 = pneg %p146
        %p363 = pneg %p143
        %p364 = pneg %p172
        %p365 = pneg %p169
        %p366 = pneg %p200
        %p367 = pneg %p197
        %s368 = sand.u32 %s187, 1
        %s369 = scalar_lea.sflag [#allocation5], %s368
        %s370 = sand.u32 %s187, 1
        %s371 = smul.addr %s370, 24
        %s372 = scalar_lea.vmem [#allocation12], %s371
        %s373 = smul.u32 2, %s29
        %s374 = smul.u32 2, %s31
        %s375 = smul.u32 32, %s31
        %s376 = smul.u32 3, %s30
        %s377 = smul.u32 3, %s30
        %s378 = smul.u32 2, %s31
        %s379 = smul.u32 2, %s31
        %s380 = smul.u32 2, %s29
        %s381 = smul.u32 3, %s30
        %p383 = scmp.eq.s32.totalorder %s30, 0
        // Predicated region
        $region61: #{encode_image.13} parent=39 // pred_check
          %p384 = pneg %p383
        $region62: #{encode_image.13} parent=39 // pred_check_branch
          %386 = sbr.rel (%p384) target = $region64
        $region63: #{encode_image.13} parent=39 // pred_region
          %v387 = vld [vmem:[#allocation3] sm:$0xff]
          %v388 = vld [vmem:[#allocation3 + $0x8] sm:$0x11]
          %v389 = vunpack.c.l.bf16 %v387
          %v390 = vunpack.c.h.bf16 %v387
          %v391 = vunpack.c.l.bf16 %v388
          %v392 = vunpack.c.h.bf16 %v388
          %v393 = vadd.f32 %v389, %v390
          %394 = vadd.xlane.f32.xlu0 %v393
          %v395 = vpop.xlane.xlu0 %394
          %vm396 = vcmask 1041408
          %v397 = vsel %vm396, %v391, 0.0
          %v398 = vsel %vm396, %v392, 0.0
          %v399 = vadd.f32 %v397, %v398
          %400 = vadd.xlane.f32.xlu0 %v399
          %v401 = vpop.xlane.xlu0 %400
          %v402 = vrcp.pop 256.0
          %v403 = vmul.f32 %v395, %v402
          %v404 = vmul.f32 %v401, %v402
          %v405 = vsub.f32 %v389, %v403
          %v406 = vsub.f32 %v390, %v403
          %v407 = vsub.f32 %v391, %v404
          %v408 = vsub.f32 %v392, %v404
          %v409 = vmul.f32 %v405, %v405
          %v410 = vmul.f32 %v406, %v406
          %v411 = vmul.f32 %v407, %v407
          %v412 = vmul.f32 %v408, %v408
          %v413 = vadd.f32 %v409, %v410
          %414 = vadd.xlane.f32.xlu0 %v413
          %v415 = vpop.xlane.xlu0 %414
          %v416 = vsel %vm396, %v411, 0.0
          %v417 = vsel %vm396, %v412, 0.0
          %v418 = vadd.f32 %v416, %v417
          %419 = vadd.xlane.f32.xlu0 %v418
          %v420 = vpop.xlane.xlu0 %419
          %v421 = vmul.f32 %v415, %v402
          %v422 = vmul.f32 %v420, %v402
          %v423 = vadd.f32 %v421, 1e-05
          %v424 = vadd.f32 %v422, 1e-05
          %v425 = vrsqrt.pop %v423
          %v426 = vrsqrt.pop %v424
          %v427 = vmul.f32 %v405, %v425
          %v428 = vmul.f32 %v406, %v425
          %v429 = vmul.f32 %v407, %v426
          %v430 = vmul.f32 %v408, %v426
          %v431 = vld [vmem:[#allocation9] sm:$0x3]
          %v433 = vlaneseq
          %v434 = vshrl.u32 %v433, 7
          %v435 = vsub.s32 0, %v434
          %v436 = vrot.slane %v431, %v435
          %v437 = vlaneseq
          %v438 = vshrl.u32 %v437, 7
          %v439 = vsub.s32 1, %v438
          %v440 = vrot.slane %v431, %v439
          %v443 = vmul.f32 %v427, %v436
          %v444 = vmul.f32 %v428, %v440
          %v445 = vmul.f32 %v429, %v436
          %v446 = vmul.f32 %v430, %v440
          %v447 = vld [vmem:[#allocation11] sm:$0x3]
          %v449 = vlaneseq
          %v450 = vshrl.u32 %v449, 7
          %v451 = vsub.s32 0, %v450
          %v452 = vrot.slane %v447, %v451
          %v453 = vlaneseq
          %v454 = vshrl.u32 %v453, 7
          %v455 = vsub.s32 1, %v454
          %v456 = vrot.slane %v447, %v455
          %v459 = vadd.f32 %v443, %v452
          %v460 = vadd.f32 %v444, %v456
          %v461 = vadd.f32 %v445, %v452
          %v462 = vadd.f32 %v446, %v456
          %v463 = vpack.c.bf16 %v461, %v459
          %v464 = vpack.c.bf16 %v462, %v460
          %v467 = vunpack.c.l.b16 %v463
          %v468 = vunpack.c.l.b16 %v464
          %v469 = vunpack.c.h.b16 %v463
          %v470 = vunpack.c.h.b16 %v464
          %v471 = vpack.c.b16 %v468, %v467
          %v472 = vpack.c.b16 %v470, %v469
          %475 = vst [vmem:[#allocation2] sm:$0xff] %v471
          %476 = vst [vmem:[#allocation2 + $0x8] sm:$0x11] %v472
        $region64: #{encode_image.13} parent=39 // pred_fallthru
          _
        %v477 = vld [vmem:[#allocation2] sm:$0xff]
        %v478 = vld [vmem:[#allocation2 + $0x8] sm:$0x11]
        %v479 = vld [vmem:[%s324] sm:$0xff]
        %v480 = vld [vmem:[%s324 + $0x8] sm:$0xf]
        %v481 = vld [vmem:[%s324 + $0xc] sm:$0xff]
        %v482 = vld [vmem:[%s324 + $0x14] sm:$0xf]
        %v483 = vld [vmem:[%s324 + $0x18] sm:$0xff]
        %v484 = vld [vmem:[%s324 + $0x20] sm:$0xf]
        %v485 = vld [vmem:[%s324 + $0x24] sm:$0xff]
        %v486 = vld [vmem:[%s324 + $0x2c] sm:$0xf]
        %v487 = vld [vmem:[%s324 + $0x30] sm:$0xff]
        %v488 = vld [vmem:[%s324 + $0x38] sm:$0xf]
        %v489 = vld [vmem:[%s324 + $0x3c] sm:$0xff]
        %v490 = vld [vmem:[%s324 + $0x44] sm:$0xf]
        %v491 = vld [vmem:[%s324 + $0x48] sm:$0xff]
        %v492 = vld [vmem:[%s324 + $0x50] sm:$0xf]
        %v493 = vld [vmem:[%s324 + $0x54] sm:$0xff]
        %v494 = vld [vmem:[%s324 + $0x5c] sm:$0xf]
        %v495 = vld [vmem:[%s324 + $0x60] sm:$0xff]
        %v496 = vld [vmem:[%s324 + $0x68] sm:$0xf]
        %v497 = vld [vmem:[%s324 + $0x6c] sm:$0xff]
        %v498 = vld [vmem:[%s324 + $0x74] sm:$0xf]
        %v499 = vld [vmem:[%s324 + $0x78] sm:$0xff]
        %v500 = vld [vmem:[%s324 + $0x80] sm:$0xf]
        %v501 = vld [vmem:[%s324 + $0x84] sm:$0xff]
        %v502 = vld [vmem:[%s324 + $0x8c] sm:$0xf]
        %v503 = vld [vmem:[%s324 + $0x90] sm:$0xff]
        %v504 = vld [vmem:[%s324 + $0x98] sm:$0xf]
        %v505 = vld [vmem:[%s324 + $0x9c] sm:$0xff]
        %v506 = vld [vmem:[%s324 + $0xa4] sm:$0xf]
        %v507 = vld [vmem:[%s324 + $0xa8] sm:$0xff]
        %v508 = vld [vmem:[%s324 + $0xb0] sm:$0xf]
        %v509 = vld [vmem:[%s324 + $0xb4] sm:$0xff]
        %v510 = vld [vmem:[%s324 + $0xbc] sm:$0xf]
        %v511 = vld [vmem:[%s324 + $0xc0] sm:$0xff]
        %v512 = vld [vmem:[%s324 + $0xc8] sm:$0xf]
        %v513 = vld [vmem:[%s324 + $0xcc] sm:$0xff]
        %v514 = vld [vmem:[%s324 + $0xd4] sm:$0xf]
        %v515 = vld [vmem:[%s324 + $0xd8] sm:$0xff]
        %v516 = vld [vmem:[%s324 + $0xe0] sm:$0xf]
        %v517 = vld [vmem:[%s324 + $0xe4] sm:$0xff]
        %v518 = vld [vmem:[%s324 + $0xec] sm:$0xf]
        %v519 = vld [vmem:[%s324 + $0xf0] sm:$0xff]
        %v520 = vld [vmem:[%s324 + $0xf8] sm:$0xf]
        %v521 = vld [vmem:[%s324 + $0xfc] sm:$0xff]
        %v522 = vld [vmem:[%s324 + $0x104] sm:$0xf]
        %v523 = vld [vmem:[%s324 + $0x108] sm:$0xff]
        %v524 = vld [vmem:[%s324 + $0x110] sm:$0xf]
        %v525 = vld [vmem:[%s324 + $0x114] sm:$0xff]
        %v526 = vld [vmem:[%s324 + $0x11c] sm:$0xf]
        %v527 = vld [vmem:[%s324 + $0x120] sm:$0xff]
        %v528 = vld [vmem:[%s324 + $0x128] sm:$0xf]
        %v529 = vld [vmem:[%s324 + $0x12c] sm:$0xff]
        %v530 = vld [vmem:[%s324 + $0x134] sm:$0xf]
        %v531 = vld [vmem:[%s324 + $0x138] sm:$0xff]
        %v532 = vld [vmem:[%s324 + $0x140] sm:$0xf]
        %v533 = vld [vmem:[%s324 + $0x144] sm:$0xff]
        %v534 = vld [vmem:[%s324 + $0x14c] sm:$0xf]
        %v535 = vld [vmem:[%s324 + $0x150] sm:$0xff]
        %v536 = vld [vmem:[%s324 + $0x158] sm:$0xf]
        %v537 = vld [vmem:[%s324 + $0x15c] sm:$0xff]
        %v538 = vld [vmem:[%s324 + $0x164] sm:$0xf]
        %v539 = vld [vmem:[%s324 + $0x168] sm:$0xff]
        %v540 = vld [vmem:[%s324 + $0x170] sm:$0xf]
        %v541 = vld [vmem:[%s324 + $0x174] sm:$0xff]
        %v542 = vld [vmem:[%s324 + $0x17c] sm:$0xf]
        %v543 = vld [vmem:[%s333] sm:$0x7]
        %v545 = vlaneseq
        %v546 = vshrl.u32 %v545, 7
        %v547 = vsub.s32 0, %v546
        %v548 = vrot.slane %v543, %v547
        %v549 = vlaneseq
        %v550 = vshrl.u32 %v549, 7
        %v551 = vsub.s32 1, %v550
        %v552 = vrot.slane %v543, %v551
        %v553 = vlaneseq
        %v554 = vshrl.u32 %v553, 7
        %v555 = vsub.s32 2, %v554
        %v556 = vrot.slane %v543, %v555
        %v562 = vunpack.c.l.b16 %v477
        %v563 = vunpack.c.h.b16 %v477
        %v564 = vunpack.c.l.b16 %v478
        %v565 = vunpack.c.h.b16 %v478
        %v566 = vpack.c.b16 %v564, %v562
        %v567 = vpack.c.b16 %v565, %v563
        %v634 = vunpack.c.l.b16 %v479
        %v635 = vunpack.c.h.b16 %v479
        %v636 = vunpack.c.l.b16 %v480
        %v637 = vunpack.c.l.b16 %v481
        %v638 = vunpack.c.h.b16 %v481
        %v639 = vunpack.c.l.b16 %v482
        %v640 = vunpack.c.l.b16 %v483
        %v641 = vunpack.c.h.b16 %v483
        %v642 = vunpack.c.l.b16 %v484
        %v643 = vunpack.c.l.b16 %v485
        %v644 = vunpack.c.h.b16 %v485
        %v645 = vunpack.c.l.b16 %v486
        %v646 = vunpack.c.l.b16 %v487
        %v647 = vunpack.c.h.b16 %v487
        %v648 = vunpack.c.l.b16 %v488
        %v649 = vunpack.c.l.b16 %v489
        %v650 = vunpack.c.h.b16 %v489
        %v651 = vunpack.c.l.b16 %v490
        %v652 = vunpack.c.l.b16 %v491
        %v653 = vunpack.c.h.b16 %v491
        %v654 = vunpack.c.l.b16 %v492
        %v655 = vunpack.c.l.b16 %v493
        %v656 = vunpack.c.h.b16 %v493
        %v657 = vunpack.c.l.b16 %v494
        %v658 = vunpack.c.l.b16 %v495
        %v659 = vunpack.c.h.b16 %v495
        %v660 = vunpack.c.l.b16 %v496
        %v661 = vunpack.c.l.b16 %v497
        %v662 = vunpack.c.h.b16 %v497
        %v663 = vunpack.c.l.b16 %v498
        %v664 = vunpack.c.l.b16 %v499
        %v665 = vunpack.c.h.b16 %v499
        %v666 = vunpack.c.l.b16 %v500
        %v667 = vunpack.c.l.b16 %v501
        %v668 = vunpack.c.h.b16 %v501
        %v669 = vunpack.c.l.b16 %v502
        %v670 = vunpack.c.l.b16 %v503
        %v671 = vunpack.c.h.b16 %v503
        %v672 = vunpack.c.l.b16 %v504
        %v673 = vunpack.c.l.b16 %v505
        %v674 = vunpack.c.h.b16 %v505
        %v675 = vunpack.c.l.b16 %v506
        %v676 = vunpack.c.l.b16 %v507
        %v677 = vunpack.c.h.b16 %v507
        %v678 = vunpack.c.l.b16 %v508
        %v679 = vunpack.c.l.b16 %v509
        %v680 = vunpack.c.h.b16 %v509
        %v681 = vunpack.c.l.b16 %v510
        %v682 = vunpack.c.l.b16 %v511
        %v683 = vunpack.c.h.b16 %v511
        %v684 = vunpack.c.l.b16 %v512
        %v685 = vunpack.c.l.b16 %v513
        %v686 = vunpack.c.h.b16 %v513
        %v687 = vunpack.c.l.b16 %v514
        %v688 = vunpack.c.l.b16 %v515
        %v689 = vunpack.c.h.b16 %v515
        %v690 = vunpack.c.l.b16 %v516
        %v691 = vunpack.c.l.b16 %v517
        %v692 = vunpack.c.h.b16 %v517
        %v693 = vunpack.c.l.b16 %v518
        %v694 = vunpack.c.l.b16 %v519
        %v695 = vunpack.c.h.b16 %v519
        %v696 = vunpack.c.l.b16 %v520
        %v697 = vunpack.c.l.b16 %v521
        %v698 = vunpack.c.h.b16 %v521
        %v699 = vunpack.c.l.b16 %v522
        %v700 = vunpack.c.l.b16 %v523
        %v701 = vunpack.c.h.b16 %v523
        %v702 = vunpack.c.l.b16 %v524
        %v703 = vunpack.c.l.b16 %v525
        %v704 = vunpack.c.h.b16 %v525
        %v705 = vunpack.c.l.b16 %v526
        %v706 = vunpack.c.l.b16 %v527
        %v707 = vunpack.c.h.b16 %v527
        %v708 = vunpack.c.l.b16 %v528
        %v709 = vunpack.c.l.b16 %v529
        %v710 = vunpack.c.h.b16 %v529
        %v711 = vunpack.c.l.b16 %v530
        %v712 = vunpack.c.l.b16 %v531
        %v713 = vunpack.c.h.b16 %v531
        %v714 = vunpack.c.l.b16 %v532
        %v715 = vunpack.c.l.b16 %v533
        %v716 = vunpack.c.h.b16 %v533
        %v717 = vunpack.c.l.b16 %v534
        %v718 = vunpack.c.l.b16 %v535
        %v719 = vunpack.c.h.b16 %v535
        %v720 = vunpack.c.l.b16 %v536
        %v721 = vunpack.c.l.b16 %v537
        %v722 = vunpack.c.h.b16 %v537
        %v723 = vunpack.c.l.b16 %v538
        %v724 = vunpack.c.l.b16 %v539
        %v725 = vunpack.c.h.b16 %v539
        %v726 = vunpack.c.l.b16 %v540
        %v727 = vunpack.c.l.b16 %v541
        %v728 = vunpack.c.h.b16 %v541
        %v729 = vunpack.c.l.b16 %v542
        %v730 = vpack.c.b16 %v637, %v634
        %v731 = vpack.c.b16 %v638, %v635
        %v732 = vpack.c.b16 %v639, %v636
        %v733 = vpack.c.b16 %v643, %v640
        %v734 = vpack.c.b16 %v644, %v641
        %v735 = vpack.c.b16 %v645, %v642
        %v736 = vpack.c.b16 %v649, %v646
        %v737 = vpack.c.b16 %v650, %v647
        %v738 = vpack.c.b16 %v651, %v648
        %v739 = vpack.c.b16 %v655, %v652
        %v740 = vpack.c.b16 %v656, %v653
        %v741 = vpack.c.b16 %v657, %v654
        %v742 = vpack.c.b16 %v661, %v658
        %v743 = vpack.c.b16 %v662, %v659
        %v744 = vpack.c.b16 %v663, %v660
        %v745 = vpack.c.b16 %v667, %v664
        %v746 = vpack.c.b16 %v668, %v665
        %v747 = vpack.c.b16 %v669, %v666
        %v748 = vpack.c.b16 %v673, %v670
        %v749 = vpack.c.b16 %v674, %v671
        %v750 = vpack.c.b16 %v675, %v672
        %v751 = vpack.c.b16 %v679, %v676
        %v752 = vpack.c.b16 %v680, %v677
        %v753 = vpack.c.b16 %v681, %v678
        %v754 = vpack.c.b16 %v685, %v682
        %v755 = vpack.c.b16 %v686, %v683
        %v756 = vpack.c.b16 %v687, %v684
        %v757 = vpack.c.b16 %v691, %v688
        %v758 = vpack.c.b16 %v692, %v689
        %v759 = vpack.c.b16 %v693, %v690
        %v760 = vpack.c.b16 %v697, %v694
        %v761 = vpack.c.b16 %v698, %v695
        %v762 = vpack.c.b16 %v699, %v696
        %v763 = vpack.c.b16 %v703, %v700
        %v764 = vpack.c.b16 %v704, %v701
        %v765 = vpack.c.b16 %v705, %v702
        %v766 = vpack.c.b16 %v709, %v706
        %v767 = vpack.c.b16 %v710, %v707
        %v768 = vpack.c.b16 %v711, %v708
        %v769 = vpack.c.b16 %v715, %v712
        %v770 = vpack.c.b16 %v716, %v713
        %v771 = vpack.c.b16 %v717, %v714
        %v772 = vpack.c.b16 %v721, %v718
        %v773 = vpack.c.b16 %v722, %v719
        %v774 = vpack.c.b16 %v723, %v720
        %v775 = vpack.c.b16 %v727, %v724
        %v776 = vpack.c.b16 %v728, %v725
        %v777 = vpack.c.b16 %v729, %v726
        %826 = vmatprep.subr.bf16.mxu0 %v731
        %827 = vmatpush1.bf16.msra.mxu0 %v730
        %828 = vmatprep.subr.bf16.mxu0 %v734
        %829 = vmatpush1.bf16.msra.mxu0 %v733
        %830 = vmatprep.subr.bf16.mxu0 %v737
        %831 = vmatpush1.bf16.msra.mxu0 %v736
        %832 = vmatprep.subr.bf16.mxu0 %v740
        %833 = vmatpush1.bf16.msra.mxu0 %v739
        %834 = vmatprep.subr.bf16.mxu0 %v743
        %835 = vmatpush1.bf16.msra.mxu0 %v742
        %836 = vmatprep.subr.bf16.mxu0 %v746
        %837 = vmatpush1.bf16.msra.mxu0 %v745
        %838 = vmatprep.subr.bf16.mxu0 %v749
        %839 = vmatpush1.bf16.msra.mxu0 %v748
        %840 = vmatprep.subr.bf16.mxu0 %v752
        %841 = vmatpush1.bf16.msra.mxu0 %v751
        %842 = vmatprep.subr.bf16.mxu0 %v755
        %843 = vmatpush1.bf16.msra.mxu0 %v754
        %844 = vmatprep.subr.bf16.mxu0 %v758
        %845 = vmatpush1.bf16.msra.mxu0 %v757
        %846 = vmatprep.subr.bf16.mxu0 %v761
        %847 = vmatpush1.bf16.msra.mxu0 %v760
        %848 = vmatprep.subr.bf16.mxu0 %v764
        %849 = vmatpush1.bf16.msra.mxu0 %v763
        %850 = vmatprep.subr.bf16.mxu0 %v767
        %851 = vmatpush1.bf16.msra.mxu0 %v766
        %852 = vmatprep.subr.bf16.mxu0 %v770
        %853 = vmatpush1.bf16.msra.mxu0 %v769
        %854 = vmatprep.subr.bf16.mxu0 %v773
        %855 = vmatpush1.bf16.msra.mxu0 %v772
        %856 = vmatprep.subr.bf16.mxu0 %v776
        %857 = vmatpush1.bf16.msra.mxu0 %v775
        %858 = vmatprep.mubr.bf16.mxu0 %v567
        %859 = vmatmul.mubr.bf16.gmra.mrb[0].mxu0 %v566
        %v860 = vpop.f32.mrb[0].mxu0
        %v861 = vadd.f32 %v548, %v860
        %v862 = vpop.f32.mrb[0].mxu0
        %v863 = vadd.f32 %v552, %v862
        %v864 = vpop.f32.mrb[0].mxu0
        %v865 = vadd.f32 %v548, %v864
        %v866 = vpop.f32.mrb[0].mxu0
        %v867 = vadd.f32 %v552, %v866
        %868 = vdwg.mxu0
        %869 = vmatprep.subr.bf16.mxu0 0
        %870 = vmatpush1.bf16.msra.mxu0 %v732
        %871 = vmatprep.subr.bf16.mxu0 0
        %872 = vmatpush1.bf16.msra.mxu0 %v735
        %873 = vmatprep.subr.bf16.mxu0 0
        %874 = vmatpush1.bf16.msra.mxu0 %v738
        %875 = vmatprep.subr.bf16.mxu0 0
        %876 = vmatpush1.bf16.msra.mxu0 %v741
        %877 = vmatprep.subr.bf16.mxu0 0
        %878 = vmatpush1.bf16.msra.mxu0 %v744
        %879 = vmatprep.subr.bf16.mxu0 0
        %880 = vmatpush1.bf16.msra.mxu0 %v747
        %881 = vmatprep.subr.bf16.mxu0 0
        %882 = vmatpush1.bf16.msra.mxu0 %v750
        %883 = vmatprep.subr.bf16.mxu0 0
        %884 = vmatpush1.bf16.msra.mxu0 %v753
        %885 = vmatprep.subr.bf16.mxu0 0
        %886 = vmatpush1.bf16.msra.mxu0 %v756
        %887 = vmatprep.subr.bf16.mxu0 0
        %888 = vmatpush1.bf16.msra.mxu0 %v759
        %889 = vmatprep.subr.bf16.mxu0 0
        %890 = vmatpush1.bf16.msra.mxu0 %v762
        %891 = vmatprep.subr.bf16.mxu0 0
        %892 = vmatpush1.bf16.msra.mxu0 %v765
        %893 = vmatprep.subr.bf16.mxu0 0
        %894 = vmatpush1.bf16.msra.mxu0 %v768
        %895 = vmatprep.subr.bf16.mxu0 0
        %896 = vmatpush1.bf16.msra.mxu0 %v771
        %897 = vmatprep.subr.bf16.mxu0 0
        %898 = vmatpush1.bf16.msra.mxu0 %v774
        %899 = vmatprep.subr.bf16.mxu0 0
        %900 = vmatpush1.bf16.msra.mxu0 %v777
        %901 = vmatprep.mubr.bf16.mxu0 %v567
        %902 = vmatmul.mubr.bf16.gmra.mrb[0].mxu0 %v566
        %v903 = vpop.f32.mrb[0].mxu0
        %v904 = vadd.f32 %v556, %v903
        %v905 = vpop.f32.mrb[0].mxu0
        %v906 = vpop.f32.mrb[0].mxu0
        %v907 = vadd.f32 %v556, %v906
        %v908 = vpop.f32.mrb[0].mxu0
        %909 = vdwg.mxu0
        %v910 = vpack.c.bf16 %v865, %v861
        %v911 = vpack.c.bf16 %v867, %v863
        %v912 = vpack.c.bf16 %v907, %v904
        %v916 = vunpack.c.l.b16 %v910
        %v917 = vunpack.c.l.b16 %v911
        %v918 = vunpack.c.l.b16 %v912
        %v919 = vunpack.c.h.b16 %v910
        %v920 = vunpack.c.h.b16 %v911
        %v921 = vunpack.c.h.b16 %v912
        %v922 = vpack.c.b16 %v917, %v916
        %v923 = vpack.c.b16 %v918, %v918
        %v924 = vpack.c.b16 %v920, %v919
        %v925 = vpack.c.b16 %v921, %v921
        %930 = vst [vmem:[%s372] sm:$0xff] %v922
        %931 = vst [vmem:[%s372 + $0x8] sm:$0xf] %v923
        %932 = vst [vmem:[%s372 + $0xc] sm:$0x11] %v924
        %933 = vst [vmem:[%s372 + $0x14] sm:$0x1] %v925
        %s934 = sand.u32 %s187, 1
        %s935 = scalar_lea.sflag [#allocation5], %s934
        %s936 = sand.u32 %s187, 1
        %s937 = smul.addr %s936, 24
        %s938 = scalar_lea.vmem [#allocation12], %s937
        // Predicated region
        $region65: #{encode_image.13} parent=39 // pred_check
          %p939 = pneg %p197
        $region66: #{encode_image.13} parent=39 // pred_check_branch
          %941 = sbr.rel (%p939) target = $region68
        $region67: #{encode_image.13} parent=39 // pred_region
          %s942 = smul.u32 2, %s29
          %s943 = smul.u32 3, %s30
          %s945 = ssub.s32 384, 384
          %946 = vsyncadd %s935, %s945
          %s947 = smul.addr %s942, 6
          %s948 = sadd.s32 %s943, %s947
          %s949 = smul.addr %s948, 64
          %s950 = scalar_lea.hbm %s5, %s949
          %s951 = sshll.u32 %s938, 4
          %s952 = int_to_ptr.vmem [resolvable:$true] %s951
          %957 = dma.vmem_to_hbm [thread:$0]  %s952, 384, %s950, %s935, 192, 384, 12
        $region68: #{encode_image.13} parent=39 // pred_fallthru
          _
      $region40: #{encode_image.13} parent=5 // pred_fallthru
        _
      %p958 = scmp.le.s32.totalorder 2, %s19
      // Predicated region
      $region69: #{encode_image.13} parent=5 // pred_check
        %p959 = pneg %p958
      $region70: #{encode_image.13} parent=5 // pred_check_branch
        %961 = sbr.rel (%p959) target = $region72
      $region71: #{encode_image.13} parent=5 // pred_region
        %s962 = ssub.s32 %s19, 2
        // Predicated region
        $region73: #{encode_image.13} parent=71 // pred_check
          %p963 = pneg %p203
        $region74: #{encode_image.13} parent=71 // pred_check_branch
          %965 = sbr.rel (%p963) target = $region76
        $region75: #{encode_image.13} parent=71 // pred_region
          %s966 = sand.u32 %s188, 1
          %s967 = scalar_lea.sflag [#allocation5], %s966
          %s968 = sand.u32 %s188, 1
          %s969 = smul.addr %s968, 24
          %s970 = scalar_lea.vmem [#allocation12], %s969
          %971 = dma.done %s967, 384
        $region76: #{encode_image.13} parent=71 // pred_fallthru
          _
      $region72: #{encode_image.13} parent=5 // pred_fallthru
        _
    $region6: #{encode_image.13} parent=1 // loop_footer
      %s23 = sadd.s32 1, %s19
    $region7: #{encode_image.13} parent=1 // loop_footer_branch
      %18 = sbr.rel target = $region3
    $region8: #{encode_image.13} parent=1 // loop_exit
      _
    %972 = vsyncpa [#allocation4], 1
    %s973 = scalar_lea.sflag [#allocation4], 1
    %974 = vsyncpa %s973, 1
    %975 = vsyncpa [#allocation7], 1
    %s976 = scalar_lea.sflag [#allocation7], 1
    %977 = vsyncpa %s976, 1
    %978 = vsyncpa [#allocation10], 1
    %979 = vsyncpa [#allocation5], 1
    %s980 = scalar_lea.sflag [#allocation5], 1
    %981 = vsyncpa %s980, 1

// kernel: encode_image.16
$region0: #{encode_image.16}
  #allocation0 [shape = 'u32[]', space=smem, size = 0x4, offset = 0x4, fixed_abs, tag = 'smem constant byte address 0x4 - core index']
  #allocation1 [shape = 'u32[144,128]{1,0:T(1,128)}', space=vmem, size = 0x12000, scoped, tag = 'internal scratch']
  #allocation2 [shape = 'f32[10,256]{1,0:T(8,128)}', space=vmem, size = 0x4000, scoped, tag = 'scratch operand']
  %s0 = inlined_call_operand.hbm [shape: bf16[10,1024], index: 0, kind: input, shape index: {}]
  %s1 = inlined_call_operand.hbm [shape: bf16[1024,256], index: 1, kind: input, shape index: {}]
  %s2 = inlined_call_operand.hbm [shape: f32[1,256], index: 2, kind: input, shape index: {}]
  %s3 = inlined_call_operand.hbm [shape: bf16[10,256], index: 3, kind: input, shape index: {}]
  %s4 = inlined_call_operand.hbm [shape: bf16[10,256], index: 4, kind: output, shape index: {}]
  %s5 = sld [smem:[#allocation0]]
  $region73: #{encode_image.16} parent=0
    _
  %s7 = ssub.s32 1, %s5
  %s8 = scalar_select 0, %s7, %s5
  $region1: #{encode_image.16} parent=0
    #allocation3 [shape = 'u8[32768]{0}', space=vmem, size = 0x8000, scoped, tag = 'input window, operand 0']
    #allocation4 [shape = 's32[2]{0}', space=sflag, size = 0x8, scoped, tag = 'scoped memory for encode_image.16']
    #allocation5 [shape = 's32[2]{0}', space=sflag, size = 0x8, scoped, tag = 'scoped memory for encode_image.16']
    #allocation6 [shape = 'u8[524288]{0}', space=vmem, size = 0x80000, scoped, tag = 'input window, operand 1']
    #allocation7 [shape = 's32[2]{0}', space=sflag, size = 0x8, scoped, tag = 'scoped memory for encode_image.16']
    #allocation8 [shape = 'u8[1024]{0}', space=vmem, size = 0x400, scoped, tag = 'input window, operand 2, single buffered']
    #allocation9 [shape = 'u8[8192]{0}', space=vmem, size = 0x2000, scoped, tag = 'input window, operand 3, single buffered']
    #allocation10 [shape = 's32[1]{0}', space=sflag, size = 0x4, scoped, tag = 'scoped memory for encode_image.16']
    #allocation11 [shape = 'u8[8192]{0}', space=vmem, size = 0x2000, scoped, tag = 'output window, operand 0, single buffered']
    %9 = vsyncpa [#allocation4], 0
    %s10 = scalar_lea.sflag [#allocation4], 1
    %11 = vsyncpa %s10, 0
    %12 = vsyncpa [#allocation7], 0
    %s13 = scalar_lea.sflag [#allocation7], 1
    %14 = vsyncpa %s13, 0
    %15 = vsyncpa [#allocation10], 0
    %16 = vsyncpa [#allocation5], 0
    loop: start=0, step=1, limit=4
    $region2: #{encode_image.16} parent=1 // loop_pre_header
      _
    $region3: #{encode_image.16} parent=1 // loop_header
      %s18 = sphi 0, %s22
      %p19 = scmp.ge.s32.totalorder %s18, 4
      %s25 = sphi 0, %s44
      %s26 = sphi 0, %s40
      %s27 = sphi 0, %s36
      %s28 = sphi 0, %s25
      %s29 = sphi 0, %s26
      %s30 = sphi 0, %s27
      %s31 = sphi 0, %s28
      %s32 = sphi 0, %s29
      %s33 = sphi 0, %s30
      %s49 = sphi 0, %s51
      %s52 = sphi 0, %s49
      %s53 = sphi 0, %s52
      %s69 = sphi 0, %s53
      %s77 = sphi 0, %s79
      %s80 = sphi 0, %s77
      %s81 = sphi 0, %s80
      %s97 = sphi 0, %s81
      %s103 = sphi 0, %s105
      %s106 = sphi 0, %s103
      %s107 = sphi 0, %s106
      %s123 = sphi 0, %s107
      %s131 = sphi 0, %s133
      %s134 = sphi 0, %s131
      %s135 = sphi 0, %s134
      %s151 = sphi 0, %s135
      %s159 = sphi 0, %s161
      %s162 = sphi 0, %s159
      %s163 = sphi 0, %s162
      %s179 = sphi 0, %s163
    $region4: #{encode_image.16} parent=1 // loop_header_branch
      %21 = sbr.rel (%p19) target = $region8
    $region5: #{encode_image.16} parent=1 // loop_body
      %s23 = ssub.s32 %s18, 1
      %s24 = ssub.s32 %s18, 2
      %s34 = sadd.s32 1, %s27
      %p35 = scmp.ge.s32.totalorder %s34, 2
      %s36 = scalar_select %p35, 0, %s34
      %s37 = sadd.s32 1, %s26
      %s38 = scalar_select %p35, %s37, %s26
      %p39 = scmp.ge.s32.totalorder %s38, 1
      %s40 = scalar_select %p39, 0, %s38
      %s41 = sadd.s32 1, %s25
      %s42 = scalar_select %p39, %s41, %s25
      %p43 = scmp.ge.s32.totalorder %s42, 1
      %s44 = scalar_select %p43, 0, %s42
      %s45 = ssub.s32 %s25, %s44
      %s46 = ssub.s32 %s27, %s36
      %s47 = sor.u32 %s45, %s46
      %p48 = scmp.eq.s32.totalorder %s47, 0
      %s50 = sadd.s32 %s49, 1
      %s51 = scalar_select %p48, %s49, %s50
      %p54 = pneg %p48
      %p55 = scmp.eq.s32.totalorder %s18, 1
      %p56 = por %p54, %p55
      %p57 = scmp.ne.s32.totalorder %s49, %s52
      %p58 = scmp.eq.s32.totalorder %s18, 0
      %p59 = por %p57, %p58
      %p60 = scmp.ne.s32.totalorder %s49, %s52
      %p61 = scmp.eq.s32.totalorder %s23, 1
      %p62 = por %p60, %p61
      %p63 = scmp.ne.s32.totalorder %s52, %s53
      %p64 = scmp.eq.s32.totalorder %s23, 0
      %p65 = por %p63, %p64
      %p66 = scmp.ne.s32.totalorder %s52, %s53
      %p67 = scmp.eq.s32.totalorder %s24, 1
      %p68 = por %p66, %p67
      %p70 = scmp.ne.s32.totalorder %s53, %s69
      %p71 = scmp.eq.s32.totalorder %s24, 0
      %p72 = por %p70, %p71
      %s73 = ssub.s32 %s27, %s36
      %s74 = ssub.s32 %s26, %s40
      %s75 = sor.u32 %s73, %s74
      %p76 = scmp.eq.s32.totalorder %s75, 0
      %s78 = sadd.s32 %s77, 1
      %s79 = scalar_select %p76, %s77, %s78
      %p82 = pneg %p76
      %p83 = scmp.eq.s32.totalorder %s18, 1
      %p84 = por %p82, %p83
      %p85 = scmp.ne.s32.totalorder %s77, %s80
      %p86 = scmp.eq.s32.totalorder %s18, 0
      %p87 = por %p85, %p86
      %p88 = scmp.ne.s32.totalorder %s77, %s80
      %p89 = scmp.eq.s32.totalorder %s23, 1
      %p90 = por %p88, %p89
      %p91 = scmp.ne.s32.totalorder %s80, %s81
      %p92 = scmp.eq.s32.totalorder %s23, 0
      %p93 = por %p91, %p92
      %p94 = scmp.ne.s32.totalorder %s80, %s81
      %p95 = scmp.eq.s32.totalorder %s24, 1
      %p96 = por %p94, %p95
      %p98 = scmp.ne.s32.totalorder %s81, %s97
      %p99 = scmp.eq.s32.totalorder %s24, 0
      %p100 = por %p98, %p99
      %s101 = ssub.s32 %s26, %s40
      %p102 = scmp.eq.s32.totalorder %s101, 0
      %s104 = sadd.s32 %s103, 1
      %s105 = scalar_select %p102, %s103, %s104
      %p108 = pneg %p102
      %p109 = scmp.eq.s32.totalorder %s18, 1
      %p110 = por %p108, %p109
      %p111 = scmp.ne.s32.totalorder %s103, %s106
      %p112 = scmp.eq.s32.totalorder %s18, 0
      %p113 = por %p111, %p112
      %p114 = scmp.ne.s32.totalorder %s103, %s106
      %p115 = scmp.eq.s32.totalorder %s23, 1
      %p116 = por %p114, %p115
      %p117 = scmp.ne.s32.totalorder %s106, %s107
      %p118 = scmp.eq.s32.totalorder %s23, 0
      %p119 = por %p117, %p118
      %p120 = scmp.ne.s32.totalorder %s106, %s107
      %p121 = scmp.eq.s32.totalorder %s24, 1
      %p122 = por %p120, %p121
      %p124 = scmp.ne.s32.totalorder %s107, %s123
      %p125 = scmp.eq.s32.totalorder %s24, 0
      %p126 = por %p124, %p125
      %s127 = ssub.s32 %s25, %s44
      %s128 = ssub.s32 %s26, %s40
      %s129 = sor.u32 %s127, %s128
      %p130 = scmp.eq.s32.totalorder %s129, 0
      %s132 = sadd.s32 %s131, 1
      %s133 = scalar_select %p130, %s131, %s132
      %p136 = pneg %p130
      %p137 = scmp.eq.s32.totalorder %s18, 1
      %p138 = por %p136, %p137
      %p139 = scmp.ne.s32.totalorder %s131, %s134
      %p140 = scmp.eq.s32.totalorder %s18, 0
      %p141 = por %p139, %p140
      %p142 = scmp.ne.s32.totalorder %s131, %s134
      %p143 = scmp.eq.s32.totalorder %s23, 1
      %p144 = por %p142, %p143
      %p145 = scmp.ne.s32.totalorder %s134, %s135
      %p146 = scmp.eq.s32.totalorder %s23, 0
      %p147 = por %p145, %p146
      %p148 = scmp.ne.s32.totalorder %s134, %s135
      %p149 = scmp.eq.s32.totalorder %s24, 1
      %p150 = por %p148, %p149
      %p152 = scmp.ne.s32.totalorder %s135, %s151
      %p153 = scmp.eq.s32.totalorder %s24, 0
      %p154 = por %p152, %p153
      %s155 = ssub.s32 %s25, %s44
      %s156 = ssub.s32 %s26, %s40
      %s157 = sor.u32 %s155, %s156
      %p158 = scmp.eq.s32.totalorder %s157, 0
      %s160 = sadd.s32 %s159, 1
      %s161 = scalar_select %p158, %s159, %s160
      %p164 = pneg %p158
      %p165 = scmp.eq.s32.totalorder %s18, 1
      %p166 = por %p164, %p165
      %p167 = scmp.ne.s32.totalorder %s159, %s162
      %p168 = scmp.eq.s32.totalorder %s18, 0
      %p169 = por %p167, %p168
      %p170 = scmp.ne.s32.totalorder %s159, %s162
      %p171 = scmp.eq.s32.totalorder %s23, 1
      %p172 = por %p170, %p171
      %p173 = scmp.ne.s32.totalorder %s162, %s163
      %p174 = scmp.eq.s32.totalorder %s23, 0
      %p175 = por %p173, %p174
      %p176 = scmp.ne.s32.totalorder %s162, %s163
      %p177 = scmp.eq.s32.totalorder %s24, 1
      %p178 = por %p176, %p177
      %p180 = scmp.ne.s32.totalorder %s163, %s179
      %p181 = scmp.eq.s32.totalorder %s24, 0
      %p182 = por %p180, %p181
      %p183 = scmp.le.s32.totalorder 1, %s18
      %p184 = scmp.lt.s32.totalorder %s18, 3
      %p185 = pnand %p183, %p184
      %p186 = pneg %p185
      // Predicated region
      $region9: #{encode_image.16} parent=5 // pred_check
        _
      $region10: #{encode_image.16} parent=5 // pred_check_branch
        %188 = sbr.rel (%p185) target = $region12
      $region11: #{encode_image.16} parent=5 // pred_region
        %s189 = ssub.s32 %s18, 1
        // Predicated region
        $region13: #{encode_image.16} parent=11 // pred_check
          %p190 = pneg %p119
        $region14: #{encode_image.16} parent=11 // pred_check_branch
          %192 = sbr.rel (%p190) target = $region16
        $region15: #{encode_image.16} parent=11 // pred_region
          %s193 = smul.u32 2, %s29
          %s195 = ssub.s32 32, 32
          %196 = vsyncadd [#allocation7], %s195
          %s197 = smul.addr %s193, 16
          %s198 = scalar_lea.hbm %s2, %s197
          %s200 = sshll.u32 [#allocation8], 4
          %s201 = int_to_ptr.vmem [resolvable:$true] %s200
          %203 = dma.hbm_to_vmem [thread:$0]  %s198, 32, %s201, [#allocation7]
        $region16: #{encode_image.16} parent=11 // pred_fallthru
          _
        // Predicated region
        $region17: #{encode_image.16} parent=11 // pred_check
          %p204 = pneg %p147
        $region18: #{encode_image.16} parent=11 // pred_check_branch
          %206 = sbr.rel (%p204) target = $region20
        $region19: #{encode_image.16} parent=11 // pred_region
          %s207 = smul.u32 2, %s28
          %s208 = smul.u32 2, %s29
          %s210 = ssub.s32 256, 256
          %211 = vsyncadd [#allocation10], %s210
          %s212 = smul.addr %s207, 2
          %s213 = sadd.s32 %s208, %s212
          %s214 = smul.addr %s213, 64
          %s215 = scalar_lea.hbm %s3, %s214
          %s216 = sshll.u32 [#allocation9], 4
          %s217 = int_to_ptr.vmem [resolvable:$true] %s216
          %222 = dma.hbm_to_vmem [thread:$0]  %s215, 256, %s217, [#allocation10], 128, 128, 8
        $region20: #{encode_image.16} parent=11 // pred_fallthru
          _
      $region12: #{encode_image.16} parent=5 // pred_fallthru
        _
      %p223 = scmp.lt.s32.totalorder %s18, 2
      // Predicated region
      $region21: #{encode_image.16} parent=5 // pred_check
        %p224 = pneg %p223
      $region22: #{encode_image.16} parent=5 // pred_check_branch
        %226 = sbr.rel (%p224) target = $region24
      $region23: #{encode_image.16} parent=5 // pred_region
        // Predicated region
        $region25: #{encode_image.16} parent=23 // pred_check
          %p227 = pneg %p59
        $region26: #{encode_image.16} parent=23 // pred_check_branch
          %229 = sbr.rel (%p227) target = $region28
        $region27: #{encode_image.16} parent=23 // pred_region
          %s230 = sand.u32 %s49, 1
          %s231 = scalar_lea.sflag [#allocation4], %s230
          %s232 = sand.u32 %s49, 1
          %s233 = smul.addr %s232, 32
          %s234 = scalar_lea.vmem [#allocation3], %s233
          %s235 = smul.u32 2, %s25
          %s236 = smul.u32 4, %s27
          %s238 = ssub.s32 512, 512
          %239 = vsyncadd %s231, %s238
          %s240 = smul.addr %s235, 8
          %s241 = sadd.s32 %s236, %s240
          %s242 = smul.addr %s241, 64
          %s243 = scalar_lea.hbm %s0, %s242
          %s244 = sshll.u32 %s234, 4
          %s245 = int_to_ptr.vmem [resolvable:$true] %s244
          %250 = dma.hbm_to_vmem [thread:$0]  %s243, 512, %s245, %s231, 512, 256, 16
        $region28: #{encode_image.16} parent=23 // pred_fallthru
          _
        // Predicated region
        $region29: #{encode_image.16} parent=23 // pred_check
          %p251 = pneg %p87
        $region30: #{encode_image.16} parent=23 // pred_check_branch
          %253 = sbr.rel (%p251) target = $region32
        $region31: #{encode_image.16} parent=23 // pred_region
          %s254 = sand.u32 %s18, 1
          %s255 = scalar_lea.sflag [#allocation7], %s254
          %s256 = sand.u32 %s77, 1
          %s257 = smul.addr %s256, 512
          %s258 = scalar_lea.vmem [#allocation6], %s257
          %s259 = smul.u32 64, %s27
          %s260 = smul.u32 2, %s26
          %s262 = ssub.s32 8192, 8192
          %263 = vsyncadd %s255, %s262
          %s264 = smul.addr %s259, 2
          %s265 = sadd.s32 %s260, %s264
          %s266 = smul.addr %s265, 64
          %s267 = scalar_lea.hbm %s1, %s266
          %s268 = sshll.u32 %s258, 4
          %s269 = int_to_ptr.vmem [resolvable:$true] %s268
          %274 = dma.hbm_to_vmem [thread:$0]  %s267, 8192, %s269, %s255, 128, 128, 8
        $region32: #{encode_image.16} parent=23 // pred_fallthru
          _
      $region24: #{encode_image.16} parent=5 // pred_fallthru
        _
      %p275 = scmp.le.s32.totalorder 1, %s18
      %p276 = scmp.lt.s32.totalorder %s18, 3
      %p277 = pnand %p275, %p276
      %p278 = pneg %p277
      // Predicated region
      $region33: #{encode_image.16} parent=5 // pred_check
        _
      $region34: #{encode_image.16} parent=5 // pred_check_branch
        %280 = sbr.rel (%p277) target = $region36
      $region35: #{encode_image.16} parent=5 // pred_region
        %s281 = ssub.s32 %s18, 1
        %s282 = sand.u32 %s52, 1
        %s283 = scalar_lea.sflag [#allocation4], %s282
        %s284 = sand.u32 %s52, 1
        %s285 = smul.addr %s284, 32
        %s286 = scalar_lea.vmem [#allocation3], %s285
        // Predicated region
        $region37: #{encode_image.16} parent=35 // pred_check
          %p287 = pneg %p65
        $region38: #{encode_image.16} parent=35 // pred_check_branch
          %289 = sbr.rel (%p287) target = $region40
        $region39: #{encode_image.16} parent=35 // pred_region
          %290 = dma.done %s283, 512
        $region40: #{encode_image.16} parent=35 // pred_fallthru
          _
        %s291 = sand.u32 %s23, 1
        %s292 = scalar_lea.sflag [#allocation7], %s291
        %s293 = sand.u32 %s80, 1
        %s294 = smul.addr %s293, 512
        %s295 = scalar_lea.vmem [#allocation6], %s294
        // Predicated region
        $region41: #{encode_image.16} parent=35 // pred_check
          %p296 = pneg %p93
        $region42: #{encode_image.16} parent=35 // pred_check_branch
          %298 = sbr.rel (%p296) target = $region44
        $region43: #{encode_image.16} parent=35 // pred_region
          %299 = dma.done %s292, 8192
        $region44: #{encode_image.16} parent=35 // pred_fallthru
          _
        // Predicated region
        $region45: #{encode_image.16} parent=35 // pred_check
          %p300 = pneg %p119
        $region46: #{encode_image.16} parent=35 // pred_check_branch
          %302 = sbr.rel (%p300) target = $region48
        $region47: #{encode_image.16} parent=35 // pred_region
          %303 = dma.done [#allocation7], 32
        $region48: #{encode_image.16} parent=35 // pred_fallthru
          _
        // Predicated region
        $region49: #{encode_image.16} parent=35 // pred_check
          %p304 = pneg %p147
        $region50: #{encode_image.16} parent=35 // pred_check_branch
          %306 = sbr.rel (%p304) target = $region52
        $region51: #{encode_image.16} parent=35 // pred_region
          %307 = dma.done [#allocation10], 256
        $region52: #{encode_image.16} parent=35 // pred_fallthru
          _
        %s308 = sand.u32 %s52, 1
        %s309 = scalar_lea.sflag [#allocation4], %s308
        %s310 = sand.u32 %s52, 1
        %s311 = smul.addr %s310, 32
        %s312 = scalar_lea.vmem [#allocation3], %s311
        %p313 = pneg %p65
        %p314 = pneg %p62
        %s315 = sand.u32 %s23, 1
        %s316 = scalar_lea.sflag [#allocation7], %s315
        %s317 = sand.u32 %s80, 1
        %s318 = smul.addr %s317, 512
        %s319 = scalar_lea.vmem [#allocation6], %s318
        %p320 = pneg %p93
        %p321 = pneg %p90
        %p322 = pneg %p119
        %p323 = pneg %p116
        %p324 = pneg %p147
        %p325 = pneg %p144
        %p326 = pneg %p175
        %p327 = pneg %p172
        %s328 = smul.u32 2, %s28
        %s329 = smul.u32 4, %s30
        %s330 = smul.u32 64, %s30
        %s331 = smul.u32 2, %s29
        %s332 = smul.u32 2, %s29
        %s333 = smul.u32 2, %s28
        %s334 = smul.u32 2, %s29
        %s335 = smul.u32 2, %s28
        %s336 = smul.u32 2, %s29
        %v337 = vld [vmem:[%s286] sm:$0xff]
        %v338 = vld [vmem:[%s286 + $0x8] sm:$0xff]
        %v339 = vld [vmem:[%s286 + $0x10] sm:$0x11]
        %v340 = vld [vmem:[%s286 + $0x18] sm:$0x11]
        %p341 = scmp.eq.s32.totalorder %s30, 0
        // Predicated region
        $region53: #{encode_image.16} parent=35 // pred_check
          %p342 = pneg %p341
        $region54: #{encode_image.16} parent=35 // pred_check_branch
          %344 = sbr.rel (%p342) target = $region56
        $region55: #{encode_image.16} parent=35 // pred_region
          %345 = vst [vmem:[#allocation2] sm:$0xff] 0.0
          %346 = vst [vmem:[#allocation2 + $0x8] sm:$0xff] 0.0
          %347 = vst [vmem:[#allocation2 + $0x10] sm:$0x3] 0.0
          %348 = vst [vmem:[#allocation2 + $0x18] sm:$0x3] 0.0
        $region56: #{encode_image.16} parent=35 // pred_fallthru
          _
        %v349 = vld [vmem:[#allocation2] sm:$0xff]
        %v350 = vld [vmem:[#allocation2 + $0x8] sm:$0xff]
        %v351 = vld [vmem:[#allocation2 + $0x10] sm:$0x3]
        %v352 = vld [vmem:[#allocation2 + $0x18] sm:$0x3]
        %v353 = vld [vmem:[%s295] sm:$0xff]
        %v354 = vld [vmem:[%s295 + $0x8] sm:$0xff]
        %v355 = vld [vmem:[%s295 + $0x10] sm:$0xff]
        %v356 = vld [vmem:[%s295 + $0x18] sm:$0xff]
        %v357 = vld [vmem:[%s295 + $0x20] sm:$0xff]
        %v358 = vld [vmem:[%s295 + $0x28] sm:$0xff]
        %v359 = vld [vmem:[%s295 + $0x30] sm:$0xff]
        %v360 = vld [vmem:[%s295 + $0x38] sm:$0xff]
        %v361 = vld [vmem:[%s295 + $0x40] sm:$0xff]
        %v362 = vld [vmem:[%s295 + $0x48] sm:$0xff]
        %v363 = vld [vmem:[%s295 + $0x50] sm:$0xff]
        %v364 = vld [vmem:[%s295 + $0x58] sm:$0xff]
        %v365 = vld [vmem:[%s295 + $0x60] sm:$0xff]
        %v366 = vld [vmem:[%s295 + $0x68] sm:$0xff]
        %v367 = vld [vmem:[%s295 + $0x70] sm:$0xff]
        %v368 = vld [vmem:[%s295 + $0x78] sm:$0xff]
        %v369 = vld [vmem:[%s295 + $0x80] sm:$0xff]
        %v370 = vld [vmem:[%s295 + $0x88] sm:$0xff]
        %v371 = vld [vmem:[%s295 + $0x90] sm:$0xff]
        %v372 = vld [vmem:[%s295 + $0x98] sm:$0xff]
        %v373 = vld [vmem:[%s295 + $0xa0] sm:$0xff]
        %v374 = vld [vmem:[%s295 + $0xa8] sm:$0xff]
        %v375 = vld [vmem:[%s295 + $0xb0] sm:$0xff]
        %v376 = vld [vmem:[%s295 + $0xb8] sm:$0xff]
        %v377 = vld [vmem:[%s295 + $0xc0] sm:$0xff]
        %v378 = vld [vmem:[%s295 + $0xc8] sm:$0xff]
        %v379 = vld [vmem:[%s295 + $0xd0] sm:$0xff]
        %v380 = vld [vmem:[%s295 + $0xd8] sm:$0xff]
        %v381 = vld [vmem:[%s295 + $0xe0] sm:$0xff]
        %v382 = vld [vmem:[%s295 + $0xe8] sm:$0xff]
        %v383 = vld [vmem:[%s295 + $0xf0] sm:$0xff]
        %v384 = vld [vmem:[%s295 + $0xf8] sm:$0xff]
        %v385 = vld [vmem:[%s295 + $0x100] sm:$0xff]
        %v386 = vld [vmem:[%s295 + $0x108] sm:$0xff]
        %v387 = vld [vmem:[%s295 + $0x110] sm:$0xff]
        %v388 = vld [vmem:[%s295 + $0x118] sm:$0xff]
        %v389 = vld [vmem:[%s295 + $0x120] sm:$0xff]
        %v390 = vld [vmem:[%s295 + $0x128] sm:$0xff]
        %v391 = vld [vmem:[%s295 + $0x130] sm:$0xff]
        %v392 = vld [vmem:[%s295 + $0x138] sm:$0xff]
        %v393 = vld [vmem:[%s295 + $0x140] sm:$0xff]
        %v394 = vld [vmem:[%s295 + $0x148] sm:$0xff]
        %v395 = vld [vmem:[%s295 + $0x150] sm:$0xff]
        %v396 = vld [vmem:[%s295 + $0x158] sm:$0xff]
        %v397 = vld [vmem:[%s295 + $0x160] sm:$0xff]
        %v398 = vld [vmem:[%s295 + $0x168] sm:$0xff]
        %v399 = vld [vmem:[%s295 + $0x170] sm:$0xff]
        %v400 = vld [vmem:[%s295 + $0x178] sm:$0xff]
        %v401 = vld [vmem:[%s295 + $0x180] sm:$0xff]
        %v402 = vld [vmem:[%s295 + $0x188] sm:$0xff]
        %v403 = vld [vmem:[%s295 + $0x190] sm:$0xff]
        %v404 = vld [vmem:[%s295 + $0x198] sm:$0xff]
        %v405 = vld [vmem:[%s295 + $0x1a0] sm:$0xff]
        %v406 = vld [vmem:[%s295 + $0x1a8] sm:$0xff]
        %v407 = vld [vmem:[%s295 + $0x1b0] sm:$0xff]
        %v408 = vld [vmem:[%s295 + $0x1b8] sm:$0xff]
        %v409 = vld [vmem:[%s295 + $0x1c0] sm:$0xff]
        %v410 = vld [vmem:[%s295 + $0x1c8] sm:$0xff]
        %v411 = vld [vmem:[%s295 + $0x1d0] sm:$0xff]
        %v412 = vld [vmem:[%s295 + $0x1d8] sm:$0xff]
        %v413 = vld [vmem:[%s295 + $0x1e0] sm:$0xff]
        %v414 = vld [vmem:[%s295 + $0x1e8] sm:$0xff]
        %v415 = vld [vmem:[%s295 + $0x1f0] sm:$0xff]
        %v416 = vld [vmem:[%s295 + $0x1f8] sm:$0xff]
        %v421 = vunpack.c.l.b16 %v337
        %v422 = vunpack.c.h.b16 %v337
        %v423 = vunpack.c.l.b16 %v338
        %v424 = vunpack.c.h.b16 %v338
        %v425 = vunpack.c.l.b16 %v339
        %v426 = vunpack.c.h.b16 %v339
        %v427 = vunpack.c.l.b16 %v340
        %v428 = vunpack.c.h.b16 %v340
        %v429 = vpack.c.b16 %v425, %v421
        %v430 = vpack.c.b16 %v426, %v422
        %v431 = vpack.c.b16 %v427, %v423
        %v432 = vpack.c.b16 %v428, %v424
        %v501 = vunpack.c.l.b16 %v353
        %v502 = vunpack.c.h.b16 %v353
        %v503 = vunpack.c.l.b16 %v354
        %v504 = vunpack.c.h.b16 %v354
        %v505 = vunpack.c.l.b16 %v355
        %v506 = vunpack.c.h.b16 %v355
        %v507 = vunpack.c.l.b16 %v356
        %v508 = vunpack.c.h.b16 %v356
        %v509 = vunpack.c.l.b16 %v357
        %v510 = vunpack.c.h.b16 %v357
        %v511 = vunpack.c.l.b16 %v358
        %v512 = vunpack.c.h.b16 %v358
        %v513 = vunpack.c.l.b16 %v359
        %v514 = vunpack.c.h.b16 %v359
        %v515 = vunpack.c.l.b16 %v360
        %v516 = vunpack.c.h.b16 %v360
        %v517 = vunpack.c.l.b16 %v361
        %v518 = vunpack.c.h.b16 %v361
        %v519 = vunpack.c.l.b16 %v362
        %v520 = vunpack.c.h.b16 %v362
        %v521 = vunpack.c.l.b16 %v363
        %v522 = vunpack.c.h.b16 %v363
        %v523 = vunpack.c.l.b16 %v364
        %v524 = vunpack.c.h.b16 %v364
        %v525 = vunpack.c.l.b16 %v365
        %v526 = vunpack.c.h.b16 %v365
        %v527 = vunpack.c.l.b16 %v366
        %v528 = vunpack.c.h.b16 %v366
        %v529 = vunpack.c.l.b16 %v367
        %v530 = vunpack.c.h.b16 %v367
        %v531 = vunpack.c.l.b16 %v368
        %v532 = vunpack.c.h.b16 %v368
        %v533 = vunpack.c.l.b16 %v369
        %v534 = vunpack.c.h.b16 %v369
        %v535 = vunpack.c.l.b16 %v370
        %v536 = vunpack.c.h.b16 %v370
        %v537 = vunpack.c.l.b16 %v371
        %v538 = vunpack.c.h.b16 %v371
        %v539 = vunpack.c.l.b16 %v372
        %v540 = vunpack.c.h.b16 %v372
        %v541 = vunpack.c.l.b16 %v373
        %v542 = vunpack.c.h.b16 %v373
        %v543 = vunpack.c.l.b16 %v374
        %v544 = vunpack.c.h.b16 %v374
        %v545 = vunpack.c.l.b16 %v375
        %v546 = vunpack.c.h.b16 %v375
        %v547 = vunpack.c.l.b16 %v376
        %v548 = vunpack.c.h.b16 %v376
        %v549 = vunpack.c.l.b16 %v377
        %v550 = vunpack.c.h.b16 %v377
        %v551 = vunpack.c.l.b16 %v378
        %v552 = vunpack.c.h.b16 %v378
        %v553 = vunpack.c.l.b16 %v379
        %v554 = vunpack.c.h.b16 %v379
        %v555 = vunpack.c.l.b16 %v380
        %v556 = vunpack.c.h.b16 %v380
        %v557 = vunpack.c.l.b16 %v381
        %v558 = vunpack.c.h.b16 %v381
        %v559 = vunpack.c.l.b16 %v382
        %v560 = vunpack.c.h.b16 %v382
        %v561 = vunpack.c.l.b16 %v383
        %v562 = vunpack.c.h.b16 %v383
        %v563 = vunpack.c.l.b16 %v384
        %v564 = vunpack.c.h.b16 %v384
        %v565 = vunpack.c.l.b16 %v385
        %v566 = vunpack.c.h.b16 %v385
        %v567 = vunpack.c.l.b16 %v386
        %v568 = vunpack.c.h.b16 %v386
        %v569 = vunpack.c.l.b16 %v387
        %v570 = vunpack.c.h.b16 %v387
        %v571 = vunpack.c.l.b16 %v388
        %v572 = vunpack.c.h.b16 %v388
        %v573 = vunpack.c.l.b16 %v389
        %v574 = vunpack.c.h.b16 %v389
        %v575 = vunpack.c.l.b16 %v390
        %v576 = vunpack.c.h.b16 %v390
        %v577 = vunpack.c.l.b16 %v391
        %v578 = vunpack.c.h.b16 %v391
        %v579 = vunpack.c.l.b16 %v392
        %v580 = vunpack.c.h.b16 %v392
        %v581 = vunpack.c.l.b16 %v393
        %v582 = vunpack.c.h.b16 %v393
        %v583 = vunpack.c.l.b16 %v394
        %v584 = vunpack.c.h.b16 %v394
        %v585 = vunpack.c.l.b16 %v395
        %v586 = vunpack.c.h.b16 %v395
        %v587 = vunpack.c.l.b16 %v396
        %v588 = vunpack.c.h.b16 %v396
        %v589 = vunpack.c.l.b16 %v397
        %v590 = vunpack.c.h.b16 %v397
        %v591 = vunpack.c.l.b16 %v398
        %v592 = vunpack.c.h.b16 %v398
        %v593 = vunpack.c.l.b16 %v399
        %v594 = vunpack.c.h.b16 %v399
        %v595 = vunpack.c.l.b16 %v400
        %v596 = vunpack.c.h.b16 %v400
        %v597 = vunpack.c.l.b16 %v401
        %v598 = vunpack.c.h.b16 %v401
        %v599 = vunpack.c.l.b16 %v402
        %v600 = vunpack.c.h.b16 %v402
        %v601 = vunpack.c.l.b16 %v403
        %v602 = vunpack.c.h.b16 %v403
        %v603 = vunpack.c.l.b16 %v404
        %v604 = vunpack.c.h.b16 %v404
        %v605 = vunpack.c.l.b16 %v405
        %v606 = vunpack.c.h.b16 %v405
        %v607 = vunpack.c.l.b16 %v406
        %v608 = vunpack.c.h.b16 %v406
        %v609 = vunpack.c.l.b16 %v407
        %v610 = vunpack.c.h.b16 %v407
        %v611 = vunpack.c.l.b16 %v408
        %v612 = vunpack.c.h.b16 %v408
        %v613 = vunpack.c.l.b16 %v409
        %v614 = vunpack.c.h.b16 %v409
        %v615 = vunpack.c.l.b16 %v410
        %v616 = vunpack.c.h.b16 %v410
        %v617 = vunpack.c.l.b16 %v411
        %v618 = vunpack.c.h.b16 %v411
        %v619 = vunpack.c.l.b16 %v412
        %v620 = vunpack.c.h.b16 %v412
        %v621 = vunpack.c.l.b16 %v413
        %v622 = vunpack.c.h.b16 %v413
        %v623 = vunpack.c.l.b16 %v414
        %v624 = vunpack.c.h.b16 %v414
        %v625 = vunpack.c.l.b16 %v415
        %v626 = vunpack.c.h.b16 %v415
        %v627 = vunpack.c.l.b16 %v416
        %v628 = vunpack.c.h.b16 %v416
        %v629 = vpack.c.b16 %v503, %v501
        %v630 = vpack.c.b16 %v504, %v502
        %v631 = vpack.c.b16 %v507, %v505
        %v632 = vpack.c.b16 %v508, %v506
        %v633 = vpack.c.b16 %v511, %v509
        %v634 = vpack.c.b16 %v512, %v510
        %v635 = vpack.c.b16 %v515, %v513
        %v636 = vpack.c.b16 %v516, %v514
        %v637 = vpack.c.b16 %v519, %v517
        %v638 = vpack.c.b16 %v520, %v518
        %v639 = vpack.c.b16 %v523, %v521
        %v640 = vpack.c.b16 %v524, %v522
        %v641 = vpack.c.b16 %v527, %v525
        %v642 = vpack.c.b16 %v528, %v526
        %v643 = vpack.c.b16 %v531, %v529
        %v644 = vpack.c.b16 %v532, %v530
        %v645 = vpack.c.b16 %v535, %v533
        %v646 = vpack.c.b16 %v536, %v534
        %v647 = vpack.c.b16 %v539, %v537
        %v648 = vpack.c.b16 %v540, %v538
        %v649 = vpack.c.b16 %v543, %v541
        %v650 = vpack.c.b16 %v544, %v542
        %v651 = vpack.c.b16 %v547, %v545
        %v652 = vpack.c.b16 %v548, %v546
        %v653 = vpack.c.b16 %v551, %v549
        %v654 = vpack.c.b16 %v552, %v550
        %v655 = vpack.c.b16 %v555, %v553
        %v656 = vpack.c.b16 %v556, %v554
        %v657 = vpack.c.b16 %v559, %v557
        %v658 = vpack.c.b16 %v560, %v558
        %v659 = vpack.c.b16 %v563, %v561
        %v660 = vpack.c.b16 %v564, %v562
        %v661 = vpack.c.b16 %v567, %v565
        %v662 = vpack.c.b16 %v568, %v566
        %v663 = vpack.c.b16 %v571, %v569
        %v664 = vpack.c.b16 %v572, %v570
        %v665 = vpack.c.b16 %v575, %v573
        %v666 = vpack.c.b16 %v576, %v574
        %v667 = vpack.c.b16 %v579, %v577
        %v668 = vpack.c.b16 %v580, %v578
        %v669 = vpack.c.b16 %v583, %v581
        %v670 = vpack.c.b16 %v584, %v582
        %v671 = vpack.c.b16 %v587, %v585
        %v672 = vpack.c.b16 %v588, %v586
        %v673 = vpack.c.b16 %v591, %v589
        %v674 = vpack.c.b16 %v592, %v590
        %v675 = vpack.c.b16 %v595, %v593
        %v676 = vpack.c.b16 %v596, %v594
        %v677 = vpack.c.b16 %v599, %v597
        %v678 = vpack.c.b16 %v600, %v598
        %v679 = vpack.c.b16 %v603, %v601
        %v680 = vpack.c.b16 %v604, %v602
        %v681 = vpack.c.b16 %v607, %v605
        %v682 = vpack.c.b16 %v608, %v606
        %v683 = vpack.c.b16 %v611, %v609
        %v684 = vpack.c.b16 %v612, %v610
        %v685 = vpack.c.b16 %v615, %v613
        %v686 = vpack.c.b16 %v616, %v614
        %v687 = vpack.c.b16 %v619, %v617
        %v688 = vpack.c.b16 %v620, %v618
        %v689 = vpack.c.b16 %v623, %v621
        %v690 = vpack.c.b16 %v624, %v622
        %v691 = vpack.c.b16 %v627, %v625
        %v692 = vpack.c.b16 %v628, %v626
        %757 = vmatprep.subr.bf16.mxu0 %v630
        %758 = vmatpush1.bf16.msra.mxu0 %v629
        %759 = vmatprep.subr.bf16.mxu0 %v632
        %760 = vmatpush1.bf16.msra.mxu0 %v631
        %761 = vmatprep.subr.bf16.mxu0 %v634
        %762 = vmatpush1.bf16.msra.mxu0 %v633
        %763 = vmatprep.subr.bf16.mxu0 %v636
        %764 = vmatpush1.bf16.msra.mxu0 %v635
        %765 = vmatprep.subr.bf16.mxu0 %v638
        %766 = vmatpush1.bf16.msra.mxu0 %v637
        %767 = vmatprep.subr.bf16.mxu0 %v640
        %768 = vmatpush1.bf16.msra.mxu0 %v639
        %769 = vmatprep.subr.bf16.mxu0 %v642
        %770 = vmatpush1.bf16.msra.mxu0 %v641
        %771 = vmatprep.subr.bf16.mxu0 %v644
        %772 = vmatpush1.bf16.msra.mxu0 %v643
        %773 = vmatprep.subr.bf16.mxu0 %v646
        %774 = vmatpush1.bf16.msra.mxu0 %v645
        %775 = vmatprep.subr.bf16.mxu0 %v648
        %776 = vmatpush1.bf16.msra.mxu0 %v647
        %777 = vmatprep.subr.bf16.mxu0 %v650
        %778 = vmatpush1.bf16.msra.mxu0 %v649
        %779 = vmatprep.subr.bf16.mxu0 %v652
        %780 = vmatpush1.bf16.msra.mxu0 %v651
        %781 = vmatprep.subr.bf16.mxu0 %v654
        %782 = vmatpush1.bf16.msra.mxu0 %v653
        %783 = vmatprep.subr.bf16.mxu0 %v656
        %784 = vmatpush1.bf16.msra.mxu0 %v655
        %785 = vmatprep.subr.bf16.mxu0 %v658
        %786 = vmatpush1.bf16.msra.mxu0 %v657
        %787 = vmatprep.subr.bf16.mxu0 %v660
        %788 = vmatpush1.bf16.msra.mxu0 %v659
        %789 = vmatprep.mubr.bf16.mxu0 %v430
        %790 = vmatmul.mubr.bf16.gmra.mrb[0].mxu0 %v429
        %v791 = vpop.f32.mrb[0].mxu0
        %v792 = vadd.f32 0.0, %v791
        %v793 = vpop.f32.mrb[0].mxu0
        %v794 = vadd.f32 0.0, %v793
        %v795 = vpop.f32.mrb[0].mxu0
        %v796 = vadd.f32 0.0, %v795
        %v797 = vpop.f32.mrb[0].mxu0
        %v798 = vadd.f32 0.0, %v797
        %799 = vdwg.mxu0
        %800 = vmatprep.subr.bf16.mxu0 %v662
        %801 = vmatpush1.bf16.msra.mxu0 %v661
        %802 = vmatprep.subr.bf16.mxu0 %v664
        %803 = vmatpush1.bf16.msra.mxu0 %v663
        %804 = vmatprep.subr.bf16.mxu0 %v666
        %805 = vmatpush1.bf16.msra.mxu0 %v665
        %806 = vmatprep.subr.bf16.mxu0 %v668
        %807 = vmatpush1.bf16.msra.mxu0 %v667
        %808 = vmatprep.subr.bf16.mxu0 %v670
        %809 = vmatpush1.bf16.msra.mxu0 %v669
        %810 = vmatprep.subr.bf16.mxu0 %v672
        %811 = vmatpush1.bf16.msra.mxu0 %v671
        %812 = vmatprep.subr.bf16.mxu0 %v674
        %813 = vmatpush1.bf16.msra.mxu0 %v673
        %814 = vmatprep.subr.bf16.mxu0 %v676
        %815 = vmatpush1.bf16.msra.mxu0 %v675
        %816 = vmatprep.subr.bf16.mxu0 %v678
        %817 = vmatpush1.bf16.msra.mxu0 %v677
        %818 = vmatprep.subr.bf16.mxu0 %v680
        %819 = vmatpush1.bf16.msra.mxu0 %v679
        %820 = vmatprep.subr.bf16.mxu0 %v682
        %821 = vmatpush1.bf16.msra.mxu0 %v681
        %822 = vmatprep.subr.bf16.mxu0 %v684
        %823 = vmatpush1.bf16.msra.mxu0 %v683
        %824 = vmatprep.subr.bf16.mxu0 %v686
        %825 = vmatpush1.bf16.msra.mxu0 %v685
        %826 = vmatprep.subr.bf16.mxu0 %v688
        %827 = vmatpush1.bf16.msra.mxu0 %v687
        %828 = vmatprep.subr.bf16.mxu0 %v690
        %829 = vmatpush1.bf16.msra.mxu0 %v689
        %830 = vmatprep.subr.bf16.mxu0 %v692
        %831 = vmatpush1.bf16.msra.mxu0 %v691
        %832 = vmatprep.mubr.bf16.mxu0 %v432
        %833 = vmatmul.mubr.bf16.gmra.mrb[0].mxu0 %v431
        %v834 = vpop.f32.mrb[0].mxu0
        %v835 = vadd.f32 %v792, %v834
        %v836 = vpop.f32.mrb[0].mxu0
        %v837 = vadd.f32 %v794, %v836
        %v838 = vpop.f32.mrb[0].mxu0
        %v839 = vadd.f32 %v796, %v838
        %v840 = vpop.f32.mrb[0].mxu0
        %v841 = vadd.f32 %v798, %v840
        %842 = vdwg.mxu0
        %v843 = vadd.f32 %v349, %v835
        %v844 = vadd.f32 %v350, %v837
        %v845 = vadd.f32 %v351, %v839
        %v846 = vadd.f32 %v352, %v841
        %847 = vst [vmem:[#allocation2] sm:$0xff] %v843
        %848 = vst [vmem:[#allocation2 + $0x8] sm:$0xff] %v844
        %849 = vst [vmem:[#allocation2 + $0x10] sm:$0x3] %v845
        %850 = vst [vmem:[#allocation2 + $0x18] sm:$0x3] %v846
        %p851 = scmp.eq.s32.totalorder %s30, 1
        // Predicated region
        $region57: #{encode_image.16} parent=35 // pred_check
          %p852 = pneg %p851
        $region58: #{encode_image.16} parent=35 // pred_check_branch
          %854 = sbr.rel (%p852) target = $region60
        $region59: #{encode_image.16} parent=35 // pred_region
          %v855 = vld [vmem:[#allocation2] sm:$0xff]
          %v856 = vld [vmem:[#allocation2 + $0x8] sm:$0xff]
          %v857 = vld [vmem:[#allocation2 + $0x10] sm:$0x3]
          %v858 = vld [vmem:[#allocation2 + $0x18] sm:$0x3]
          %v859 = vld [vmem:[#allocation8] sm:$0x3]
          %v861 = vlaneseq
          %v862 = vshrl.u32 %v861, 7
          %v863 = vsub.s32 0, %v862
          %v864 = vrot.slane %v859, %v863
          %v865 = vlaneseq
          %v866 = vshrl.u32 %v865, 7
          %v867 = vsub.s32 1, %v866
          %v868 = vrot.slane %v859, %v867
          %v871 = vadd.f32 %v855, %v864
          %v872 = vadd.f32 %v856, %v868
          %v873 = vadd.f32 %v857, %v864
          %v874 = vadd.f32 %v858, %v868
          %v875 = vld [vmem:[#allocation9] sm:$0xff]
          %v876 = vld [vmem:[#allocation9 + $0x8] sm:$0x11]
          %v877 = vunpack.c.l.bf16 %v875
          %v878 = vunpack.c.h.bf16 %v875
          %v879 = vunpack.c.l.bf16 %v876
          %v880 = vunpack.c.h.bf16 %v876
          %v881 = vadd.f32 %v871, %v877
          %v882 = vadd.f32 %v872, %v878
          %v883 = vadd.f32 %v873, %v879
          %v884 = vadd.f32 %v874, %v880
          %v885 = vpack.c.bf16 %v883, %v881
          %v886 = vpack.c.bf16 %v884, %v882
          %v889 = vunpack.c.l.b16 %v885
          %v890 = vunpack.c.l.b16 %v886
          %v891 = vunpack.c.h.b16 %v885
          %v892 = vunpack.c.h.b16 %v886
          %v893 = vpack.c.b16 %v890, %v889
          %v894 = vpack.c.b16 %v892, %v891
          %897 = vst [vmem:[#allocation11] sm:$0xff] %v893
          %898 = vst [vmem:[#allocation11 + $0x8] sm:$0x11] %v894
        $region60: #{encode_image.16} parent=35 // pred_fallthru
          _
        // Predicated region
        $region61: #{encode_image.16} parent=35 // pred_check
          %p899 = pneg %p172
        $region62: #{encode_image.16} parent=35 // pred_check_branch
          %901 = sbr.rel (%p899) target = $region64
        $region63: #{encode_image.16} parent=35 // pred_region
          %s902 = smul.u32 2, %s28
          %s903 = smul.u32 2, %s29
          %s905 = ssub.s32 256, 256
          %906 = vsyncadd [#allocation5], %s905
          %s907 = smul.addr %s902, 2
          %s908 = sadd.s32 %s903, %s907
          %s909 = smul.addr %s908, 64
          %s910 = scalar_lea.hbm %s4, %s909
          %s911 = sshll.u32 [#allocation11], 4
          %s912 = int_to_ptr.vmem [resolvable:$true] %s911
          %917 = dma.vmem_to_hbm [thread:$0]  %s912, 256, %s910, [#allocation5], 128, 128, 8
        $region64: #{encode_image.16} parent=35 // pred_fallthru
          _
        // Predicated region
        $region65: #{encode_image.16} parent=35 // pred_check
          %p918 = pneg %p172
        $region66: #{encode_image.16} parent=35 // pred_check_branch
          %920 = sbr.rel (%p918) target = $region68
        $region67: #{encode_image.16} parent=35 // pred_region
          %921 = dma.done [#allocation5], 256
        $region68: #{encode_image.16} parent=35 // pred_fallthru
          _
      $region36: #{encode_image.16} parent=5 // pred_fallthru
        _
      %p922 = scmp.le.s32.totalorder 2, %s18
      // Predicated region
      $region69: #{encode_image.16} parent=5 // pred_check
        %p923 = pneg %p922
      $region70: #{encode_image.16} parent=5 // pred_check_branch
        %925 = sbr.rel (%p923) target = $region72
      $region71: #{encode_image.16} parent=5 // pred_region
        %s926 = ssub.s32 %s18, 2
      $region72: #{encode_image.16} parent=5 // pred_fallthru
        _
    $region6: #{encode_image.16} parent=1 // loop_footer
      %s22 = sadd.s32 1, %s18
    $region7: #{encode_image.16} parent=1 // loop_footer_branch
      %17 = sbr.rel target = $region3
    $region8: #{encode_image.16} parent=1 // loop_exit
      _
    %927 = vsyncpa [#allocation4], 1
    %s928 = scalar_lea.sflag [#allocation4], 1
    %929 = vsyncpa %s928, 1
    %930 = vsyncpa [#allocation7], 1
    %s931 = scalar_lea.sflag [#allocation7], 1
    %932 = vsyncpa %s931, 1
    %933 = vsyncpa [#allocation10], 1
    %934 = vsyncpa [#allocation5], 1
    %s935 = scalar_lea.sflag [#allocation5], 1
    %936 = vsyncpa %s935, 1

// kernel: encode_image.15
$region0: #{encode_image.15}
  #allocation0 [shape = 'u32[]', space=smem, size = 0x4, offset = 0x4, fixed_abs, tag = 'smem constant byte address 0x4 - core index']
  #allocation1 [shape = 'u32[144,128]{1,0:T(1,128)}', space=vmem, size = 0x12000, scoped, tag = 'internal scratch']
  #allocation2 [shape = 'bf16[10,256]{1,0:T(8,128)(2,1)}', space=vmem, size = 0x2000, scoped, tag = 'scratch operand']
  %s0 = inlined_call_operand.hbm [shape: bf16[10,256], index: 0, kind: input, shape index: {}]
  %s1 = inlined_call_operand.hbm [shape: bf16[256,1024], index: 1, kind: input, shape index: {}]
  %s2 = inlined_call_operand.hbm [shape: f32[1,1024], index: 2, kind: input, shape index: {}]
  %s3 = inlined_call_operand.hbm [shape: f32[1,256], index: 3, kind: input, shape index: {}]
  %s4 = inlined_call_operand.hbm [shape: f32[1,256], index: 4, kind: input, shape index: {}]
  %s5 = inlined_call_operand.hbm [shape: bf16[10,1024], index: 5, kind: output, shape index: {}]
  %s6 = sld [smem:[#allocation0]]
  $region77: #{encode_image.15} parent=0
    _
  %s8 = ssub.s32 1, %s6
  %s9 = scalar_select 0, %s8, %s6
  $region1: #{encode_image.15} parent=0
    #allocation3 [shape = 'u8[8192]{0}', space=vmem, size = 0x2000, scoped, tag = 'input window, operand 0, single buffered']
    #allocation4 [shape = 's32[2]{0}', space=sflag, size = 0x8, scoped, tag = 'scoped memory for encode_image.15']
    #allocation5 [shape = 's32[2]{0}', space=sflag, size = 0x8, scoped, tag = 'scoped memory for encode_image.15']
    #allocation6 [shape = 'u8[524288]{0}', space=vmem, size = 0x80000, scoped, tag = 'input window, operand 1']
    #allocation7 [shape = 's32[2]{0}', space=sflag, size = 0x8, scoped, tag = 'scoped memory for encode_image.15']
    #allocation8 [shape = 'u8[4096]{0}', space=vmem, size = 0x1000, scoped, tag = 'input window, operand 2']
    #allocation9 [shape = 'u8[1024]{0}', space=vmem, size = 0x400, scoped, tag = 'input window, operand 3, single buffered']
    #allocation10 [shape = 's32[1]{0}', space=sflag, size = 0x4, scoped, tag = 'scoped memory for encode_image.15']
    #allocation11 [shape = 'u8[1024]{0}', space=vmem, size = 0x400, scoped, tag = 'input window, operand 4, single buffered']
    #allocation12 [shape = 'u8[32768]{0}', space=vmem, size = 0x8000, scoped, tag = 'output window, operand 0']
    %10 = vsyncpa [#allocation4], 0
    %11 = vsyncpa [#allocation7], 0
    %s12 = scalar_lea.sflag [#allocation7], 1
    %13 = vsyncpa %s12, 0
    %14 = vsyncpa [#allocation10], 0
    %15 = vsyncpa [#allocation5], 0
    %s16 = scalar_lea.sflag [#allocation5], 1
    %17 = vsyncpa %s16, 0
    loop: start=0, step=1, limit=4
    $region2: #{encode_image.15} parent=1 // loop_pre_header
      _
    $region3: #{encode_image.15} parent=1 // loop_header
      %s19 = sphi 0, %s23
      %p20 = scmp.ge.s32.totalorder %s19, 4
      %s26 = sphi 0, %s45
      %s27 = sphi 0, %s41
      %s28 = sphi 0, %s37
      %s29 = sphi 0, %s26
      %s30 = sphi 0, %s27
      %s31 = sphi 0, %s28
      %s32 = sphi 0, %s29
      %s33 = sphi 0, %s30
      %s34 = sphi 0, %s31
      %s50 = sphi 0, %s52
      %s53 = sphi 0, %s50
      %s54 = sphi 0, %s53
      %s70 = sphi 0, %s54
      %s78 = sphi 0, %s80
      %s81 = sphi 0, %s78
      %s82 = sphi 0, %s81
      %s98 = sphi 0, %s82
      %s104 = sphi 0, %s106
      %s107 = sphi 0, %s104
      %s108 = sphi 0, %s107
      %s124 = sphi 0, %s108
      %s130 = sphi 0, %s132
      %s133 = sphi 0, %s130
      %s134 = sphi 0, %s133
      %s150 = sphi 0, %s134
      %s156 = sphi 0, %s158
      %s159 = sphi 0, %s156
      %s160 = sphi 0, %s159
      %s176 = sphi 0, %s160
      %s184 = sphi 0, %s186
      %s187 = sphi 0, %s184
      %s188 = sphi 0, %s187
      %s204 = sphi 0, %s188
    $region4: #{encode_image.15} parent=1 // loop_header_branch
      %22 = sbr.rel (%p20) target = $region8
    $region5: #{encode_image.15} parent=1 // loop_body
      %s24 = ssub.s32 %s19, 1
      %s25 = ssub.s32 %s19, 2
      %s35 = sadd.s32 1, %s28
      %p36 = scmp.ge.s32.totalorder %s35, 1
      %s37 = scalar_select %p36, 0, %s35
      %s38 = sadd.s32 1, %s27
      %s39 = scalar_select %p36, %s38, %s27
      %p40 = scmp.ge.s32.totalorder %s39, 2
      %s41 = scalar_select %p40, 0, %s39
      %s42 = sadd.s32 1, %s26
      %s43 = scalar_select %p40, %s42, %s26
      %p44 = scmp.ge.s32.totalorder %s43, 1
      %s45 = scalar_select %p44, 0, %s43
      %s46 = ssub.s32 %s26, %s45
      %s47 = ssub.s32 %s28, %s37
      %s48 = sor.u32 %s46, %s47
      %p49 = scmp.eq.s32.totalorder %s48, 0
      %s51 = sadd.s32 %s50, 1
      %s52 = scalar_select %p49, %s50, %s51
      %p55 = pneg %p49
      %p56 = scmp.eq.s32.totalorder %s19, 1
      %p57 = por %p55, %p56
      %p58 = scmp.ne.s32.totalorder %s50, %s53
      %p59 = scmp.eq.s32.totalorder %s19, 0
      %p60 = por %p58, %p59
      %p61 = scmp.ne.s32.totalorder %s50, %s53
      %p62 = scmp.eq.s32.totalorder %s24, 1
      %p63 = por %p61, %p62
      %p64 = scmp.ne.s32.totalorder %s53, %s54
      %p65 = scmp.eq.s32.totalorder %s24, 0
      %p66 = por %p64, %p65
      %p67 = scmp.ne.s32.totalorder %s53, %s54
      %p68 = scmp.eq.s32.totalorder %s25, 1
      %p69 = por %p67, %p68
      %p71 = scmp.ne.s32.totalorder %s54, %s70
      %p72 = scmp.eq.s32.totalorder %s25, 0
      %p73 = por %p71, %p72
      %s74 = ssub.s32 %s28, %s37
      %s75 = ssub.s32 %s27, %s41
      %s76 = sor.u32 %s74, %s75
      %p77 = scmp.eq.s32.totalorder %s76, 0
      %s79 = sadd.s32 %s78, 1
      %s80 = scalar_select %p77, %s78, %s79
      %p83 = pneg %p77
      %p84 = scmp.eq.s32.totalorder %s19, 1
      %p85 = por %p83, %p84
      %p86 = scmp.ne.s32.totalorder %s78, %s81
      %p87 = scmp.eq.s32.totalorder %s19, 0
      %p88 = por %p86, %p87
      %p89 = scmp.ne.s32.totalorder %s78, %s81
      %p90 = scmp.eq.s32.totalorder %s24, 1
      %p91 = por %p89, %p90
      %p92 = scmp.ne.s32.totalorder %s81, %s82
      %p93 = scmp.eq.s32.totalorder %s24, 0
      %p94 = por %p92, %p93
      %p95 = scmp.ne.s32.totalorder %s81, %s82
      %p96 = scmp.eq.s32.totalorder %s25, 1
      %p97 = por %p95, %p96
      %p99 = scmp.ne.s32.totalorder %s82, %s98
      %p100 = scmp.eq.s32.totalorder %s25, 0
      %p101 = por %p99, %p100
      %s102 = ssub.s32 %s27, %s41
      %p103 = scmp.eq.s32.totalorder %s102, 0
      %s105 = sadd.s32 %s104, 1
      %s106 = scalar_select %p103, %s104, %s105
      %p109 = pneg %p103
      %p110 = scmp.eq.s32.totalorder %s19, 1
      %p111 = por %p109, %p110
      %p112 = scmp.ne.s32.totalorder %s104, %s107
      %p113 = scmp.eq.s32.totalorder %s19, 0
      %p114 = por %p112, %p113
      %p115 = scmp.ne.s32.totalorder %s104, %s107
      %p116 = scmp.eq.s32.totalorder %s24, 1
      %p117 = por %p115, %p116
      %p118 = scmp.ne.s32.totalorder %s107, %s108
      %p119 = scmp.eq.s32.totalorder %s24, 0
      %p120 = por %p118, %p119
      %p121 = scmp.ne.s32.totalorder %s107, %s108
      %p122 = scmp.eq.s32.totalorder %s25, 1
      %p123 = por %p121, %p122
      %p125 = scmp.ne.s32.totalorder %s108, %s124
      %p126 = scmp.eq.s32.totalorder %s25, 0
      %p127 = por %p125, %p126
      %s128 = ssub.s32 %s28, %s37
      %p129 = scmp.eq.s32.totalorder %s128, 0
      %s131 = sadd.s32 %s130, 1
      %s132 = scalar_select %p129, %s130, %s131
      %p135 = pneg %p129
      %p136 = scmp.eq.s32.totalorder %s19, 1
      %p137 = por %p135, %p136
      %p138 = scmp.ne.s32.totalorder %s130, %s133
      %p139 = scmp.eq.s32.totalorder %s19, 0
      %p140 = por %p138, %p139
      %p141 = scmp.ne.s32.totalorder %s130, %s133
      %p142 = scmp.eq.s32.totalorder %s24, 1
      %p143 = por %p141, %p142
      %p144 = scmp.ne.s32.totalorder %s133, %s134
      %p145 = scmp.eq.s32.totalorder %s24, 0
      %p146 = por %p144, %p145
      %p147 = scmp.ne.s32.totalorder %s133, %s134
      %p148 = scmp.eq.s32.totalorder %s25, 1
      %p149 = por %p147, %p148
      %p151 = scmp.ne.s32.totalorder %s134, %s150
      %p152 = scmp.eq.s32.totalorder %s25, 0
      %p153 = por %p151, %p152
      %s154 = ssub.s32 %s28, %s37
      %p155 = scmp.eq.s32.totalorder %s154, 0
      %s157 = sadd.s32 %s156, 1
      %s158 = scalar_select %p155, %s156, %s157
      %p161 = pneg %p155
      %p162 = scmp.eq.s32.totalorder %s19, 1
      %p163 = por %p161, %p162
      %p164 = scmp.ne.s32.totalorder %s156, %s159
      %p165 = scmp.eq.s32.totalorder %s19, 0
      %p166 = por %p164, %p165
      %p167 = scmp.ne.s32.totalorder %s156, %s159
      %p168 = scmp.eq.s32.totalorder %s24, 1
      %p169 = por %p167, %p168
      %p170 = scmp.ne.s32.totalorder %s159, %s160
      %p171 = scmp.eq.s32.totalorder %s24, 0
      %p172 = por %p170, %p171
      %p173 = scmp.ne.s32.totalorder %s159, %s160
      %p174 = scmp.eq.s32.totalorder %s25, 1
      %p175 = por %p173, %p174
      %p177 = scmp.ne.s32.totalorder %s160, %s176
      %p178 = scmp.eq.s32.totalorder %s25, 0
      %p179 = por %p177, %p178
      %s180 = ssub.s32 %s26, %s45
      %s181 = ssub.s32 %s27, %s41
      %s182 = sor.u32 %s180, %s181
      %p183 = scmp.eq.s32.totalorder %s182, 0
      %s185 = sadd.s32 %s184, 1
      %s186 = scalar_select %p183, %s184, %s185
      %p189 = pneg %p183
      %p190 = scmp.eq.s32.totalorder %s19, 1
      %p191 = por %p189, %p190
      %p192 = scmp.ne.s32.totalorder %s184, %s187
      %p193 = scmp.eq.s32.totalorder %s19, 0
      %p194 = por %p192, %p193
      %p195 = scmp.ne.s32.totalorder %s184, %s187
      %p196 = scmp.eq.s32.totalorder %s24, 1
      %p197 = por %p195, %p196
      %p198 = scmp.ne.s32.totalorder %s187, %s188
      %p199 = scmp.eq.s32.totalorder %s24, 0
      %p200 = por %p198, %p199
      %p201 = scmp.ne.s32.totalorder %s187, %s188
      %p202 = scmp.eq.s32.totalorder %s25, 1
      %p203 = por %p201, %p202
      %p205 = scmp.ne.s32.totalorder %s188, %s204
      %p206 = scmp.eq.s32.totalorder %s25, 0
      %p207 = por %p205, %p206
      %p208 = scmp.le.s32.totalorder 1, %s19
      %p209 = scmp.lt.s32.totalorder %s19, 3
      %p210 = pnand %p208, %p209
      %p211 = pneg %p210
      // Predicated region
      $region9: #{encode_image.15} parent=5 // pred_check
        _
      $region10: #{encode_image.15} parent=5 // pred_check_branch
        %213 = sbr.rel (%p210) target = $region12
      $region11: #{encode_image.15} parent=5 // pred_region
        %s214 = ssub.s32 %s19, 1
        // Predicated region
        $region13: #{encode_image.15} parent=11 // pred_check
          %p215 = pneg %p66
        $region14: #{encode_image.15} parent=11 // pred_check_branch
          %217 = sbr.rel (%p215) target = $region16
        $region15: #{encode_image.15} parent=11 // pred_region
          %s218 = smul.u32 2, %s29
          %s219 = smul.u32 2, %s31
          %s221 = ssub.s32 256, 256
          %222 = vsyncadd [#allocation4], %s221
          %s223 = smul.addr %s218, 2
          %s224 = sadd.s32 %s219, %s223
          %s225 = smul.addr %s224, 64
          %s226 = scalar_lea.hbm %s0, %s225
          %s227 = sshll.u32 [#allocation3], 4
          %s228 = int_to_ptr.vmem [resolvable:$true] %s227
          %233 = dma.hbm_to_vmem [thread:$0]  %s226, 256, %s228, [#allocation4], 128, 128, 8
        $region16: #{encode_image.15} parent=11 // pred_fallthru
          _
        // Predicated region
        $region17: #{encode_image.15} parent=11 // pred_check
          %p234 = pneg %p146
        $region18: #{encode_image.15} parent=11 // pred_check_branch
          %236 = sbr.rel (%p234) target = $region20
        $region19: #{encode_image.15} parent=11 // pred_region
          %s237 = smul.u32 2, %s31
          %s239 = ssub.s32 32, 32
          %240 = vsyncadd [#allocation10], %s239
          %s241 = smul.addr %s237, 16
          %s242 = scalar_lea.hbm %s3, %s241
          %s244 = sshll.u32 [#allocation9], 4
          %s245 = int_to_ptr.vmem [resolvable:$true] %s244
          %247 = dma.hbm_to_vmem [thread:$0]  %s242, 32, %s245, [#allocation10]
        $region20: #{encode_image.15} parent=11 // pred_fallthru
          _
        // Predicated region
        $region21: #{encode_image.15} parent=11 // pred_check
          %p248 = pneg %p172
        $region22: #{encode_image.15} parent=11 // pred_check_branch
          %250 = sbr.rel (%p248) target = $region24
        $region23: #{encode_image.15} parent=11 // pred_region
          %s251 = smul.u32 2, %s31
          %s253 = ssub.s32 32, 32
          %254 = vsyncadd [#allocation10], %s253
          %s255 = smul.addr %s251, 16
          %s256 = scalar_lea.hbm %s4, %s255
          %s258 = sshll.u32 [#allocation11], 4
          %s259 = int_to_ptr.vmem [resolvable:$true] %s258
          %261 = dma.hbm_to_vmem [thread:$0]  %s256, 32, %s259, [#allocation10]
        $region24: #{encode_image.15} parent=11 // pred_fallthru
          _
      $region12: #{encode_image.15} parent=5 // pred_fallthru
        _
      %p262 = scmp.lt.s32.totalorder %s19, 2
      // Predicated region
      $region25: #{encode_image.15} parent=5 // pred_check
        %p263 = pneg %p262
      $region26: #{encode_image.15} parent=5 // pred_check_branch
        %265 = sbr.rel (%p263) target = $region28
      $region27: #{encode_image.15} parent=5 // pred_region
        // Predicated region
        $region29: #{encode_image.15} parent=27 // pred_check
          %p266 = pneg %p88
        $region30: #{encode_image.15} parent=27 // pred_check_branch
          %268 = sbr.rel (%p266) target = $region32
        $region31: #{encode_image.15} parent=27 // pred_region
          %s269 = sand.u32 %s19, 1
          %s270 = scalar_lea.sflag [#allocation7], %s269
          %s271 = sand.u32 %s78, 1
          %s272 = smul.addr %s271, 512
          %s273 = scalar_lea.vmem [#allocation6], %s272
          %s274 = smul.u32 32, %s28
          %s275 = smul.u32 4, %s27
          %s277 = ssub.s32 8192, 8192
          %278 = vsyncadd %s270, %s277
          %s279 = smul.addr %s274, 8
          %s280 = sadd.s32 %s275, %s279
          %s281 = smul.addr %s280, 64
          %s282 = scalar_lea.hbm %s1, %s281
          %s283 = sshll.u32 %s273, 4
          %s284 = int_to_ptr.vmem [resolvable:$true] %s283
          %289 = dma.hbm_to_vmem [thread:$0]  %s282, 8192, %s284, %s270, 512, 256, 16
        $region32: #{encode_image.15} parent=27 // pred_fallthru
          _
        // Predicated region
        $region33: #{encode_image.15} parent=27 // pred_check
          %p290 = pneg %p114
        $region34: #{encode_image.15} parent=27 // pred_check_branch
          %292 = sbr.rel (%p290) target = $region36
        $region35: #{encode_image.15} parent=27 // pred_region
          %s293 = sand.u32 %s19, 1
          %s294 = scalar_lea.sflag [#allocation7], %s293
          %s295 = sand.u32 %s104, 1
          %s296 = smul.addr %s295, 4
          %s297 = scalar_lea.vmem [#allocation8], %s296
          %s298 = smul.u32 4, %s27
          %s300 = ssub.s32 64, 64
          %301 = vsyncadd %s294, %s300
          %s302 = smul.addr %s298, 16
          %s303 = scalar_lea.hbm %s2, %s302
          %s305 = sshll.u32 %s297, 4
          %s306 = int_to_ptr.vmem [resolvable:$true] %s305
          %308 = dma.hbm_to_vmem [thread:$0]  %s303, 64, %s306, %s294
        $region36: #{encode_image.15} parent=27 // pred_fallthru
          _
      $region28: #{encode_image.15} parent=5 // pred_fallthru
        _
      %p309 = scmp.le.s32.totalorder 1, %s19
      %p310 = scmp.lt.s32.totalorder %s19, 3
      %p311 = pnand %p309, %p310
      %p312 = pneg %p311
      // Predicated region
      $region37: #{encode_image.15} parent=5 // pred_check
        _
      $region38: #{encode_image.15} parent=5 // pred_check_branch
        %314 = sbr.rel (%p311) target = $region40
      $region39: #{encode_image.15} parent=5 // pred_region
        %s315 = ssub.s32 %s19, 1
        // Predicated region
        $region41: #{encode_image.15} parent=39 // pred_check
          %p316 = pneg %p66
        $region42: #{encode_image.15} parent=39 // pred_check_branch
          %318 = sbr.rel (%p316) target = $region44
        $region43: #{encode_image.15} parent=39 // pred_region
          %319 = dma.done [#allocation4], 256
        $region44: #{encode_image.15} parent=39 // pred_fallthru
          _
        %s320 = sand.u32 %s24, 1
        %s321 = scalar_lea.sflag [#allocation7], %s320
        %s322 = sand.u32 %s81, 1
        %s323 = smul.addr %s322, 512
        %s324 = scalar_lea.vmem [#allocation6], %s323
        // Predicated region
        $region45: #{encode_image.15} parent=39 // pred_check
          %p325 = pneg %p94
        $region46: #{encode_image.15} parent=39 // pred_check_branch
          %327 = sbr.rel (%p325) target = $region48
        $region47: #{encode_image.15} parent=39 // pred_region
          %328 = dma.done %s321, 8192
        $region48: #{encode_image.15} parent=39 // pred_fallthru
          _
        %s329 = sand.u32 %s24, 1
        %s330 = scalar_lea.sflag [#allocation7], %s329
        %s331 = sand.u32 %s107, 1
        %s332 = smul.addr %s331, 4
        %s333 = scalar_lea.vmem [#allocation8], %s332
        // Predicated region
        $region49: #{encode_image.15} parent=39 // pred_check
          %p334 = pneg %p120
        $region50: #{encode_image.15} parent=39 // pred_check_branch
          %336 = sbr.rel (%p334) target = $region52
        $region51: #{encode_image.15} parent=39 // pred_region
          %337 = dma.done %s330, 64
        $region52: #{encode_image.15} parent=39 // pred_fallthru
          _
        // Predicated region
        $region53: #{encode_image.15} parent=39 // pred_check
          %p338 = pneg %p146
        $region54: #{encode_image.15} parent=39 // pred_check_branch
          %340 = sbr.rel (%p338) target = $region56
        $region55: #{encode_image.15} parent=39 // pred_region
          %341 = dma.done [#allocation10], 32
        $region56: #{encode_image.15} parent=39 // pred_fallthru
          _
        // Predicated region
        $region57: #{encode_image.15} parent=39 // pred_check
          %p342 = pneg %p172
        $region58: #{encode_image.15} parent=39 // pred_check_branch
          %344 = sbr.rel (%p342) target = $region60
        $region59: #{encode_image.15} parent=39 // pred_region
          %345 = dma.done [#allocation10], 32
        $region60: #{encode_image.15} parent=39 // pred_fallthru
          _
        %p346 = pneg %p66
        %p347 = pneg %p63
        %s348 = sand.u32 %s24, 1
        %s349 = scalar_lea.sflag [#allocation7], %s348
        %s350 = sand.u32 %s81, 1
        %s351 = smul.addr %s350, 512
        %s352 = scalar_lea.vmem [#allocation6], %s351
        %p353 = pneg %p94
        %p354 = pneg %p91
        %s355 = sand.u32 %s24, 1
        %s356 = scalar_lea.sflag [#allocation7], %s355
        %s357 = sand.u32 %s107, 1
        %s358 = smul.addr %s357, 4
        %s359 = scalar_lea.vmem [#allocation8], %s358
        %p360 = pneg %p120
        %p361 = pneg %p117
        %p362 = pneg %p146
        %p363 = pneg %p143
        %p364 = pneg %p172
        %p365 = pneg %p169
        %p366 = pneg %p200
        %p367 = pneg %p197
        %s368 = sand.u32 %s187, 1
        %s369 = scalar_lea.sflag [#allocation5], %s368
        %s370 = sand.u32 %s187, 1
        %s371 = smul.addr %s370, 32
        %s372 = scalar_lea.vmem [#allocation12], %s371
        %s373 = smul.u32 2, %s29
        %s374 = smul.u32 2, %s31
        %s375 = smul.u32 32, %s31
        %s376 = smul.u32 4, %s30
        %s377 = smul.u32 4, %s30
        %s378 = smul.u32 2, %s31
        %s379 = smul.u32 2, %s31
        %s380 = smul.u32 2, %s29
        %s381 = smul.u32 4, %s30
        %p382 = scmp.eq.s32.totalorder %s30, 0
        // Predicated region
        $region61: #{encode_image.15} parent=39 // pred_check
          %p383 = pneg %p382
        $region62: #{encode_image.15} parent=39 // pred_check_branch
          %385 = sbr.rel (%p383) target = $region64
        $region63: #{encode_image.15} parent=39 // pred_region
          %v386 = vld [vmem:[#allocation3] sm:$0xff]
          %v387 = vld [vmem:[#allocation3 + $0x8] sm:$0x11]
          %v388 = vunpack.c.l.bf16 %v386
          %v389 = vunpack.c.h.bf16 %v386
          %v390 = vunpack.c.l.bf16 %v387
          %v391 = vunpack.c.h.bf16 %v387
          %v392 = vadd.f32 %v388, %v389
          %393 = vadd.xlane.f32.xlu0 %v392
          %v394 = vpop.xlane.xlu0 %393
          %vm395 = vcmask 1041408
          %v396 = vsel %vm395, %v390, 0.0
          %v397 = vsel %vm395, %v391, 0.0
          %v398 = vadd.f32 %v396, %v397
          %399 = vadd.xlane.f32.xlu0 %v398
          %v400 = vpop.xlane.xlu0 %399
          %v401 = vrcp.pop 256.0
          %v402 = vmul.f32 %v394, %v401
          %v403 = vmul.f32 %v400, %v401
          %v404 = vsub.f32 %v388, %v402
          %v405 = vsub.f32 %v389, %v402
          %v406 = vsub.f32 %v390, %v403
          %v407 = vsub.f32 %v391, %v403
          %v408 = vmul.f32 %v404, %v404
          %v409 = vmul.f32 %v405, %v405
          %v410 = vmul.f32 %v406, %v406
          %v411 = vmul.f32 %v407, %v407
          %v412 = vadd.f32 %v408, %v409
          %413 = vadd.xlane.f32.xlu0 %v412
          %v414 = vpop.xlane.xlu0 %413
          %v415 = vsel %vm395, %v410, 0.0
          %v416 = vsel %vm395, %v411, 0.0
          %v417 = vadd.f32 %v415, %v416
          %418 = vadd.xlane.f32.xlu0 %v417
          %v419 = vpop.xlane.xlu0 %418
          %v420 = vmul.f32 %v414, %v401
          %v421 = vmul.f32 %v419, %v401
          %v422 = vadd.f32 %v420, 1e-05
          %v423 = vadd.f32 %v421, 1e-05
          %v424 = vrsqrt.pop %v422
          %v425 = vrsqrt.pop %v423
          %v426 = vmul.f32 %v404, %v424
          %v427 = vmul.f32 %v405, %v424
          %v428 = vmul.f32 %v406, %v425
          %v429 = vmul.f32 %v407, %v425
          %v430 = vld [vmem:[#allocation9] sm:$0x3]
          %v432 = vlaneseq
          %v433 = vshrl.u32 %v432, 7
          %v434 = vsub.s32 0, %v433
          %v435 = vrot.slane %v430, %v434
          %v436 = vlaneseq
          %v437 = vshrl.u32 %v436, 7
          %v438 = vsub.s32 1, %v437
          %v439 = vrot.slane %v430, %v438
          %v442 = vmul.f32 %v426, %v435
          %v443 = vmul.f32 %v427, %v439
          %v444 = vmul.f32 %v428, %v435
          %v445 = vmul.f32 %v429, %v439
          %v446 = vld [vmem:[#allocation11] sm:$0x3]
          %v448 = vlaneseq
          %v449 = vshrl.u32 %v448, 7
          %v450 = vsub.s32 0, %v449
          %v451 = vrot.slane %v446, %v450
          %v452 = vlaneseq
          %v453 = vshrl.u32 %v452, 7
          %v454 = vsub.s32 1, %v453
          %v455 = vrot.slane %v446, %v454
          %v458 = vadd.f32 %v442, %v451
          %v459 = vadd.f32 %v443, %v455
          %v460 = vadd.f32 %v444, %v451
          %v461 = vadd.f32 %v445, %v455
          %v462 = vpack.c.bf16 %v460, %v458
          %v463 = vpack.c.bf16 %v461, %v459
          %v466 = vunpack.c.l.b16 %v462
          %v467 = vunpack.c.l.b16 %v463
          %v468 = vunpack.c.h.b16 %v462
          %v469 = vunpack.c.h.b16 %v463
          %v470 = vpack.c.b16 %v467, %v466
          %v471 = vpack.c.b16 %v469, %v468
          %474 = vst [vmem:[#allocation2] sm:$0xff] %v470
          %475 = vst [vmem:[#allocation2 + $0x8] sm:$0x11] %v471
        $region64: #{encode_image.15} parent=39 // pred_fallthru
          _
        %v476 = vld [vmem:[#allocation2] sm:$0xff]
        %v477 = vld [vmem:[#allocation2 + $0x8] sm:$0x11]
        %v478 = vld [vmem:[%s324] sm:$0xff]
        %v479 = vld [vmem:[%s324 + $0x8] sm:$0xff]
        %v480 = vld [vmem:[%s324 + $0x10] sm:$0xff]
        %v481 = vld [vmem:[%s324 + $0x18] sm:$0xff]
        %v482 = vld [vmem:[%s324 + $0x20] sm:$0xff]
        %v483 = vld [vmem:[%s324 + $0x28] sm:$0xff]
        %v484 = vld [vmem:[%s324 + $0x30] sm:$0xff]
        %v485 = vld [vmem:[%s324 + $0x38] sm:$0xff]
        %v486 = vld [vmem:[%s324 + $0x40] sm:$0xff]
        %v487 = vld [vmem:[%s324 + $0x48] sm:$0xff]
        %v488 = vld [vmem:[%s324 + $0x50] sm:$0xff]
        %v489 = vld [vmem:[%s324 + $0x58] sm:$0xff]
        %v490 = vld [vmem:[%s324 + $0x60] sm:$0xff]
        %v491 = vld [vmem:[%s324 + $0x68] sm:$0xff]
        %v492 = vld [vmem:[%s324 + $0x70] sm:$0xff]
        %v493 = vld [vmem:[%s324 + $0x78] sm:$0xff]
        %v494 = vld [vmem:[%s324 + $0x80] sm:$0xff]
        %v495 = vld [vmem:[%s324 + $0x88] sm:$0xff]
        %v496 = vld [vmem:[%s324 + $0x90] sm:$0xff]
        %v497 = vld [vmem:[%s324 + $0x98] sm:$0xff]
        %v498 = vld [vmem:[%s324 + $0xa0] sm:$0xff]
        %v499 = vld [vmem:[%s324 + $0xa8] sm:$0xff]
        %v500 = vld [vmem:[%s324 + $0xb0] sm:$0xff]
        %v501 = vld [vmem:[%s324 + $0xb8] sm:$0xff]
        %v502 = vld [vmem:[%s324 + $0xc0] sm:$0xff]
        %v503 = vld [vmem:[%s324 + $0xc8] sm:$0xff]
        %v504 = vld [vmem:[%s324 + $0xd0] sm:$0xff]
        %v505 = vld [vmem:[%s324 + $0xd8] sm:$0xff]
        %v506 = vld [vmem:[%s324 + $0xe0] sm:$0xff]
        %v507 = vld [vmem:[%s324 + $0xe8] sm:$0xff]
        %v508 = vld [vmem:[%s324 + $0xf0] sm:$0xff]
        %v509 = vld [vmem:[%s324 + $0xf8] sm:$0xff]
        %v510 = vld [vmem:[%s324 + $0x100] sm:$0xff]
        %v511 = vld [vmem:[%s324 + $0x108] sm:$0xff]
        %v512 = vld [vmem:[%s324 + $0x110] sm:$0xff]
        %v513 = vld [vmem:[%s324 + $0x118] sm:$0xff]
        %v514 = vld [vmem:[%s324 + $0x120] sm:$0xff]
        %v515 = vld [vmem:[%s324 + $0x128] sm:$0xff]
        %v516 = vld [vmem:[%s324 + $0x130] sm:$0xff]
        %v517 = vld [vmem:[%s324 + $0x138] sm:$0xff]
        %v518 = vld [vmem:[%s324 + $0x140] sm:$0xff]
        %v519 = vld [vmem:[%s324 + $0x148] sm:$0xff]
        %v520 = vld [vmem:[%s324 + $0x150] sm:$0xff]
        %v521 = vld [vmem:[%s324 + $0x158] sm:$0xff]
        %v522 = vld [vmem:[%s324 + $0x160] sm:$0xff]
        %v523 = vld [vmem:[%s324 + $0x168] sm:$0xff]
        %v524 = vld [vmem:[%s324 + $0x170] sm:$0xff]
        %v525 = vld [vmem:[%s324 + $0x178] sm:$0xff]
        %v526 = vld [vmem:[%s324 + $0x180] sm:$0xff]
        %v527 = vld [vmem:[%s324 + $0x188] sm:$0xff]
        %v528 = vld [vmem:[%s324 + $0x190] sm:$0xff]
        %v529 = vld [vmem:[%s324 + $0x198] sm:$0xff]
        %v530 = vld [vmem:[%s324 + $0x1a0] sm:$0xff]
        %v531 = vld [vmem:[%s324 + $0x1a8] sm:$0xff]
        %v532 = vld [vmem:[%s324 + $0x1b0] sm:$0xff]
        %v533 = vld [vmem:[%s324 + $0x1b8] sm:$0xff]
        %v534 = vld [vmem:[%s324 + $0x1c0] sm:$0xff]
        %v535 = vld [vmem:[%s324 + $0x1c8] sm:$0xff]
        %v536 = vld [vmem:[%s324 + $0x1d0] sm:$0xff]
        %v537 = vld [vmem:[%s324 + $0x1d8] sm:$0xff]
        %v538 = vld [vmem:[%s324 + $0x1e0] sm:$0xff]
        %v539 = vld [vmem:[%s324 + $0x1e8] sm:$0xff]
        %v540 = vld [vmem:[%s324 + $0x1f0] sm:$0xff]
        %v541 = vld [vmem:[%s324 + $0x1f8] sm:$0xff]
        %v542 = vld [vmem:[%s333] sm:$0xf]
        %v544 = vlaneseq
        %v545 = vshrl.u32 %v544, 7
        %v546 = vsub.s32 0, %v545
        %v547 = vrot.slane %v542, %v546
        %v548 = vlaneseq
        %v549 = vshrl.u32 %v548, 7
        %v550 = vsub.s32 1, %v549
        %v551 = vrot.slane %v542, %v550
        %v552 = vlaneseq
        %v553 = vshrl.u32 %v552, 7
        %v554 = vsub.s32 2, %v553
        %v555 = vrot.slane %v542, %v554
        %v556 = vlaneseq
        %v557 = vshrl.u32 %v556, 7
        %v558 = vsub.s32 3, %v557
        %v559 = vrot.slane %v542, %v558
        %v566 = vunpack.c.l.b16 %v476
        %v567 = vunpack.c.h.b16 %v476
        %v568 = vunpack.c.l.b16 %v477
        %v569 = vunpack.c.h.b16 %v477
        %v570 = vpack.c.b16 %v568, %v566
        %v571 = vpack.c.b16 %v569, %v567
        %v638 = vunpack.c.l.b16 %v478
        %v639 = vunpack.c.h.b16 %v478
        %v640 = vunpack.c.l.b16 %v479
        %v641 = vunpack.c.h.b16 %v479
        %v642 = vunpack.c.l.b16 %v480
        %v643 = vunpack.c.h.b16 %v480
        %v644 = vunpack.c.l.b16 %v481
        %v645 = vunpack.c.h.b16 %v481
        %v646 = vunpack.c.l.b16 %v482
        %v647 = vunpack.c.h.b16 %v482
        %v648 = vunpack.c.l.b16 %v483
        %v649 = vunpack.c.h.b16 %v483
        %v650 = vunpack.c.l.b16 %v484
        %v651 = vunpack.c.h.b16 %v484
        %v652 = vunpack.c.l.b16 %v485
        %v653 = vunpack.c.h.b16 %v485
        %v654 = vunpack.c.l.b16 %v486
        %v655 = vunpack.c.h.b16 %v486
        %v656 = vunpack.c.l.b16 %v487
        %v657 = vunpack.c.h.b16 %v487
        %v658 = vunpack.c.l.b16 %v488
        %v659 = vunpack.c.h.b16 %v488
        %v660 = vunpack.c.l.b16 %v489
        %v661 = vunpack.c.h.b16 %v489
        %v662 = vunpack.c.l.b16 %v490
        %v663 = vunpack.c.h.b16 %v490
        %v664 = vunpack.c.l.b16 %v491
        %v665 = vunpack.c.h.b16 %v491
        %v666 = vunpack.c.l.b16 %v492
        %v667 = vunpack.c.h.b16 %v492
        %v668 = vunpack.c.l.b16 %v493
        %v669 = vunpack.c.h.b16 %v493
        %v670 = vunpack.c.l.b16 %v494
        %v671 = vunpack.c.h.b16 %v494
        %v672 = vunpack.c.l.b16 %v495
        %v673 = vunpack.c.h.b16 %v495
        %v674 = vunpack.c.l.b16 %v496
        %v675 = vunpack.c.h.b16 %v496
        %v676 = vunpack.c.l.b16 %v497
        %v677 = vunpack.c.h.b16 %v497
        %v678 = vunpack.c.l.b16 %v498
        %v679 = vunpack.c.h.b16 %v498
        %v680 = vunpack.c.l.b16 %v499
        %v681 = vunpack.c.h.b16 %v499
        %v682 = vunpack.c.l.b16 %v500
        %v683 = vunpack.c.h.b16 %v500
        %v684 = vunpack.c.l.b16 %v501
        %v685 = vunpack.c.h.b16 %v501
        %v686 = vunpack.c.l.b16 %v502
        %v687 = vunpack.c.h.b16 %v502
        %v688 = vunpack.c.l.b16 %v503
        %v689 = vunpack.c.h.b16 %v503
        %v690 = vunpack.c.l.b16 %v504
        %v691 = vunpack.c.h.b16 %v504
        %v692 = vunpack.c.l.b16 %v505
        %v693 = vunpack.c.h.b16 %v505
        %v694 = vunpack.c.l.b16 %v506
        %v695 = vunpack.c.h.b16 %v506
        %v696 = vunpack.c.l.b16 %v507
        %v697 = vunpack.c.h.b16 %v507
        %v698 = vunpack.c.l.b16 %v508
        %v699 = vunpack.c.h.b16 %v508
        %v700 = vunpack.c.l.b16 %v509
        %v701 = vunpack.c.h.b16 %v509
        %v702 = vunpack.c.l.b16 %v510
        %v703 = vunpack.c.h.b16 %v510
        %v704 = vunpack.c.l.b16 %v511
        %v705 = vunpack.c.h.b16 %v511
        %v706 = vunpack.c.l.b16 %v512
        %v707 = vunpack.c.h.b16 %v512
        %v708 = vunpack.c.l.b16 %v513
        %v709 = vunpack.c.h.b16 %v513
        %v710 = vunpack.c.l.b16 %v514
        %v711 = vunpack.c.h.b16 %v514
        %v712 = vunpack.c.l.b16 %v515
        %v713 = vunpack.c.h.b16 %v515
        %v714 = vunpack.c.l.b16 %v516
        %v715 = vunpack.c.h.b16 %v516
        %v716 = vunpack.c.l.b16 %v517
        %v717 = vunpack.c.h.b16 %v517
        %v718 = vunpack.c.l.b16 %v518
        %v719 = vunpack.c.h.b16 %v518
        %v720 = vunpack.c.l.b16 %v519
        %v721 = vunpack.c.h.b16 %v519
        %v722 = vunpack.c.l.b16 %v520
        %v723 = vunpack.c.h.b16 %v520
        %v724 = vunpack.c.l.b16 %v521
        %v725 = vunpack.c.h.b16 %v521
        %v726 = vunpack.c.l.b16 %v522
        %v727 = vunpack.c.h.b16 %v522
        %v728 = vunpack.c.l.b16 %v523
        %v729 = vunpack.c.h.b16 %v523
        %v730 = vunpack.c.l.b16 %v524
        %v731 = vunpack.c.h.b16 %v524
        %v732 = vunpack.c.l.b16 %v525
        %v733 = vunpack.c.h.b16 %v525
        %v734 = vunpack.c.l.b16 %v526
        %v735 = vunpack.c.h.b16 %v526
        %v736 = vunpack.c.l.b16 %v527
        %v737 = vunpack.c.h.b16 %v527
        %v738 = vunpack.c.l.b16 %v528
        %v739 = vunpack.c.h.b16 %v528
        %v740 = vunpack.c.l.b16 %v529
        %v741 = vunpack.c.h.b16 %v529
        %v742 = vunpack.c.l.b16 %v530
        %v743 = vunpack.c.h.b16 %v530
        %v744 = vunpack.c.l.b16 %v531
        %v745 = vunpack.c.h.b16 %v531
        %v746 = vunpack.c.l.b16 %v532
        %v747 = vunpack.c.h.b16 %v532
        %v748 = vunpack.c.l.b16 %v533
        %v749 = vunpack.c.h.b16 %v533
        %v750 = vunpack.c.l.b16 %v534
        %v751 = vunpack.c.h.b16 %v534
        %v752 = vunpack.c.l.b16 %v535
        %v753 = vunpack.c.h.b16 %v535
        %v754 = vunpack.c.l.b16 %v536
        %v755 = vunpack.c.h.b16 %v536
        %v756 = vunpack.c.l.b16 %v537
        %v757 = vunpack.c.h.b16 %v537
        %v758 = vunpack.c.l.b16 %v538
        %v759 = vunpack.c.h.b16 %v538
        %v760 = vunpack.c.l.b16 %v539
        %v761 = vunpack.c.h.b16 %v539
        %v762 = vunpack.c.l.b16 %v540
        %v763 = vunpack.c.h.b16 %v540
        %v764 = vunpack.c.l.b16 %v541
        %v765 = vunpack.c.h.b16 %v541
        %v766 = vpack.c.b16 %v642, %v638
        %v767 = vpack.c.b16 %v643, %v639
        %v768 = vpack.c.b16 %v644, %v640
        %v769 = vpack.c.b16 %v645, %v641
        %v770 = vpack.c.b16 %v650, %v646
        %v771 = vpack.c.b16 %v651, %v647
        %v772 = vpack.c.b16 %v652, %v648
        %v773 = vpack.c.b16 %v653, %v649
        %v774 = vpack.c.b16 %v658, %v654
        %v775 = vpack.c.b16 %v659, %v655
        %v776 = vpack.c.b16 %v660, %v656
        %v777 = vpack.c.b16 %v661, %v657
        %v778 = vpack.c.b16 %v666, %v662
        %v779 = vpack.c.b16 %v667, %v663
        %v780 = vpack.c.b16 %v668, %v664
        %v781 = vpack.c.b16 %v669, %v665
        %v782 = vpack.c.b16 %v674, %v670
        %v783 = vpack.c.b16 %v675, %v671
        %v784 = vpack.c.b16 %v676, %v672
        %v785 = vpack.c.b16 %v677, %v673
        %v786 = vpack.c.b16 %v682, %v678
        %v787 = vpack.c.b16 %v683, %v679
        %v788 = vpack.c.b16 %v684, %v680
        %v789 = vpack.c.b16 %v685, %v681
        %v790 = vpack.c.b16 %v690, %v686
        %v791 = vpack.c.b16 %v691, %v687
        %v792 = vpack.c.b16 %v692, %v688
        %v793 = vpack.c.b16 %v693, %v689
        %v794 = vpack.c.b16 %v698, %v694
        %v795 = vpack.c.b16 %v699, %v695
        %v796 = vpack.c.b16 %v700, %v696
        %v797 = vpack.c.b16 %v701, %v697
        %v798 = vpack.c.b16 %v706, %v702
        %v799 = vpack.c.b16 %v707, %v703
        %v800 = vpack.c.b16 %v708, %v704
        %v801 = vpack.c.b16 %v709, %v705
        %v802 = vpack.c.b16 %v714, %v710
        %v803 = vpack.c.b16 %v715, %v711
        %v804 = vpack.c.b16 %v716, %v712
        %v805 = vpack.c.b16 %v717, %v713
        %v806 = vpack.c.b16 %v722, %v718
        %v807 = vpack.c.b16 %v723, %v719
        %v808 = vpack.c.b16 %v724, %v720
        %v809 = vpack.c.b16 %v725, %v721
        %v810 = vpack.c.b16 %v730, %v726
        %v811 = vpack.c.b16 %v731, %v727
        %v812 = vpack.c.b16 %v732, %v728
        %v813 = vpack.c.b16 %v733, %v729
        %v814 = vpack.c.b16 %v738, %v734
        %v815 = vpack.c.b16 %v739, %v735
        %v816 = vpack.c.b16 %v740, %v736
        %v817 = vpack.c.b16 %v741, %v737
        %v818 = vpack.c.b16 %v746, %v742
        %v819 = vpack.c.b16 %v747, %v743
        %v820 = vpack.c.b16 %v748, %v744
        %v821 = vpack.c.b16 %v749, %v745
        %v822 = vpack.c.b16 %v754, %v750
        %v823 = vpack.c.b16 %v755, %v751
        %v824 = vpack.c.b16 %v756, %v752
        %v825 = vpack.c.b16 %v757, %v753
        %v826 = vpack.c.b16 %v762, %v758
        %v827 = vpack.c.b16 %v763, %v759
        %v828 = vpack.c.b16 %v764, %v760
        %v829 = vpack.c.b16 %v765, %v761
        %894 = vmatprep.subr.bf16.mxu0 %v767
        %895 = vmatpush1.bf16.msra.mxu0 %v766
        %896 = vmatprep.subr.bf16.mxu0 %v771
        %897 = vmatpush1.bf16.msra.mxu0 %v770
        %898 = vmatprep.subr.bf16.mxu0 %v775
        %899 = vmatpush1.bf16.msra.mxu0 %v774
        %900 = vmatprep.subr.bf16.mxu0 %v779
        %901 = vmatpush1.bf16.msra.mxu0 %v778
        %902 = vmatprep.subr.bf16.mxu0 %v783
        %903 = vmatpush1.bf16.msra.mxu0 %v782
        %904 = vmatprep.subr.bf16.mxu0 %v787
        %905 = vmatpush1.bf16.msra.mxu0 %v786
        %906 = vmatprep.subr.bf16.mxu0 %v791
        %907 = vmatpush1.bf16.msra.mxu0 %v790
        %908 = vmatprep.subr.bf16.mxu0 %v795
        %909 = vmatpush1.bf16.msra.mxu0 %v794
        %910 = vmatprep.subr.bf16.mxu0 %v799
        %911 = vmatpush1.bf16.msra.mxu0 %v798
        %912 = vmatprep.subr.bf16.mxu0 %v803
        %913 = vmatpush1.bf16.msra.mxu0 %v802
        %914 = vmatprep.subr.bf16.mxu0 %v807
        %915 = vmatpush1.bf16.msra.mxu0 %v806
        %916 = vmatprep.subr.bf16.mxu0 %v811
        %917 = vmatpush1.bf16.msra.mxu0 %v810
        %918 = vmatprep.subr.bf16.mxu0 %v815
        %919 = vmatpush1.bf16.msra.mxu0 %v814
        %920 = vmatprep.subr.bf16.mxu0 %v819
        %921 = vmatpush1.bf16.msra.mxu0 %v818
        %922 = vmatprep.subr.bf16.mxu0 %v823
        %923 = vmatpush1.bf16.msra.mxu0 %v822
        %924 = vmatprep.subr.bf16.mxu0 %v827
        %925 = vmatpush1.bf16.msra.mxu0 %v826
        %926 = vmatprep.mubr.bf16.mxu0 %v571
        %927 = vmatmul.mubr.bf16.gmra.mrb[0].mxu0 %v570
        %v928 = vpop.f32.mrb[0].mxu0
        %v929 = vadd.f32 %v547, %v928
        %v930 = vpop.f32.mrb[0].mxu0
        %v931 = vadd.f32 %v551, %v930
        %v932 = vpop.f32.mrb[0].mxu0
        %v933 = vadd.f32 %v547, %v932
        %v934 = vpop.f32.mrb[0].mxu0
        %v935 = vadd.f32 %v551, %v934
        %936 = vdwg.mxu0
        %937 = vmatprep.subr.bf16.mxu0 %v769
        %938 = vmatpush1.bf16.msra.mxu0 %v768
        %939 = vmatprep.subr.bf16.mxu0 %v773
        %940 = vmatpush1.bf16.msra.mxu0 %v772
        %941 = vmatprep.subr.bf16.mxu0 %v777
        %942 = vmatpush1.bf16.msra.mxu0 %v776
        %943 = vmatprep.subr.bf16.mxu0 %v781
        %944 = vmatpush1.bf16.msra.mxu0 %v780
        %945 = vmatprep.subr.bf16.mxu0 %v785
        %946 = vmatpush1.bf16.msra.mxu0 %v784
        %947 = vmatprep.subr.bf16.mxu0 %v789
        %948 = vmatpush1.bf16.msra.mxu0 %v788
        %949 = vmatprep.subr.bf16.mxu0 %v793
        %950 = vmatpush1.bf16.msra.mxu0 %v792
        %951 = vmatprep.subr.bf16.mxu0 %v797
        %952 = vmatpush1.bf16.msra.mxu0 %v796
        %953 = vmatprep.subr.bf16.mxu0 %v801
        %954 = vmatpush1.bf16.msra.mxu0 %v800
        %955 = vmatprep.subr.bf16.mxu0 %v805
        %956 = vmatpush1.bf16.msra.mxu0 %v804
        %957 = vmatprep.subr.bf16.mxu0 %v809
        %958 = vmatpush1.bf16.msra.mxu0 %v808
        %959 = vmatprep.subr.bf16.mxu0 %v813
        %960 = vmatpush1.bf16.msra.mxu0 %v812
        %961 = vmatprep.subr.bf16.mxu0 %v817
        %962 = vmatpush1.bf16.msra.mxu0 %v816
        %963 = vmatprep.subr.bf16.mxu0 %v821
        %964 = vmatpush1.bf16.msra.mxu0 %v820
        %965 = vmatprep.subr.bf16.mxu0 %v825
        %966 = vmatpush1.bf16.msra.mxu0 %v824
        %967 = vmatprep.subr.bf16.mxu0 %v829
        %968 = vmatpush1.bf16.msra.mxu0 %v828
        %969 = vmatprep.mubr.bf16.mxu0 %v571
        %970 = vmatmul.mubr.bf16.gmra.mrb[0].mxu0 %v570
        %v971 = vpop.f32.mrb[0].mxu0
        %v972 = vadd.f32 %v555, %v971
        %v973 = vpop.f32.mrb[0].mxu0
        %v974 = vadd.f32 %v559, %v973
        %v975 = vpop.f32.mrb[0].mxu0
        %v976 = vadd.f32 %v555, %v975
        %v977 = vpop.f32.mrb[0].mxu0
        %v978 = vadd.f32 %v559, %v977
        %979 = vdwg.mxu0
        %v980 = vmul.f32 %v929, 0.5
        %v981 = vmul.f32 %v931, 0.5
        %v982 = vmul.f32 %v972, 0.5
        %v983 = vmul.f32 %v974, 0.5
        %v984 = vmul.f32 %v933, 0.5
        %v985 = vmul.f32 %v935, 0.5
        %v986 = vmul.f32 %v976, 0.5
        %v987 = vmul.f32 %v978, 0.5
        %v988 = vmul.f32 %v929, 0.70710677
        %v989 = vmul.f32 %v931, 0.70710677
        %v990 = vmul.f32 %v972, 0.70710677
        %v991 = vmul.f32 %v974, 0.70710677
        %v992 = vmul.f32 %v933, 0.70710677
        %v993 = vmul.f32 %v935, 0.70710677
        %v994 = vmul.f32 %v976, 0.70710677
        %v995 = vmul.f32 %v978, 0.70710677
        %vm996 = vcmp.ge.f32.partialorder %v988, 0.0
        %vm997 = vcmp.ge.f32.partialorder %v989, 0.0
        %vm998 = vcmp.ge.f32.partialorder %v990, 0.0
        %vm999 = vcmp.ge.f32.partialorder %v991, 0.0
        %vm1000 = vcmp.ge.f32.partialorder %v992, 0.0
        %vm1001 = vcmp.ge.f32.partialorder %v993, 0.0
        %vm1002 = vcmp.ge.f32.partialorder %v994, 0.0
        %vm1003 = vcmp.ge.f32.partialorder %v995, 0.0
        %v1004 = vsel %vm996, 1.0, -1.0
        %v1005 = vsel %vm997, 1.0, -1.0
        %v1006 = vsel %vm998, 1.0, -1.0
        %v1007 = vsel %vm999, 1.0, -1.0
        %v1008 = vsel %vm1000, 1.0, -1.0
        %v1009 = vsel %vm1001, 1.0, -1.0
        %v1010 = vsel %vm1002, 1.0, -1.0
        %v1011 = vsel %vm1003, 1.0, -1.0
        %v1012 = vand.u32 2147483647, %v988
        %v1013 = vand.u32 2147483647, %v989
        %v1014 = vand.u32 2147483647, %v990
        %v1015 = vand.u32 2147483647, %v991
        %v1016 = vand.u32 2147483647, %v992
        %v1017 = vand.u32 2147483647, %v993
        %v1018 = vand.u32 2147483647, %v994
        %v1019 = vand.u32 2147483647, %v995
        %v1020 = vmul.f32 %v1012, 0.3275911
        %v1021 = vmul.f32 %v1013, 0.3275911
        %v1022 = vmul.f32 %v1014, 0.3275911
        %v1023 = vmul.f32 %v1015, 0.3275911
        %v1024 = vmul.f32 %v1016, 0.3275911
        %v1025 = vmul.f32 %v1017, 0.3275911
        %v1026 = vmul.f32 %v1018, 0.3275911
        %v1027 = vmul.f32 %v1019, 0.3275911
        %v1028 = vadd.f32 %v1020, 1.0
        %v1029 = vadd.f32 %v1021, 1.0
        %v1030 = vadd.f32 %v1022, 1.0
        %v1031 = vadd.f32 %v1023, 1.0
        %v1032 = vadd.f32 %v1024, 1.0
        %v1033 = vadd.f32 %v1025, 1.0
        %v1034 = vadd.f32 %v1026, 1.0
        %v1035 = vadd.f32 %v1027, 1.0
        %v1036 = vrcp.pop %v1028
        %v1037 = vmul.f32 1.0, %v1036
        %v1038 = vrcp.pop %v1029
        %v1039 = vmul.f32 1.0, %v1038
        %v1040 = vrcp.pop %v1030
        %v1041 = vmul.f32 1.0, %v1040
        %v1042 = vrcp.pop %v1031
        %v1043 = vmul.f32 1.0, %v1042
        %v1044 = vrcp.pop %v1032
        %v1045 = vmul.f32 1.0, %v1044
        %v1046 = vrcp.pop %v1033
        %v1047 = vmul.f32 1.0, %v1046
        %v1048 = vrcp.pop %v1034
        %v1049 = vmul.f32 1.0, %v1048
        %v1050 = vrcp.pop %v1035
        %v1051 = vmul.f32 1.0, %v1050
        %v1052 = vmul.f32 %v1037, 1.0614054
        %v1053 = vmul.f32 %v1039, 1.0614054
        %v1054 = vmul.f32 %v1041, 1.0614054
        %v1055 = vmul.f32 %v1043, 1.0614054
        %v1056 = vmul.f32 %v1045, 1.0614054
        %v1057 = vmul.f32 %v1047, 1.0614054
        %v1058 = vmul.f32 %v1049, 1.0614054
        %v1059 = vmul.f32 %v1051, 1.0614054
        %v1060 = vadd.f32 %v1052, -1.4531521
        %v1061 = vadd.f32 %v1053, -1.4531521
        %v1062 = vadd.f32 %v1054, -1.4531521
        %v1063 = vadd.f32 %v1055, -1.4531521
        %v1064 = vadd.f32 %v1056, -1.4531521
        %v1065 = vadd.f32 %v1057, -1.4531521
        %v1066 = vadd.f32 %v1058, -1.4531521
        %v1067 = vadd.f32 %v1059, -1.4531521
        %v1068 = vmul.f32 %v1060, %v1037
        %v1069 = vmul.f32 %v1061, %v1039
        %v1070 = vmul.f32 %v1062, %v1041
        %v1071 = vmul.f32 %v1063, %v1043
        %v1072 = vmul.f32 %v1064, %v1045
        %v1073 = vmul.f32 %v1065, %v1047
        %v1074 = vmul.f32 %v1066, %v1049
        %v1075 = vmul.f32 %v1067, %v1051
        %v1076 = vadd.f32 %v1068, 1.4214138
        %v1077 = vadd.f32 %v1069, 1.4214138
        %v1078 = vadd.f32 %v1070, 1.4214138
        %v1079 = vadd.f32 %v1071, 1.4214138
        %v1080 = vadd.f32 %v1072, 1.4214138
        %v1081 = vadd.f32 %v1073, 1.4214138
        %v1082 = vadd.f32 %v1074, 1.4214138
        %v1083 = vadd.f32 %v1075, 1.4214138
        %v1084 = vmul.f32 %v1076, %v1037
        %v1085 = vmul.f32 %v1077, %v1039
        %v1086 = vmul.f32 %v1078, %v1041
        %v1087 = vmul.f32 %v1079, %v1043
        %v1088 = vmul.f32 %v1080, %v1045
        %v1089 = vmul.f32 %v1081, %v1047
        %v1090 = vmul.f32 %v1082, %v1049
        %v1091 = vmul.f32 %v1083, %v1051
        %v1092 = vadd.f32 %v1084, -0.28449672
        %v1093 = vadd.f32 %v1085, -0.28449672
        %v1094 = vadd.f32 %v1086, -0.28449672
        %v1095 = vadd.f32 %v1087, -0.28449672
        %v1096 = vadd.f32 %v1088, -0.28449672
        %v1097 = vadd.f32 %v1089, -0.28449672
        %v1098 = vadd.f32 %v1090, -0.28449672
        %v1099 = vadd.f32 %v1091, -0.28449672
        %v1100 = vmul.f32 %v1092, %v1037
        %v1101 = vmul.f32 %v1093, %v1039
        %v1102 = vmul.f32 %v1094, %v1041
        %v1103 = vmul.f32 %v1095, %v1043
        %v1104 = vmul.f32 %v1096, %v1045
        %v1105 = vmul.f32 %v1097, %v1047
        %v1106 = vmul.f32 %v1098, %v1049
        %v1107 = vmul.f32 %v1099, %v1051
        %v1108 = vadd.f32 %v1100, 0.2548296
        %v1109 = vadd.f32 %v1101, 0.2548296
        %v1110 = vadd.f32 %v1102, 0.2548296
        %v1111 = vadd.f32 %v1103, 0.2548296
        %v1112 = vadd.f32 %v1104, 0.2548296
        %v1113 = vadd.f32 %v1105, 0.2548296
        %v1114 = vadd.f32 %v1106, 0.2548296
        %v1115 = vadd.f32 %v1107, 0.2548296
        %v1116 = vmul.f32 %v1108, %v1037
        %v1117 = vmul.f32 %v1109, %v1039
        %v1118 = vmul.f32 %v1110, %v1041
        %v1119 = vmul.f32 %v1111, %v1043
        %v1120 = vmul.f32 %v1112, %v1045
        %v1121 = vmul.f32 %v1113, %v1047
        %v1122 = vmul.f32 %v1114, %v1049
        %v1123 = vmul.f32 %v1115, %v1051
        %v1124 = vsub.f32 0.0, %v1012
        %v1125 = vsub.f32 0.0, %v1013
        %v1126 = vsub.f32 0.0, %v1014
        %v1127 = vsub.f32 0.0, %v1015
        %v1128 = vsub.f32 0.0, %v1016
        %v1129 = vsub.f32 0.0, %v1017
        %v1130 = vsub.f32 0.0, %v1018
        %v1131 = vsub.f32 0.0, %v1019
        %v1132 = vmul.f32 %v1124, %v1012
        %v1133 = vmul.f32 %v1125, %v1013
        %v1134 = vmul.f32 %v1126, %v1014
        %v1135 = vmul.f32 %v1127, %v1015
        %v1136 = vmul.f32 %v1128, %v1016
        %v1137 = vmul.f32 %v1129, %v1017
        %v1138 = vmul.f32 %v1130, %v1018
        %v1139 = vmul.f32 %v1131, %v1019
        %v1140 = vmul.f32 %v1132, 1.442695
        %v1141 = vpow.pop %v1140
        %v1142 = vmul.f32 %v1133, 1.442695
        %v1143 = vpow.pop %v1142
        %v1144 = vmul.f32 %v1134, 1.442695
        %v1145 = vpow.pop %v1144
        %v1146 = vmul.f32 %v1135, 1.442695
        %v1147 = vpow.pop %v1146
        %v1148 = vmul.f32 %v1136, 1.442695
        %v1149 = vpow.pop %v1148
        %v1150 = vmul.f32 %v1137, 1.442695
        %v1151 = vpow.pop %v1150
        %v1152 = vmul.f32 %v1138, 1.442695
        %v1153 = vpow.pop %v1152
        %v1154 = vmul.f32 %v1139, 1.442695
        %v1155 = vpow.pop %v1154
        %v1156 = vmul.f32 %v1116, %v1141
        %v1157 = vmul.f32 %v1117, %v1143
        %v1158 = vmul.f32 %v1118, %v1145
        %v1159 = vmul.f32 %v1119, %v1147
        %v1160 = vmul.f32 %v1120, %v1149
        %v1161 = vmul.f32 %v1121, %v1151
        %v1162 = vmul.f32 %v1122, %v1153
        %v1163 = vmul.f32 %v1123, %v1155
        %v1164 = vsub.f32 1.0, %v1156
        %v1165 = vsub.f32 1.0, %v1157
        %v1166 = vsub.f32 1.0, %v1158
        %v1167 = vsub.f32 1.0, %v1159
        %v1168 = vsub.f32 1.0, %v1160
        %v1169 = vsub.f32 1.0, %v1161
        %v1170 = vsub.f32 1.0, %v1162
        %v1171 = vsub.f32 1.0, %v1163
        %v1172 = vmul.f32 %v1004, %v1164
        %v1173 = vmul.f32 %v1005, %v1165
        %v1174 = vmul.f32 %v1006, %v1166
        %v1175 = vmul.f32 %v1007, %v1167
        %v1176 = vmul.f32 %v1008, %v1168
        %v1177 = vmul.f32 %v1009, %v1169
        %v1178 = vmul.f32 %v1010, %v1170
        %v1179 = vmul.f32 %v1011, %v1171
        %v1180 = vadd.f32 %v1172, 1.0
        %v1181 = vadd.f32 %v1173, 1.0
        %v1182 = vadd.f32 %v1174, 1.0
        %v1183 = vadd.f32 %v1175, 1.0
        %v1184 = vadd.f32 %v1176, 1.0
        %v1185 = vadd.f32 %v1177, 1.0
        %v1186 = vadd.f32 %v1178, 1.0
        %v1187 = vadd.f32 %v1179, 1.0
        %v1188 = vmul.f32 %v980, %v1180
        %v1189 = vmul.f32 %v981, %v1181
        %v1190 = vmul.f32 %v982, %v1182
        %v1191 = vmul.f32 %v983, %v1183
        %v1192 = vmul.f32 %v984, %v1184
        %v1193 = vmul.f32 %v985, %v1185
        %v1194 = vmul.f32 %v986, %v1186
        %v1195 = vmul.f32 %v987, %v1187
        %v1196 = vpack.c.bf16 %v1192, %v1188
        %v1197 = vpack.c.bf16 %v1193, %v1189
        %v1198 = vpack.c.bf16 %v1194, %v1190
        %v1199 = vpack.c.bf16 %v1195, %v1191
        %v1204 = vunpack.c.l.b16 %v1196
        %v1205 = vunpack.c.l.b16 %v1197
        %v1206 = vunpack.c.l.b16 %v1198
        %v1207 = vunpack.c.l.b16 %v1199
        %v1208 = vunpack.c.h.b16 %v1196
        %v1209 = vunpack.c.h.b16 %v1197
        %v1210 = vunpack.c.h.b16 %v1198
        %v1211 = vunpack.c.h.b16 %v1199
        %v1212 = vpack.c.b16 %v1205, %v1204
        %v1213 = vpack.c.b16 %v1207, %v1206
        %v1214 = vpack.c.b16 %v1209, %v1208
        %v1215 = vpack.c.b16 %v1211, %v1210
        %1220 = vst [vmem:[%s372] sm:$0xff] %v1212
        %1221 = vst [vmem:[%s372 + $0x8] sm:$0xff] %v1213
        %1222 = vst [vmem:[%s372 + $0x10] sm:$0x11] %v1214
        %1223 = vst [vmem:[%s372 + $0x18] sm:$0x11] %v1215
        %s1224 = sand.u32 %s187, 1
        %s1225 = scalar_lea.sflag [#allocation5], %s1224
        %s1226 = sand.u32 %s187, 1
        %s1227 = smul.addr %s1226, 32
        %s1228 = scalar_lea.vmem [#allocation12], %s1227
        // Predicated region
        $region65: #{encode_image.15} parent=39 // pred_check
          %p1229 = pneg %p197
        $region66: #{encode_image.15} parent=39 // pred_check_branch
          %1231 = sbr.rel (%p1229) target = $region68
        $region67: #{encode_image.15} parent=39 // pred_region
          %s1232 = smul.u32 2, %s29
          %s1233 = smul.u32 4, %s30
          %s1235 = ssub.s32 512, 512
          %1236 = vsyncadd %s1225, %s1235
          %s1237 = smul.addr %s1232, 8
          %s1238 = sadd.s32 %s1233, %s1237
          %s1239 = smul.addr %s1238, 64
          %s1240 = scalar_lea.hbm %s5, %s1239
          %s1241 = sshll.u32 %s1228, 4
          %s1242 = int_to_ptr.vmem [resolvable:$true] %s1241
          %1247 = dma.vmem_to_hbm [thread:$0]  %s1242, 512, %s1240, %s1225, 256, 512, 16
        $region68: #{encode_image.15} parent=39 // pred_fallthru
          _
      $region40: #{encode_image.15} parent=5 // pred_fallthru
        _
      %p1248 = scmp.le.s32.totalorder 2, %s19
      // Predicated region
      $region69: #{encode_image.15} parent=5 // pred_check
        %p1249 = pneg %p1248
      $region70: #{encode_image.15} parent=5 // pred_check_branch
        %1251 = sbr.rel (%p1249) target = $region72
      $region71: #{encode_image.15} parent=5 // pred_region
        %s1252 = ssub.s32 %s19, 2
        // Predicated region
        $region73: #{encode_image.15} parent=71 // pred_check
          %p1253 = pneg %p203
        $region74: #{encode_image.15} parent=71 // pred_check_branch
          %1255 = sbr.rel (%p1253) target = $region76
        $region75: #{encode_image.15} parent=71 // pred_region
          %s1256 = sand.u32 %s188, 1
          %s1257 = scalar_lea.sflag [#allocation5], %s1256
          %s1258 = sand.u32 %s188, 1
          %s1259 = smul.addr %s1258, 32
          %s1260 = scalar_lea.vmem [#allocation12], %s1259
          %1261 = dma.done %s1257, 512
        $region76: #{encode_image.15} parent=71 // pred_fallthru
          _
      $region72: #{encode_image.15} parent=5 // pred_fallthru
        _
    $region6: #{encode_image.15} parent=1 // loop_footer
      %s23 = sadd.s32 1, %s19
    $region7: #{encode_image.15} parent=1 // loop_footer_branch
      %18 = sbr.rel target = $region3
    $region8: #{encode_image.15} parent=1 // loop_exit
      _
    %1262 = vsyncpa [#allocation4], 1
    %s1263 = scalar_lea.sflag [#allocation4], 1
    %1264 = vsyncpa %s1263, 1
    %1265 = vsyncpa [#allocation7], 1
    %s1266 = scalar_lea.sflag [#allocation7], 1
    %1267 = vsyncpa %s1266, 1
    %1268 = vsyncpa [#allocation10], 1
    %1269 = vsyncpa [#allocation5], 1
    %s1270 = scalar_lea.sflag [#allocation5], 1
    %1271 = vsyncpa %s1270, 1

// kernel: encode_image.21
$region0: #{encode_image.21}
  #allocation0 [shape = 'u32[]', space=smem, size = 0x4, offset = 0x4, fixed_abs, tag = 'smem constant byte address 0x4 - core index']
  #allocation1 [shape = 'u32[144,128]{1,0:T(1,128)}', space=vmem, size = 0x12000, scoped, tag = 'internal scratch']
  %s0 = inlined_call_operand.hbm [shape: bf16[2,256], index: 0, kind: input, shape index: {}]
  %s1 = inlined_call_operand.hbm [shape: bf16[256,128], index: 1, kind: input, shape index: {}]
  %s2 = inlined_call_operand.hbm [shape: f32[1,256], index: 2, kind: input, shape index: {}]
  %s3 = inlined_call_operand.hbm [shape: f32[1,256], index: 3, kind: input, shape index: {}]
  %s4 = inlined_call_operand.hbm [shape: f32[2,128], index: 4, kind: output, shape index: {}]
  %s5 = sld [smem:[#allocation0]]
  $region42: #{encode_image.21} parent=0
    _
  %s7 = ssub.s32 1, %s5
  %s8 = scalar_select 0, %s7, %s5
  $region1: #{encode_image.21} parent=0
    #allocation2 [shape = 'u8[1024]{0}', space=vmem, size = 0x400, scoped, tag = 'input window, operand 0, single buffered']
    #allocation3 [shape = 's32[1]{0}', space=sflag, size = 0x4, scoped, tag = 'scoped memory for encode_image.21']
    #allocation4 [shape = 's32[1]{0}', space=sflag, size = 0x4, scoped, tag = 'scoped memory for encode_image.21']
    #allocation5 [shape = 'u8[65536]{0}', space=vmem, size = 0x10000, scoped, tag = 'input window, operand 1, single buffered']
    #allocation6 [shape = 's32[1]{0}', space=sflag, size = 0x4, scoped, tag = 'scoped memory for encode_image.21']
    #allocation7 [shape = 'u8[1024]{0}', space=vmem, size = 0x400, scoped, tag = 'input window, operand 2, single buffered']
    #allocation8 [shape = 'u8[1024]{0}', space=vmem, size = 0x400, scoped, tag = 'input window, operand 3, single buffered']
    #allocation9 [shape = 's32[1]{0}', space=sflag, size = 0x4, scoped, tag = 'scoped memory for encode_image.21']
    #allocation10 [shape = 'u8[1024]{0}', space=vmem, size = 0x400, scoped, tag = 'output window, operand 0, single buffered']
    %9 = vsyncpa [#allocation3], 0
    %10 = vsyncpa [#allocation6], 0
    %11 = vsyncpa [#allocation9], 0
    %12 = vsyncpa [#allocation4], 0
    // Predicated region
    $region2: #{encode_image.21} parent=1 // pred_check
      _
    $region3: #{encode_image.21} parent=1 // pred_check_branch
      %14 = sbr.rel (0) target = $region5
    $region4: #{encode_image.21} parent=1 // pred_region
      %s16 = ssub.s32 32, 32
      %17 = vsyncadd [#allocation3], %s16
      %s19 = sshll.u32 [#allocation2], 4
      %s20 = int_to_ptr.vmem [resolvable:$true] %s19
      %22 = dma.hbm_to_vmem [thread:$0]  %s0, 32, %s20, [#allocation3]
    $region5: #{encode_image.21} parent=1 // pred_fallthru
      _
    // Predicated region
    $region6: #{encode_image.21} parent=1 // pred_check
      _
    $region7: #{encode_image.21} parent=1 // pred_check_branch
      %24 = sbr.rel (0) target = $region9
    $region8: #{encode_image.21} parent=1 // pred_region
      %s26 = ssub.s32 2048, 2048
      %27 = vsyncadd [#allocation6], %s26
      %s28 = sshll.u32 [#allocation5], 4
      %s29 = int_to_ptr.vmem [resolvable:$true] %s28
      %34 = dma.hbm_to_vmem [thread:$0]  %s1, 2048, %s29, [#allocation6], 64, 64, 4
    $region9: #{encode_image.21} parent=1 // pred_fallthru
      _
    // Predicated region
    $region10: #{encode_image.21} parent=1 // pred_check
      _
    $region11: #{encode_image.21} parent=1 // pred_check_branch
      %36 = sbr.rel (0) target = $region13
    $region12: #{encode_image.21} parent=1 // pred_region
      %s38 = ssub.s32 32, 32
      %39 = vsyncadd [#allocation6], %s38
      %s41 = sshll.u32 [#allocation7], 4
      %s42 = int_to_ptr.vmem [resolvable:$true] %s41
      %44 = dma.hbm_to_vmem [thread:$0]  %s2, 32, %s42, [#allocation6]
    $region13: #{encode_image.21} parent=1 // pred_fallthru
      _
    // Predicated region
    $region14: #{encode_image.21} parent=1 // pred_check
      _
    $region15: #{encode_image.21} parent=1 // pred_check_branch
      %46 = sbr.rel (0) target = $region17
    $region16: #{encode_image.21} parent=1 // pred_region
      %s48 = ssub.s32 32, 32
      %49 = vsyncadd [#allocation9], %s48
      %s51 = sshll.u32 [#allocation8], 4
      %s52 = int_to_ptr.vmem [resolvable:$true] %s51
      %54 = dma.hbm_to_vmem [thread:$0]  %s3, 32, %s52, [#allocation9]
    $region17: #{encode_image.21} parent=1 // pred_fallthru
      _
    // Predicated region
    $region18: #{encode_image.21} parent=1 // pred_check
      _
    $region19: #{encode_image.21} parent=1 // pred_check_branch
      %56 = sbr.rel (0) target = $region21
    $region20: #{encode_image.21} parent=1 // pred_region
      %57 = dma.done [#allocation3], 32
    $region21: #{encode_image.21} parent=1 // pred_fallthru
      _
    // Predicated region
    $region22: #{encode_image.21} parent=1 // pred_check
      _
    $region23: #{encode_image.21} parent=1 // pred_check_branch
      %59 = sbr.rel (0) target = $region25
    $region24: #{encode_image.21} parent=1 // pred_region
      %60 = dma.done [#allocation6], 2048
    $region25: #{encode_image.21} parent=1 // pred_fallthru
      _
    // Predicated region
    $region26: #{encode_image.21} parent=1 // pred_check
      _
    $region27: #{encode_image.21} parent=1 // pred_check_branch
      %62 = sbr.rel (0) target = $region29
    $region28: #{encode_image.21} parent=1 // pred_region
      %63 = dma.done [#allocation6], 32
    $region29: #{encode_image.21} parent=1 // pred_fallthru
      _
    // Predicated region
    $region30: #{encode_image.21} parent=1 // pred_check
      _
    $region31: #{encode_image.21} parent=1 // pred_check_branch
      %65 = sbr.rel (0) target = $region33
    $region32: #{encode_image.21} parent=1 // pred_region
      %66 = dma.done [#allocation9], 32
    $region33: #{encode_image.21} parent=1 // pred_fallthru
      _
    %v68 = vld [vmem:[#allocation2] sm:$0x3]
    %v69 = vunpack.c.l.bf16 %v68
    %v72 = vunpack.c.l.s4 1983009808
    %v73 = vunpack.c.0.s8 %v72
    %v74 = vlaneseq
    %v75 = vshrl.u32 %v74, 7
    %v76 = vsub.s32 %v73, %v75
    %v77 = vrot.slane %v69, %v76
    %v78 = vcombine.high %v77, %v77
    %vm81 = vcmask 1041408
    %v82 = vsel %vm81, %v77, 0.0
    %v83 = vsel %vm81, %v78, 0.0
    %v84 = vadd.f32 %v82, %v83
    %85 = vadd.xlane.f32.xlu0 %v84
    %v86 = vpop.xlane.xlu0 %85
    %v87 = vrcp.pop 256.0
    %v88 = vmul.f32 %v86, %v87
    %v91 = vunpack.c.l.s4 269488144
    %v92 = vunpack.c.0.s8 %v91
    %v93 = vlaneseq
    %v94 = vshrl.u32 %v93, 7
    %v95 = vsub.s32 %v92, %v94
    %v96 = vrot.slane %v88, %v95
    %v98 = vsub.f32 %v69, %v96
    %v99 = vmul.f32 %v98, %v98
    %v102 = vunpack.c.l.s4 1983009808
    %v103 = vunpack.c.0.s8 %v102
    %v104 = vlaneseq
    %v105 = vshrl.u32 %v104, 7
    %v106 = vsub.s32 %v103, %v105
    %v107 = vrot.slane %v99, %v106
    %v108 = vcombine.high %v107, %v107
    %v111 = vsel %vm81, %v107, 0.0
    %v112 = vsel %vm81, %v108, 0.0
    %v113 = vadd.f32 %v111, %v112
    %114 = vadd.xlane.f32.xlu0 %v113
    %v115 = vpop.xlane.xlu0 %114
    %v116 = vmul.f32 %v115, %v87
    %v117 = vadd.f32 %v116, 1e-05
    %v118 = vrsqrt.pop %v117
    %v121 = vunpack.c.l.s4 269488144
    %v122 = vunpack.c.0.s8 %v121
    %v123 = vlaneseq
    %v124 = vshrl.u32 %v123, 7
    %v125 = vsub.s32 %v122, %v124
    %v126 = vrot.slane %v118, %v125
    %v128 = vmul.f32 %v98, %v126
    %v129 = vld [vmem:[#allocation7] sm:$0x3]
    %v131 = vlaneseq
    %v132 = vshrl.u32 %v131, 7
    %v133 = vsub.s32 0, %v132
    %v134 = vrot.slane %v129, %v133
    %v135 = vlaneseq
    %v136 = vshrl.u32 %v135, 7
    %v137 = vsub.s32 1, %v136
    %v138 = vrot.slane %v129, %v137
    %v139 = vcombine.low %v134, %v138
    %v141 = vunpack.c.l.s4 1983009808
    %v142 = vunpack.c.0.s8 %v141
    %v143 = vlaneseq
    %v144 = vshrl.u32 %v143, 7
    %v145 = vsub.s32 %v142, %v144
    %v146 = vrot.slane %v139, %v145
    %v148 = vmul.f32 %v128, %v146
    %v149 = vld [vmem:[#allocation8] sm:$0x3]
    %v151 = vlaneseq
    %v152 = vshrl.u32 %v151, 7
    %v153 = vsub.s32 0, %v152
    %v154 = vrot.slane %v149, %v153
    %v155 = vlaneseq
    %v156 = vshrl.u32 %v155, 7
    %v157 = vsub.s32 1, %v156
    %v158 = vrot.slane %v149, %v157
    %v159 = vcombine.low %v154, %v158
    %v161 = vunpack.c.l.s4 1983009808
    %v162 = vunpack.c.0.s8 %v161
    %v163 = vlaneseq
    %v164 = vshrl.u32 %v163, 7
    %v165 = vsub.s32 %v162, %v164
    %v166 = vrot.slane %v159, %v165
    %v168 = vadd.f32 %v148, %v166
    %v171 = vunpack.c.l.s4 1983009808
    %v172 = vunpack.c.0.s8 %v171
    %v173 = vlaneseq
    %v174 = vshrl.u32 %v173, 7
    %v175 = vsub.s32 %v172, %v174
    %v176 = vrot.slane %v168, %v175
    %v177 = vcombine.high %v176, %v176
    %v180 = vpack.c.bf16 %v176, %v176
    %v181 = vpack.c.bf16 %v177, %v177
    %v182 = vld [vmem:[#allocation5] sm:$0xf]
    %v183 = vld [vmem:[#allocation5 + $0x4] sm:$0xf]
    %v184 = vld [vmem:[#allocation5 + $0x8] sm:$0xf]
    %v185 = vld [vmem:[#allocation5 + $0xc] sm:$0xf]
    %v186 = vld [vmem:[#allocation5 + $0x10] sm:$0xf]
    %v187 = vld [vmem:[#allocation5 + $0x14] sm:$0xf]
    %v188 = vld [vmem:[#allocation5 + $0x18] sm:$0xf]
    %v189 = vld [vmem:[#allocation5 + $0x1c] sm:$0xf]
    %v190 = vld [vmem:[#allocation5 + $0x20] sm:$0xf]
    %v191 = vld [vmem:[#allocation5 + $0x24] sm:$0xf]
    %v192 = vld [vmem:[#allocation5 + $0x28] sm:$0xf]
    %v193 = vld [vmem:[#allocation5 + $0x2c] sm:$0xf]
    %v194 = vld [vmem:[#allocation5 + $0x30] sm:$0xf]
    %v195 = vld [vmem:[#allocation5 + $0x34] sm:$0xf]
    %v196 = vld [vmem:[#allocation5 + $0x38] sm:$0xf]
    %v197 = vld [vmem:[#allocation5 + $0x3c] sm:$0xf]
    %v198 = vld [vmem:[#allocation5 + $0x40] sm:$0xf]
    %v199 = vld [vmem:[#allocation5 + $0x44] sm:$0xf]
    %v200 = vld [vmem:[#allocation5 + $0x48] sm:$0xf]
    %v201 = vld [vmem:[#allocation5 + $0x4c] sm:$0xf]
    %v202 = vld [vmem:[#allocation5 + $0x50] sm:$0xf]
    %v203 = vld [vmem:[#allocation5 + $0x54] sm:$0xf]
    %v204 = vld [vmem:[#allocation5 + $0x58] sm:$0xf]
    %v205 = vld [vmem:[#allocation5 + $0x5c] sm:$0xf]
    %v206 = vld [vmem:[#allocation5 + $0x60] sm:$0xf]
    %v207 = vld [vmem:[#allocation5 + $0x64] sm:$0xf]
    %v208 = vld [vmem:[#allocation5 + $0x68] sm:$0xf]
    %v209 = vld [vmem:[#allocation5 + $0x6c] sm:$0xf]
    %v210 = vld [vmem:[#allocation5 + $0x70] sm:$0xf]
    %v211 = vld [vmem:[#allocation5 + $0x74] sm:$0xf]
    %v212 = vld [vmem:[#allocation5 + $0x78] sm:$0xf]
    %v213 = vld [vmem:[#allocation5 + $0x7c] sm:$0xf]
    %v246 = vunpack.c.l.b16 %v182
    %v247 = vunpack.c.l.b16 %v183
    %v248 = vunpack.c.l.b16 %v184
    %v249 = vunpack.c.l.b16 %v185
    %v250 = vunpack.c.l.b16 %v186
    %v251 = vunpack.c.l.b16 %v187
    %v252 = vunpack.c.l.b16 %v188
    %v253 = vunpack.c.l.b16 %v189
    %v254 = vunpack.c.l.b16 %v190
    %v255 = vunpack.c.l.b16 %v191
    %v256 = vunpack.c.l.b16 %v192
    %v257 = vunpack.c.l.b16 %v193
    %v258 = vunpack.c.l.b16 %v194
    %v259 = vunpack.c.l.b16 %v195
    %v260 = vunpack.c.l.b16 %v196
    %v261 = vunpack.c.l.b16 %v197
    %v262 = vunpack.c.l.b16 %v198
    %v263 = vunpack.c.l.b16 %v199
    %v264 = vunpack.c.l.b16 %v200
    %v265 = vunpack.c.l.b16 %v201
    %v266 = vunpack.c.l.b16 %v202
    %v267 = vunpack.c.l.b16 %v203
    %v268 = vunpack.c.l.b16 %v204
    %v269 = vunpack.c.l.b16 %v205
    %v270 = vunpack.c.l.b16 %v206
    %v271 = vunpack.c.l.b16 %v207
    %v272 = vunpack.c.l.b16 %v208
    %v273 = vunpack.c.l.b16 %v209
    %v274 = vunpack.c.l.b16 %v210
    %v275 = vunpack.c.l.b16 %v211
    %v276 = vunpack.c.l.b16 %v212
    %v277 = vunpack.c.l.b16 %v213
    %v278 = vpack.c.b16 %v247, %v246
    %v279 = vpack.c.b16 %v249, %v248
    %v280 = vpack.c.b16 %v251, %v250
    %v281 = vpack.c.b16 %v253, %v252
    %v282 = vpack.c.b16 %v255, %v254
    %v283 = vpack.c.b16 %v257, %v256
    %v284 = vpack.c.b16 %v259, %v258
    %v285 = vpack.c.b16 %v261, %v260
    %v286 = vpack.c.b16 %v263, %v262
    %v287 = vpack.c.b16 %v265, %v264
    %v288 = vpack.c.b16 %v267, %v266
    %v289 = vpack.c.b16 %v269, %v268
    %v290 = vpack.c.b16 %v271, %v270
    %v291 = vpack.c.b16 %v273, %v272
    %v292 = vpack.c.b16 %v275, %v274
    %v293 = vpack.c.b16 %v277, %v276
    %310 = vmatprep.subr.bf16.mxu0 0
    %311 = vmatpush1.bf16.msra.mxu0 %v278
    %312 = vmatprep.subr.bf16.mxu0 0
    %313 = vmatpush1.bf16.msra.mxu0 %v279
    %314 = vmatprep.subr.bf16.mxu0 0
    %315 = vmatpush1.bf16.msra.mxu0 %v280
    %316 = vmatprep.subr.bf16.mxu0 0
    %317 = vmatpush1.bf16.msra.mxu0 %v281
    %318 = vmatprep.subr.bf16.mxu0 0
    %319 = vmatpush1.bf16.msra.mxu0 %v282
    %320 = vmatprep.subr.bf16.mxu0 0
    %321 = vmatpush1.bf16.msra.mxu0 %v283
    %322 = vmatprep.subr.bf16.mxu0 0
    %323 = vmatpush1.bf16.msra.mxu0 %v284
    %324 = vmatprep.subr.bf16.mxu0 0
    %325 = vmatpush1.bf16.msra.mxu0 %v285
    %326 = vmatprep.subr.bf16.mxu0 0
    %327 = vmatpush1.bf16.msra.mxu0 %v286
    %328 = vmatprep.subr.bf16.mxu0 0
    %329 = vmatpush1.bf16.msra.mxu0 %v287
    %330 = vmatprep.subr.bf16.mxu0 0
    %331 = vmatpush1.bf16.msra.mxu0 %v288
    %332 = vmatprep.subr.bf16.mxu0 0
    %333 = vmatpush1.bf16.msra.mxu0 %v289
    %334 = vmatprep.subr.bf16.mxu0 0
    %335 = vmatpush1.bf16.msra.mxu0 %v290
    %336 = vmatprep.subr.bf16.mxu0 0
    %337 = vmatpush1.bf16.msra.mxu0 %v291
    %338 = vmatprep.subr.bf16.mxu0 0
    %339 = vmatpush1.bf16.msra.mxu0 %v292
    %340 = vmatprep.subr.bf16.mxu0 0
    %341 = vmatpush1.bf16.msra.mxu0 %v293
    %342 = vmatprep.mubr.bf16.mxu0 %v181
    %343 = vmatmul.mubr.bf16.gmra.mrb[0].mxu0 %v180
    %v344 = vpop.f32.mrb[0].mxu0
    %v345 = vadd.f32 0.0, %v344
    %v346 = vpop.f32.mrb[0].mxu0
    %v347 = vpop.f32.mrb[0].mxu0
    %v348 = vpop.f32.mrb[0].mxu0
    %349 = vdwg.mxu0
    %350 = vst [vmem:[#allocation10] sm:$0x3] %v345
    // Predicated region
    $region34: #{encode_image.21} parent=1 // pred_check
      _
    $region35: #{encode_image.21} parent=1 // pred_check_branch
      %352 = sbr.rel (0) target = $region37
    $region36: #{encode_image.21} parent=1 // pred_region
      %s354 = ssub.s32 32, 32
      %355 = vsyncadd [#allocation4], %s354
      %s357 = sshll.u32 [#allocation10], 4
      %s358 = int_to_ptr.vmem [resolvable:$true] %s357
      %360 = dma.vmem_to_hbm [thread:$0]  %s358, 32, %s4, [#allocation4]
    $region37: #{encode_image.21} parent=1 // pred_fallthru
      _
    // Predicated region
    $region38: #{encode_image.21} parent=1 // pred_check
      _
    $region39: #{encode_image.21} parent=1 // pred_check_branch
      %362 = sbr.rel (0) target = $region41
    $region40: #{encode_image.21} parent=1 // pred_region
      %363 = dma.done [#allocation4], 32
    $region41: #{encode_image.21} parent=1 // pred_fallthru
      _
    %364 = vsyncpa [#allocation3], 1
    %365 = vsyncpa [#allocation6], 1
    %366 = vsyncpa [#allocation9], 1
    %367 = vsyncpa [#allocation4], 1

</llo_original>
